<compile_context>
chip_gen: v7x
topology: tpu7x:2x2x1
jax: 0.10.0
libtpu: 0.0.40
codegen_flags: <defaults>
</compile_context>

<pallas_src>
import functools

import jax
import jax.numpy as jnp
from jax.experimental import pallas as pl
from jax.experimental.pallas import tpu as pltpu


# ----------------------------------------------------------------------------
# Generation-aware VMEM policy.
# ----------------------------------------------------------------------------
def _vmem_limit_bytes():
    """Scoped-VMEM cap with headroom for compiler-internal scratch/buffers."""
    try:
        cap = int(pltpu.get_tpu_info().vmem_capacity_bytes)
    except Exception:  # pragma: no cover - fall back to the smallest part
        cap = 64 * 1024 * 1024                      # v7x per-TensorCore VMEM
    return max(32 << 20, min(int(cap * 0.85), cap - (8 << 20)))


def _pick_ho_block(Ho, per_row_bytes, fixed_bytes, budget_bytes):
    """Largest divisor of Ho whose per-step footprint fits the budget."""
    avail = budget_bytes - fixed_bytes
    t = max(1, min(Ho, avail // max(per_row_bytes, 1)))
    for cand in range(int(t), 0, -1):
        if Ho % cand == 0:
            return cand
    return 1


def _pick_hw_block(HW, Cout, target_bytes=4 << 20):
    """Largest multiple of 128 dividing HW (requires HW % 128 == 0)."""
    per_row = Cout * (2 * 2 + 4 * 2)                # bf16 in + f32 out, 2 bufs
    cap = max(128, (target_bytes // max(per_row, 1)) // 128 * 128)
    t = max(128, min(HW, cap) // 128 * 128)
    while HW % t:
        t -= 128
    return t


# ----------------------------------------------------------------------------
# Pass 1: binarize (sign of PReLU) + KxK conv + partial BN statistics.
# ----------------------------------------------------------------------------
def _bin_conv_kernel(neg_ref, x_ref, w_ref, y_ref, stats_ref, xcat_ref, acc_ref,
                     *, KH, KW, pad, H, W, Cin, Ho, Wo, tHo):
    """
    neg_ref   : (1,) int32 SMEM (scalar prefetch)  value of -sign(prelu_slope)
    x_ref     : (1, H, W, Cin)            VMEM  unpadded NHWC sample
    w_ref     : (KH, KW*Cin, Cout) bf16   VMEM  conv weight, KW folded into K
    y_ref     : (1, tHo, Wo, Cout) bf16   VMEM  conv output band (pre-BN)
    stats_ref : (1, 1, 2, Cout) f32       VMEM  per-band [sum, sum_of_squares]
    xcat_ref  : (Hp, Wo, KW*Cin) bf16     scratch, persists across row bands
    acc_ref   : (tHo, Wo, Cout) f32       scratch accumulator
    """
    hb = pl.program_id(1)
    Hp = H + 2 * pad

    # Build the binarized, zero-padded, KW-concatenated activation slab once
    # per sample.  Layout: xcat[r, w, kw*Cin + c] == sign(prelu(x_pad))[r, w+kw, c]
    # (row bands are an "arbitrary"/sequential grid axis, so hb==0 runs first
    # for every sample on whichever core owns it).
    @pl.when(hb == 0)
    def _build():
        neg = neg_ref[0].astype(jnp.float32)
        x = x_ref[0]                                # (H, W, Cin), input dtype
        # sign(prelu(x)) == where(x>0, +1, where(x<0, -sign(a), 0)).
        # +-1 / 0 are exact in bf16; padding-then-binarizing == binarize-then-pad.
        xb = jnp.where(x > 0, 1.0,
                       jnp.where(x < 0, neg, 0.0)).astype(jnp.bfloat16)
        if pad > 0:
            zrow = jnp.zeros((pad, Wo, KW * Cin), jnp.bfloat16)
            xcat_ref[0:pad, :, :] = zrow
            xcat_ref[pad + H:Hp, :, :] = zrow
        for kw in range(KW):
            c0 = kw * Cin
            lo = max(0, pad - kw)
            hi = min(Wo, pad - kw + W)
            if lo > 0:
                xcat_ref[pad:pad + H, 0:lo, c0:c0 + Cin] = (
                    jnp.zeros((H, lo, Cin), jnp.bfloat16))
            if hi < Wo:
                xcat_ref[pad:pad + H, hi:Wo, c0:c0 + Cin] = (
                    jnp.zeros((H, Wo - hi, Cin), jnp.bfloat16))
            if hi > lo:
                src = lo + kw - pad
                xcat_ref[pad:pad + H, lo:hi, c0:c0 + Cin] = (
                    xb[:, src:src + (hi - lo), :])

    # KH MXU dots, contraction depth KW*Cin, accumulated into a VMEM scratch.
    r0 = hb * tHo
    for kh in range(KH):
        xk = xcat_ref[pl.ds(r0 + kh, tHo), :, :]        # (tHo, Wo, KW*Cin) bf16
        part = jax.lax.dot_general(
            xk, w_ref[kh],
            dimension_numbers=(((2,), (0,)), ((), ())),
            preferred_element_type=jnp.float32)         # (tHo, Wo, Cout) f32
        if kh == 0:
            acc_ref[...] = part
        else:
            acc_ref[...] += part

    acc = acc_ref[...]
    y_ref[0] = acc.astype(y_ref.dtype)                  # bf16 intermediate

    # Partial BatchNorm statistics for this band (from the f32 accumulator).
    # TODO(synk): switch to a shifted / two-pass variance if E[y^2]-E[y]^2
    # cancellation ever becomes visible for deep layers.
    stats_ref[0, :, 0:1, :] = jnp.sum(acc, axis=(0, 1), keepdims=True)
    stats_ref[0, :, 1:2, :] = jnp.sum(acc * acc, axis=(0, 1), keepdims=True)


def _run_pass1(x_nhwc, w_taps, neg_val, *, N, H, W, Cin, Cout, KH, KW, pad,
               Ho, Wo, tHo, n_hblk, vmem_limit, single_buffer_weights):
    Hp = H + 2 * pad
    kernel = functools.partial(
        _bin_conv_kernel, KH=KH, KW=KW, pad=pad, H=H, W=W, Cin=Cin,
        Ho=Ho, Wo=Wo, tHo=tHo)

    if single_buffer_weights:
        # Constant block index across the grid -> one buffer is enough.
        w_spec = pl.BlockSpec((KH, KW * Cin, Cout),
                              lambda n, hb, neg: (0, 0, 0),
                              pipeline_mode=pl.Buffered(1))
    else:
        w_spec = pl.BlockSpec((KH, KW * Cin, Cout),
                              lambda n, hb, neg: (0, 0, 0))

    flops = 2 * N * Ho * Wo * Cin * Cout * KH * KW
    bytes_accessed = (N * H * W * Cin * x_nhwc.dtype.itemsize
                      + KH * KW * Cin * Cout * 2
                      + N * Ho * Wo * Cout * 2
                      + N * n_hblk * 2 * Cout * 4)

    return pl.pallas_call(
        kernel,
        out_shape=(jax.ShapeDtypeStruct((N, Ho, Wo, Cout), jnp.bfloat16),
                   jax.ShapeDtypeStruct((N, n_hblk, 2, Cout), jnp.float32)),
        grid_spec=pltpu.PrefetchScalarGridSpec(
            num_scalar_prefetch=1,
            grid=(N, n_hblk),
            in_specs=[
                # Whole (unpadded) sample; the index map ignores the row-band
                # axis so the sample is DMA'd once and revisited.
                pl.BlockSpec((1, H, W, Cin), lambda n, hb, neg: (n, 0, 0, 0)),
                w_spec,
            ],
            out_specs=(
                pl.BlockSpec((1, tHo, Wo, Cout),
                             lambda n, hb, neg: (n, hb, 0, 0)),
                pl.BlockSpec((1, 1, 2, Cout),
                             lambda n, hb, neg: (n, hb, 0, 0)),
            ),
            scratch_shapes=[
                pltpu.VMEM((Hp, Wo, KW * Cin), jnp.bfloat16),   # padded+concat
                pltpu.VMEM((tHo, Wo, Cout), jnp.float32),       # accumulator
            ]),
        compiler_params=pltpu.CompilerParams(
            # Samples are independent; row bands within a sample must stay
            # sequential (they reuse the per-sample scratch).
            # TODO(synk): pltpu.CORE_PARALLEL on the sample axis for an
            # explicit v7x megacore split once verified on 2-core parts.
            dimension_semantics=("parallel", "arbitrary"),
            vmem_limit_bytes=vmem_limit),
        cost_estimate=pl.CostEstimate(flops=flops, transcendentals=0,
                                      bytes_accessed=bytes_accessed),
    )(neg_val, x_nhwc, w_taps)


# ----------------------------------------------------------------------------
# Pass 2: BatchNorm affine.
# ----------------------------------------------------------------------------
def _bn_affine_nchw_kernel(y_ref, scale_ref, shift_ref, o_ref):
    # y_ref: (1, tR, Cout) bf16 ; scale/shift: (1, Cout) f32 ; o: (1, Cout, tR)
    z = y_ref[0].astype(jnp.float32) * scale_ref[...] + shift_ref[...]
    o_ref[0] = jnp.transpose(z).astype(o_ref.dtype)     # aligned 2D transpose


def _bn_affine_nhwc_kernel(y_ref, scale_ref, shift_ref, o_ref):
    o_ref[...] = (y_ref[...].astype(jnp.float32) * scale_ref[...]
                  + shift_ref[...]).astype(o_ref.dtype)


# ----------------------------------------------------------------------------
# Wrapper.
# ----------------------------------------------------------------------------
def bin_snp_conv2d(x_nchw, conv_weight, conv_bias, prelu_a, bn_gamma, bn_beta,
                   *, kernel_size=3, stride=1, padding=1, groups=1, eps=1e-4):
    """x_nchw: (N, Cin, H, W); conv_weight: (Cout, Cin, KH, KW); NCHW f32 out.

    conv_bias is accepted for interface parity but not applied: under
    training-mode BatchNorm the constant per-channel bias is cancelled exactly
    by the batch-mean subtraction.  Do NOT reuse this kernel with eval-mode /
    running statistics without re-adding the bias.
    """
    assert stride == 1 and groups == 1   # TODO(synk): general stride / groups
    del conv_bias
    N, Cin, H, W = x_nchw.shape
    Cout = conv_weight.shape[0]
    KH = KW = kernel_size
    pad = padding
    Hp, Wp = H + 2 * pad, W + 2 * pad
    Ho, Wo = Hp - KH + 1, Wp - KW + 1

    # --- glue (plain JAX) ----------------------------------------------------
    # TODO(synk): keep activations NHWC across layers so this input permute
    # (and the NHWC->NCHW permute on the unaligned fallback path) is not paid
    # per call.
    x_nhwc = jnp.transpose(x_nchw, (0, 2, 3, 1))            # keep input dtype
    w_taps = (jnp.transpose(conv_weight, (2, 3, 1, 0))       # (KH, KW, Cin, Cout)
              .reshape(KH, KW * Cin, Cout).astype(jnp.bfloat16))
    # Only -sign(prelu slope) is needed inside the kernel (scalar prefetch).
    neg_val = (-jnp.sign(jnp.asarray(prelu_a, jnp.float32))
               ).astype(jnp.int32).reshape(1)

    # --- pass 1: conv + partial BN stats --------------------------------------
    vmem_limit = _vmem_limit_bytes()
    fixed = (Hp * Wo * KW * Cin * 2                         # xcat scratch
             + 2 * H * W * Cin * x_nhwc.dtype.itemsize      # x double buffer
             + 2 * KH * KW * Cin * Cout * 2                 # weights (worst)
             + H * W * Cin * 2)                             # binarize temp
    per_row = Wo * (Cout * (4 + 2 * 2 + 8) + KW * Cin * 2 * 2)
    tHo = _pick_ho_block(Ho, per_row, fixed, int(0.45 * vmem_limit))
    n_hblk = Ho // tHo

    run = functools.partial(
        _run_pass1, x_nhwc, w_taps, neg_val, N=N, H=H, W=W, Cin=Cin, Cout=Cout,
        KH=KH, KW=KW, pad=pad, Ho=Ho, Wo=Wo, tHo=tHo, n_hblk=n_hblk,
        vmem_limit=vmem_limit)
    try:
        conv_bf16, stats = run(single_buffer_weights=True)
    except Exception:
        # Defensive: fall back to default double-buffered weights if this jax
        # build rejects pl.Buffered(1) as a BlockSpec pipeline_mode.
        conv_bf16, stats = run(single_buffer_weights=False)

    # --- fold statistics into per-channel scale/shift (tiny, plain JAX) -------
    count = jnp.float32(N * Ho * Wo)
    s = jnp.sum(stats[:, :, 0, :], axis=(0, 1))
    ss = jnp.sum(stats[:, :, 1, :], axis=(0, 1))
    mean = s / count
    var = jnp.maximum(ss / count - mean * mean, 0.0)        # biased (training)
    scale = bn_gamma.astype(jnp.float32) * jax.lax.rsqrt(var + eps)
    shift = bn_beta.astype(jnp.float32) - mean * scale

    # --- pass 2: BN affine -----------------------------------------------------
    HW = Ho * Wo
    if Cout % 128 == 0 and HW % 128 == 0:
        # Lane-aligned: write NCHW directly (no XLA permute of the output).
        tR = _pick_hw_block(HW, Cout)
        y2 = conv_bf16.reshape(N, HW, Cout)                 # free reshape
        out2 = pl.pallas_call(
            _bn_affine_nchw_kernel,
            out_shape=jax.ShapeDtypeStruct((N, Cout, HW), jnp.float32),
            grid=(N, HW // tR),
            in_specs=[pl.BlockSpec((1, tR, Cout), lambda n, r: (n, r, 0)),
                      pl.BlockSpec((1, Cout), lambda n, r: (0, 0)),
                      pl.BlockSpec((1, Cout), lambda n, r: (0, 0))],
            out_specs=pl.BlockSpec((1, Cout, tR), lambda n, r: (n, 0, r)),
            compiler_params=pltpu.CompilerParams(
                dimension_semantics=("parallel", "parallel"),
                vmem_limit_bytes=vmem_limit),
        )(y2, scale.reshape(1, Cout), shift.reshape(1, Cout))
        return out2.reshape(N, Cout, Ho, Wo)                # free reshape

    # Fallback (lane-unaligned Cout / spatial): lane-dense NHWC affine; the
    # NHWC->NCHW permute is left to XLA.
    # TODO(synk): extend the direct-NCHW path to unaligned shapes (masked
    # in-kernel transposes) so the XLA permute disappears for all layers.
    L = Wo * Cout
    rows = N * Ho
    rows8 = max(8, ((rows + 7) // 8) * 8)
    tr = min(512, rows8, max(8, ((8 << 20) // (L * 12)) // 8 * 8))
    y2 = conv_bf16.reshape(rows, L)                          # free reshape
    out2 = pl.pallas_call(
        _bn_affine_nhwc_kernel,
        out_shape=jax.ShapeDtypeStruct((rows, L), jnp.float32),
        grid=(pl.cdiv(rows, tr),),
        in_specs=[pl.BlockSpec((tr, L), lambda i: (i, 0)),
                  pl.BlockSpec((1, L), lambda i: (0, 0)),
                  pl.BlockSpec((1, L), lambda i: (0, 0))],
        out_specs=pl.BlockSpec((tr, L), lambda i: (i, 0)),
        compiler_params=pltpu.CompilerParams(
            dimension_semantics=("parallel",),
            vmem_limit_bytes=vmem_limit),
    )(y2, jnp.tile(scale, (Wo,)).reshape(1, L),
      jnp.tile(shift, (Wo,)).reshape(1, L))
    out_nhwc = out2.reshape(N, Ho, Wo, Cout)
    return jnp.transpose(out_nhwc, (0, 3, 1, 2))             # back to NCHW


# ----------------------------------------------------------------------------
# Pure-JAX reference (same bf16-rounded weights) for a correctness check.
# ----------------------------------------------------------------------------
def _reference(x_nchw, conv_w_bf16, conv_b, prelu_a, gamma, beta, pad, eps):
    xp = jnp.where(x_nchw > 0, x_nchw, prelu_a * x_nchw)
    xb = jnp.sign(xp)
    w = conv_w_bf16.astype(jnp.float32)
    y = jax.lax.conv_general_dilated(
        xb, w, window_strides=(1, 1), padding=((pad, pad), (pad, pad)),
        dimension_numbers=("NCHW", "OIHW", "NCHW"),
        precision=jax.lax.Precision.HIGHEST)
    y = y + conv_b[None, :, None, None]
    mean = jnp.mean(y, axis=(0, 2, 3), keepdims=True)
    var = jnp.mean((y - mean) ** 2, axis=(0, 2, 3), keepdims=True)
    return ((y - mean) * jax.lax.rsqrt(var + eps)
            * gamma[None, :, None, None] + beta[None, :, None, None])


if __name__ == "__main__":
    # NOTE: the module applies BatchNorm2d(input_channels) to the conv OUTPUT,
    # which only runs in PyTorch when input_channels == output_channels.
    key = jax.random.PRNGKey(0)

    def run_case(N, C, H, W):
        K, S, P = 3, 1, 1
        kx, kw_, kb = jax.random.split(jax.random.fold_in(key, C), 3)
        x = jax.random.normal(kx, (N, C, H, W), dtype=jnp.float32)
        fan_in = C * K * K
        bound = 1.0 / (fan_in ** 0.5)
        conv_w = jax.random.uniform(kw_, (C, C, K, K), jnp.float32, -bound, bound)
        conv_b = jax.random.uniform(kb, (C,), jnp.float32, -bound, bound)
        prelu_a = jnp.float32(0.25)                 # nn.PReLU() default slope
        gamma = jnp.ones((C,), jnp.float32)         # forced to 1.0 in __init__
        beta = jnp.zeros((C,), jnp.float32)         # default zero init

        out = bin_snp_conv2d(x, conv_w, conv_b, prelu_a, gamma, beta,
                             kernel_size=K, stride=S, padding=P, eps=1e-4)
        out = jax.block_until_ready(out)
        assert out.shape == (N, C, H, W), out.shape

        # Reference includes the conv bias to demonstrate it cancels under
        # training-mode BN.  Tolerance reflects the bf16 intermediate tensor.
        ref = _reference(x, conv_w.astype(jnp.bfloat16), conv_b, prelu_a,
                         gamma, beta, P, 1e-4)
        err = float(jnp.max(jnp.abs(out - ref)))
        assert err < 3e-2, f"C={C}: max abs err {err}"

    run_case(2, 8, 16, 16)     # small, lane-unaligned -> NHWC pass 2 + XLA permute
    run_case(2, 128, 16, 16)   # lane-aligned -> all-Pallas direct-NCHW pass 2
    print("KERNEL_OK")
</pallas_src>

<mosaic_0001>
module attributes {stable_mosaic.version = 11 : i64} {
  func.func @_bin_conv_kernel(%arg0: i32, %arg1: i32, %arg2: memref<1xi32, #tpu.memory_space<smem>>, %arg3: memref<1x16x16x8xf32, #tpu.memory_space<vmem>>, %arg4: memref<3x24x8xbf16, #tpu.memory_space<vmem>>, %arg5: memref<1x16x16x8xbf16, #tpu.memory_space<vmem>>, %arg6: memref<1x1x2x8xf32, #tpu.memory_space<vmem>>, %arg7: memref<18x16x24xbf16, #tpu.memory_space<vmem>>, %arg8: memref<16x16x8xf32, #tpu.memory_space<vmem>>) attributes {dimension_semantics = [#tpu.dimension_semantics<parallel>, #tpu.dimension_semantics<arbitrary>], iteration_bounds = array<i64: 2, 1>, scalar_prefetch = 1 : i64, scratch_operands = 2 : i64, tpu.core_type = #tpu.core_type<tc>, window_params = [{transform_indices = @transform_0, window_bounds = array<i64: 1, 16, 16, 8>}, {pipeline_mode = #tpu.pipeline_mode<synchronous>, transform_indices = @transform_1, window_bounds = array<i64: 3, 24, 8>}, {transform_indices = @transform_2, window_bounds = array<i64: 1, 16, 16, 8>}, {transform_indices = @transform_3, window_bounds = array<i64: 1, 1, 2, 8>}]} {
    %c0_i32 = arith.constant 0 : i32
    %0 = arith.cmpi eq, %arg1, %c0_i32 : i32
    %1 = arith.extui %0 : i1 to i32
    %c0_i32_0 = arith.constant 0 : i32
    %2 = arith.cmpi ne, %1, %c0_i32_0 : i32
    scf.if %2 {
      %c0_48 = arith.constant 0 : index
      %45 = memref.load %arg2[%c0_48] : memref<1xi32, #tpu.memory_space<smem>>
      %46 = arith.sitofp %45 : i32 to f32
      %c0_49 = arith.constant 0 : index
      %c0_50 = arith.constant 0 : index
      %c0_51 = arith.constant 0 : index
      %c0_52 = arith.constant 0 : index
      %47 = vector.load %arg3[%c0_49, %c0_50, %c0_51, %c0_52] : memref<1x16x16x8xf32, #tpu.memory_space<vmem>>, vector<1x16x16x8xf32>
      %48 = vector.shape_cast %47 : vector<1x16x16x8xf32> to vector<16x16x8xf32>
      %cst_53 = arith.constant 0.000000e+00 : f32
      %49 = vector.broadcast %cst_53 : f32 to vector<16x16x8xf32>
      %50 = arith.cmpf ogt, %48, %49 : vector<16x16x8xf32>
      %cst_54 = arith.constant 0.000000e+00 : f32
      %51 = vector.broadcast %cst_54 : f32 to vector<16x16x8xf32>
      %52 = arith.cmpf olt, %48, %51 : vector<16x16x8xf32>
      %cst_55 = arith.constant 0.000000e+00 : f32
      %53 = vector.broadcast %46 : f32 to vector<16x16x8xf32>
      %54 = vector.broadcast %cst_55 : f32 to vector<16x16x8xf32>
      %55 = arith.select %52, %53, %54 : vector<16x16x8xi1>, vector<16x16x8xf32>
      %cst_56 = arith.constant 1.000000e+00 : f32
      %56 = vector.broadcast %cst_56 : f32 to vector<16x16x8xf32>
      %57 = arith.select %50, %56, %55 : vector<16x16x8xi1>, vector<16x16x8xf32>
      %58 = arith.truncf %57 : vector<16x16x8xf32> to vector<16x16x8xbf16>
      %cst_57 = arith.constant 0.000000e+00 : bf16
      %59 = vector.broadcast %cst_57 : bf16 to vector<1x16x24xbf16>
      %c0_58 = arith.constant 0 : index
      %c0_59 = arith.constant 0 : index
      %c0_60 = arith.constant 0 : index
      %60 = vector.load %arg7[%c0_58, %c0_59, %c0_60] : memref<18x16x24xbf16, #tpu.memory_space<vmem>>, vector<1x16x24xbf16>
      tpu.vector_store %arg7[%c0_58, %c0_59, %c0_60], %59 {strides = array<i32>} : memref<18x16x24xbf16, #tpu.memory_space<vmem>>, vector<1x16x24xbf16>,
      %c17 = arith.constant 17 : index
      %c0_61 = arith.constant 0 : index
      %c0_62 = arith.constant 0 : index
      %61 = vector.load %arg7[%c17, %c0_61, %c0_62] : memref<18x16x24xbf16, #tpu.memory_space<vmem>>, vector<1x16x24xbf16>
      tpu.vector_store %arg7[%c17, %c0_61, %c0_62], %59 {strides = array<i32>} : memref<18x16x24xbf16, #tpu.memory_space<vmem>>, vector<1x16x24xbf16>,
      %cst_63 = arith.constant 0.000000e+00 : bf16
      %62 = vector.broadcast %cst_63 : bf16 to vector<16x1x8xbf16>
      %c1_64 = arith.constant 1 : index
      %c0_65 = arith.constant 0 : index
      %c0_66 = arith.constant 0 : index
      %63 = vector.load %arg7[%c1_64, %c0_65, %c0_66] : memref<18x16x24xbf16, #tpu.memory_space<vmem>>, vector<16x1x8xbf16>
      tpu.vector_store %arg7[%c1_64, %c0_65, %c0_66], %62 {strides = array<i32>} : memref<18x16x24xbf16, #tpu.memory_space<vmem>>, vector<16x1x8xbf16>,
      %64 = vector.extract_strided_slice %58 {offsets = [0, 0, 0], sizes = [16, 15, 8], strides = [1, 1, 1]} : vector<16x16x8xbf16> to vector<16x15x8xbf16>
      %c1_67 = arith.constant 1 : index
      %c1_68 = arith.constant 1 : index
      %c0_69 = arith.constant 0 : index
      %65 = vector.load %arg7[%c1_67, %c1_68, %c0_69] : memref<18x16x24xbf16, #tpu.memory_space<vmem>>, vector<16x15x8xbf16>
      tpu.vector_store %arg7[%c1_67, %c1_68, %c0_69], %64 {strides = array<i32>} : memref<18x16x24xbf16, #tpu.memory_space<vmem>>, vector<16x15x8xbf16>,
      %c1_70 = arith.constant 1 : index
      %c0_71 = arith.constant 0 : index
      %c8 = arith.constant 8 : index
      %66 = vector.load %arg7[%c1_70, %c0_71, %c8] : memref<18x16x24xbf16, #tpu.memory_space<vmem>>, vector<16x16x8xbf16>
      tpu.vector_store %arg7[%c1_70, %c0_71, %c8], %58 {strides = array<i32>} : memref<18x16x24xbf16, #tpu.memory_space<vmem>>, vector<16x16x8xbf16>,
      %cst_72 = arith.constant 0.000000e+00 : bf16
      %67 = vector.broadcast %cst_72 : bf16 to vector<16x1x8xbf16>
      %c1_73 = arith.constant 1 : index
      %c15 = arith.constant 15 : index
      %c16 = arith.constant 16 : index
      %68 = vector.load %arg7[%c1_73, %c15, %c16] : memref<18x16x24xbf16, #tpu.memory_space<vmem>>, vector<16x1x8xbf16>
      tpu.vector_store %arg7[%c1_73, %c15, %c16], %67 {strides = array<i32>} : memref<18x16x24xbf16, #tpu.memory_space<vmem>>, vector<16x1x8xbf16>,
      %69 = vector.extract_strided_slice %58 {offsets = [0, 1, 0], sizes = [16, 15, 8], strides = [1, 1, 1]} : vector<16x16x8xbf16> to vector<16x15x8xbf16>
      %c1_74 = arith.constant 1 : index
      %c0_75 = arith.constant 0 : index
      %c16_76 = arith.constant 16 : index
      %70 = vector.load %arg7[%c1_74, %c0_75, %c16_76] : memref<18x16x24xbf16, #tpu.memory_space<vmem>>, vector<16x15x8xbf16>
      tpu.vector_store %arg7[%c1_74, %c0_75, %c16_76], %69 {strides = array<i32>} : memref<18x16x24xbf16, #tpu.memory_space<vmem>>, vector<16x15x8xbf16>,
    } else {
    }
    %c16_i32 = arith.constant 16 : i32
    %3 = arith.muli %arg1, %c16_i32 : i32
    %c0_i32_1 = arith.constant 0 : i32
    %4 = arith.addi %3, %c0_i32_1 : i32
    %5 = arith.index_cast %4 : i32 to index
    %c0 = arith.constant 0 : index
    %c0_2 = arith.constant 0 : index
    %6 = vector.load %arg7[%5, %c0, %c0_2] : memref<18x16x24xbf16, #tpu.memory_space<vmem>>, vector<16x16x24xbf16>
    %c0_3 = arith.constant 0 : index
    %c0_4 = arith.constant 0 : index
    %c0_5 = arith.constant 0 : index
    %7 = vector.load %arg4[%c0_3, %c0_4, %c0_5] : memref<3x24x8xbf16, #tpu.memory_space<vmem>>, vector<1x24x8xbf16>
    %8 = vector.shape_cast %7 : vector<1x24x8xbf16> to vector<24x8xbf16>
    %cst = arith.constant dense<0.000000e+00> : vector<16x16x8xf32>
    %9 = tpu.matmul %6, %8, %cst {dimension_numbers = #tpu.dot_dimension_numbers<[2], [0], [0, 1], [1], [0, 0, 0, 1, 1, 1], [], []>} : vector<16x16x24xbf16>, vector<24x8xbf16>, vector<16x16x8xf32> -> vector<16x16x8xf32>
    %c0_6 = arith.constant 0 : index
    %c0_7 = arith.constant 0 : index
    %c0_8 = arith.constant 0 : index
    %10 = vector.load %arg8[%c0_6, %c0_7, %c0_8] : memref<16x16x8xf32, #tpu.memory_space<vmem>>, vector<16x16x8xf32>
    tpu.vector_store %arg8[%c0_6, %c0_7, %c0_8], %9 {strides = array<i32>} : memref<16x16x8xf32, #tpu.memory_space<vmem>>, vector<16x16x8xf32>,
    %c1_i32 = arith.constant 1 : i32
    %11 = arith.addi %3, %c1_i32 : i32
    %12 = arith.index_cast %11 : i32 to index
    %c0_9 = arith.constant 0 : index
    %c0_10 = arith.constant 0 : index
    %13 = vector.load %arg7[%12, %c0_9, %c0_10] : memref<18x16x24xbf16, #tpu.memory_space<vmem>>, vector<16x16x24xbf16>
    %c1 = arith.constant 1 : index
    %c0_11 = arith.constant 0 : index
    %c0_12 = arith.constant 0 : index
    %14 = vector.load %arg4[%c1, %c0_11, %c0_12] : memref<3x24x8xbf16, #tpu.memory_space<vmem>>, vector<1x24x8xbf16>
    %15 = vector.shape_cast %14 : vector<1x24x8xbf16> to vector<24x8xbf16>
    %cst_13 = arith.constant dense<0.000000e+00> : vector<16x16x8xf32>
    %16 = tpu.matmul %13, %15, %cst_13 {dimension_numbers = #tpu.dot_dimension_numbers<[2], [0], [0, 1], [1], [0, 0, 0, 1, 1, 1], [], []>} : vector<16x16x24xbf16>, vector<24x8xbf16>, vector<16x16x8xf32> -> vector<16x16x8xf32>
    %c0_14 = arith.constant 0 : index
    %c0_15 = arith.constant 0 : index
    %c0_16 = arith.constant 0 : index
    %17 = vector.load %arg8[%c0_14, %c0_15, %c0_16] : memref<16x16x8xf32, #tpu.memory_space<vmem>>, vector<16x16x8xf32>
    %18 = arith.addf %17, %16 : vector<16x16x8xf32>
    %c0_17 = arith.constant 0 : index
    %c0_18 = arith.constant 0 : index
    %c0_19 = arith.constant 0 : index
    %19 = vector.load %arg8[%c0_17, %c0_18, %c0_19] : memref<16x16x8xf32, #tpu.memory_space<vmem>>, vector<16x16x8xf32>
    tpu.vector_store %arg8[%c0_17, %c0_18, %c0_19], %18 {strides = array<i32>} : memref<16x16x8xf32, #tpu.memory_space<vmem>>, vector<16x16x8xf32>,
    %c2_i32 = arith.constant 2 : i32
    %20 = arith.addi %3, %c2_i32 : i32
    %21 = arith.index_cast %20 : i32 to index
    %c0_20 = arith.constant 0 : index
    %c0_21 = arith.constant 0 : index
    %22 = vector.load %arg7[%21, %c0_20, %c0_21] : memref<18x16x24xbf16, #tpu.memory_space<vmem>>, vector<16x16x24xbf16>
    %c2 = arith.constant 2 : index
    %c0_22 = arith.constant 0 : index
    %c0_23 = arith.constant 0 : index
    %23 = vector.load %arg4[%c2, %c0_22, %c0_23] : memref<3x24x8xbf16, #tpu.memory_space<vmem>>, vector<1x24x8xbf16>
    %24 = vector.shape_cast %23 : vector<1x24x8xbf16> to vector<24x8xbf16>
    %cst_24 = arith.constant dense<0.000000e+00> : vector<16x16x8xf32>
    %25 = tpu.matmul %22, %24, %cst_24 {dimension_numbers = #tpu.dot_dimension_numbers<[2], [0], [0, 1], [1], [0, 0, 0, 1, 1, 1], [], []>} : vector<16x16x24xbf16>, vector<24x8xbf16>, vector<16x16x8xf32> -> vector<16x16x8xf32>
    %c0_25 = arith.constant 0 : index
    %c0_26 = arith.constant 0 : index
    %c0_27 = arith.constant 0 : index
    %26 = vector.load %arg8[%c0_25, %c0_26, %c0_27] : memref<16x16x8xf32, #tpu.memory_space<vmem>>, vector<16x16x8xf32>
    %27 = arith.addf %26, %25 : vector<16x16x8xf32>
    %c0_28 = arith.constant 0 : index
    %c0_29 = arith.constant 0 : index
    %c0_30 = arith.constant 0 : index
    %28 = vector.load %arg8[%c0_28, %c0_29, %c0_30] : memref<16x16x8xf32, #tpu.memory_space<vmem>>, vector<16x16x8xf32>
    tpu.vector_store %arg8[%c0_28, %c0_29, %c0_30], %27 {strides = array<i32>} : memref<16x16x8xf32, #tpu.memory_space<vmem>>, vector<16x16x8xf32>,
    %c0_31 = arith.constant 0 : index
    %c0_32 = arith.constant 0 : index
    %c0_33 = arith.constant 0 : index
    %29 = vector.load %arg8[%c0_31, %c0_32, %c0_33] : memref<16x16x8xf32, #tpu.memory_space<vmem>>, vector<16x16x8xf32>
    %30 = arith.truncf %29 : vector<16x16x8xf32> to vector<16x16x8xbf16>
    %c0_34 = arith.constant 0 : index
    %c0_35 = arith.constant 0 : index
    %c0_36 = arith.constant 0 : index
    %c0_37 = arith.constant 0 : index
    %31 = vector.load %arg5[%c0_34, %c0_35, %c0_36, %c0_37] : memref<1x16x16x8xbf16, #tpu.memory_space<vmem>>, vector<1x16x16x8xbf16>
    %32 = vector.shape_cast %31 : vector<1x16x16x8xbf16> to vector<16x16x8xbf16>
    %33 = vector.shape_cast %30 : vector<16x16x8xbf16> to vector<1x16x16x8xbf16>
    tpu.vector_store %arg5[%c0_34, %c0_35, %c0_36, %c0_37], %33 {strides = array<i32>} : memref<1x16x16x8xbf16, #tpu.memory_space<vmem>>, vector<1x16x16x8xbf16>,
    %cst_38 = arith.constant dense<0.000000e+00> : vector<8xf32>
    %34 = vector.multi_reduction <add>, %29, %cst_38 [0, 1] : vector<16x16x8xf32> to vector<8xf32>
    %35 = vector.shape_cast %34 : vector<8xf32> to vector<1x1x8xf32>
    %c0_39 = arith.constant 0 : index
    %c0_40 = arith.constant 0 : index
    %c0_41 = arith.constant 0 : index
    %c0_42 = arith.constant 0 : index
    %36 = vector.load %arg6[%c0_39, %c0_40, %c0_41, %c0_42] : memref<1x1x2x8xf32, #tpu.memory_space<vmem>>, vector<1x1x1x8xf32>
    %37 = vector.shape_cast %36 : vector<1x1x1x8xf32> to vector<1x1x8xf32>
    %38 = vector.shape_cast %35 : vector<1x1x8xf32> to vector<1x1x1x8xf32>
    tpu.vector_store %arg6[%c0_39, %c0_40, %c0_41, %c0_42], %38 {strides = array<i32>} : memref<1x1x2x8xf32, #tpu.memory_space<vmem>>, vector<1x1x1x8xf32>,
    %39 = arith.mulf %29, %29 : vector<16x16x8xf32>
    %cst_43 = arith.constant dense<0.000000e+00> : vector<8xf32>
    %40 = vector.multi_reduction <add>, %39, %cst_43 [0, 1] : vector<16x16x8xf32> to vector<8xf32>
    %41 = vector.shape_cast %40 : vector<8xf32> to vector<1x1x8xf32>
    %c0_44 = arith.constant 0 : index
    %c0_45 = arith.constant 0 : index
    %c1_46 = arith.constant 1 : index
    %c0_47 = arith.constant 0 : index
    %42 = vector.load %arg6[%c0_44, %c0_45, %c1_46, %c0_47] : memref<1x1x2x8xf32, #tpu.memory_space<vmem>>, vector<1x1x1x8xf32>
    %43 = vector.shape_cast %42 : vector<1x1x1x8xf32> to vector<1x1x8xf32>
    %44 = vector.shape_cast %41 : vector<1x1x8xf32> to vector<1x1x1x8xf32>
    tpu.vector_store %arg6[%c0_44, %c0_45, %c1_46, %c0_47], %44 {strides = array<i32>} : memref<1x1x2x8xf32, #tpu.memory_space<vmem>>, vector<1x1x1x8xf32>,
    return
  }
  func.func @transform_0(%arg0: i32, %arg1: i32, %arg2: memref<1xi32, #tpu.memory_space<smem>>) -> (i32, i32, i32, i32) {
    %c0_i32 = arith.constant 0 : i32
    %c0_i32_0 = arith.constant 0 : i32
    %c0_i32_1 = arith.constant 0 : i32
    %c0_i32_2 = arith.constant 0 : i32
    return %arg0, %c0_i32, %c0_i32_0, %c0_i32_1 : i32, i32, i32, i32
  }
  func.func @transform_1(%arg0: i32, %arg1: i32, %arg2: memref<1xi32, #tpu.memory_space<smem>>) -> (i32, i32, i32) {
    %c0_i32 = arith.constant 0 : i32
    %c0_i32_0 = arith.constant 0 : i32
    %c0_i32_1 = arith.constant 0 : i32
    %c0_i32_2 = arith.constant 0 : i32
    return %c0_i32, %c0_i32_0, %c0_i32_1 : i32, i32, i32
  }
  func.func @transform_2(%arg0: i32, %arg1: i32, %arg2: memref<1xi32, #tpu.memory_space<smem>>) -> (i32, i32, i32, i32) {
    %c0_i32 = arith.constant 0 : i32
    %c0_i32_0 = arith.constant 0 : i32
    %c0_i32_1 = arith.constant 0 : i32
    return %arg0, %arg1, %c0_i32, %c0_i32_0 : i32, i32, i32, i32
  }
  func.func @transform_3(%arg0: i32, %arg1: i32, %arg2: memref<1xi32, #tpu.memory_space<smem>>) -> (i32, i32, i32, i32) {
    %c0_i32 = arith.constant 0 : i32
    %c0_i32_0 = arith.constant 0 : i32
    %c0_i32_1 = arith.constant 0 : i32
    return %arg0, %arg1, %c0_i32, %c0_i32_0 : i32, i32, i32, i32
  }
}

module attributes {stable_mosaic.version = 11 : i64} {
  func.func @_bin_conv_kernel(%arg0: i32, %arg1: i32, %arg2: memref<1xi32, #tpu.memory_space<smem>>, %arg3: memref<1x16x16x8xf32, #tpu.memory_space<vmem>>, %arg4: memref<3x24x8xbf16, #tpu.memory_space<vmem>>, %arg5: memref<1x16x16x8xbf16, #tpu.memory_space<vmem>>, %arg6: memref<1x1x2x8xf32, #tpu.memory_space<vmem>>, %arg7: memref<18x16x24xbf16, #tpu.memory_space<vmem>>, %arg8: memref<16x16x8xf32, #tpu.memory_space<vmem>>) attributes {dimension_semantics = [#tpu.dimension_semantics<parallel>, #tpu.dimension_semantics<arbitrary>], iteration_bounds = array<i64: 2, 1>, scalar_prefetch = 1 : i64, scratch_operands = 2 : i64, tpu.core_type = #tpu.core_type<tc>, window_params = [{transform_indices = @transform_0, window_bounds = array<i64: 1, 16, 16, 8>}, {pipeline_mode = #tpu.pipeline_mode<synchronous>, transform_indices = @transform_1, window_bounds = array<i64: 3, 24, 8>}, {transform_indices = @transform_2, window_bounds = array<i64: 1, 16, 16, 8>}, {transform_indices = @transform_3, window_bounds = array<i64: 1, 1, 2, 8>}]} {
    %c0_i32 = arith.constant 0 : i32
    %0 = arith.cmpi eq, %arg1, %c0_i32 : i32
    %1 = arith.extui %0 : i1 to i32
    %c0_i32_0 = arith.constant 0 : i32
    %2 = arith.cmpi ne, %1, %c0_i32_0 : i32
    scf.if %2 {
      %c0_48 = arith.constant 0 : index
      %45 = memref.load %arg2[%c0_48] : memref<1xi32, #tpu.memory_space<smem>>
      %46 = arith.sitofp %45 : i32 to f32
      %c0_49 = arith.constant 0 : index
      %c0_50 = arith.constant 0 : index
      %c0_51 = arith.constant 0 : index
      %c0_52 = arith.constant 0 : index
      %47 = vector.load %arg3[%c0_49, %c0_50, %c0_51, %c0_52] : memref<1x16x16x8xf32, #tpu.memory_space<vmem>>, vector<1x16x16x8xf32>
      %48 = vector.shape_cast %47 : vector<1x16x16x8xf32> to vector<16x16x8xf32>
      %cst_53 = arith.constant 0.000000e+00 : f32
      %49 = vector.broadcast %cst_53 : f32 to vector<16x16x8xf32>
      %50 = arith.cmpf ogt, %48, %49 : vector<16x16x8xf32>
      %cst_54 = arith.constant 0.000000e+00 : f32
      %51 = vector.broadcast %cst_54 : f32 to vector<16x16x8xf32>
      %52 = arith.cmpf olt, %48, %51 : vector<16x16x8xf32>
      %cst_55 = arith.constant 0.000000e+00 : f32
      %53 = vector.broadcast %46 : f32 to vector<16x16x8xf32>
      %54 = vector.broadcast %cst_55 : f32 to vector<16x16x8xf32>
      %55 = arith.select %52, %53, %54 : vector<16x16x8xi1>, vector<16x16x8xf32>
      %cst_56 = arith.constant 1.000000e+00 : f32
      %56 = vector.broadcast %cst_56 : f32 to vector<16x16x8xf32>
      %57 = arith.select %50, %56, %55 : vector<16x16x8xi1>, vector<16x16x8xf32>
      %58 = arith.truncf %57 : vector<16x16x8xf32> to vector<16x16x8xbf16>
      %cst_57 = arith.constant 0.000000e+00 : bf16
      %59 = vector.broadcast %cst_57 : bf16 to vector<1x16x24xbf16>
      %c0_58 = arith.constant 0 : index
      %c0_59 = arith.constant 0 : index
      %c0_60 = arith.constant 0 : index
      %60 = vector.load %arg7[%c0_58, %c0_59, %c0_60] : memref<18x16x24xbf16, #tpu.memory_space<vmem>>, vector<1x16x24xbf16>
      tpu.vector_store %arg7[%c0_58, %c0_59, %c0_60], %59 {strides = array<i32>} : memref<18x16x24xbf16, #tpu.memory_space<vmem>>, vector<1x16x24xbf16>,
      %c17 = arith.constant 17 : index
      %c0_61 = arith.constant 0 : index
      %c0_62 = arith.constant 0 : index
      %61 = vector.load %arg7[%c17, %c0_61, %c0_62] : memref<18x16x24xbf16, #tpu.memory_space<vmem>>, vector<1x16x24xbf16>
      tpu.vector_store %arg7[%c17, %c0_61, %c0_62], %59 {strides = array<i32>} : memref<18x16x24xbf16, #tpu.memory_space<vmem>>, vector<1x16x24xbf16>,
      %cst_63 = arith.constant 0.000000e+00 : bf16
      %62 = vector.broadcast %cst_63 : bf16 to vector<16x1x8xbf16>
      %c1_64 = arith.constant 1 : index
      %c0_65 = arith.constant 0 : index
      %c0_66 = arith.constant 0 : index
      %63 = vector.load %arg7[%c1_64, %c0_65, %c0_66] : memref<18x16x24xbf16, #tpu.memory_space<vmem>>, vector<16x1x8xbf16>
      tpu.vector_store %arg7[%c1_64, %c0_65, %c0_66], %62 {strides = array<i32>} : memref<18x16x24xbf16, #tpu.memory_space<vmem>>, vector<16x1x8xbf16>,
      %64 = vector.extract_strided_slice %58 {offsets = [0, 0, 0], sizes = [16, 15, 8], strides = [1, 1, 1]} : vector<16x16x8xbf16> to vector<16x15x8xbf16>
      %c1_67 = arith.constant 1 : index
      %c1_68 = arith.constant 1 : index
      %c0_69 = arith.constant 0 : index
      %65 = vector.load %arg7[%c1_67, %c1_68, %c0_69] : memref<18x16x24xbf16, #tpu.memory_space<vmem>>, vector<16x15x8xbf16>
      tpu.vector_store %arg7[%c1_67, %c1_68, %c0_69], %64 {strides = array<i32>} : memref<18x16x24xbf16, #tpu.memory_space<vmem>>, vector<16x15x8xbf16>,
      %c1_70 = arith.constant 1 : index
      %c0_71 = arith.constant 0 : index
      %c8 = arith.constant 8 : index
      %66 = vector.load %arg7[%c1_70, %c0_71, %c8] : memref<18x16x24xbf16, #tpu.memory_space<vmem>>, vector<16x16x8xbf16>
      tpu.vector_store %arg7[%c1_70, %c0_71, %c8], %58 {strides = array<i32>} : memref<18x16x24xbf16, #tpu.memory_space<vmem>>, vector<16x16x8xbf16>,
      %cst_72 = arith.constant 0.000000e+00 : bf16
      %67 = vector.broadcast %cst_72 : bf16 to vector<16x1x8xbf16>
      %c1_73 = arith.constant 1 : index
      %c15 = arith.constant 15 : index
      %c16 = arith.constant 16 : index
      %68 = vector.load %arg7[%c1_73, %c15, %c16] : memref<18x16x24xbf16, #tpu.memory_space<vmem>>, vector<16x1x8xbf16>
      tpu.vector_store %arg7[%c1_73, %c15, %c16], %67 {strides = array<i32>} : memref<18x16x24xbf16, #tpu.memory_space<vmem>>, vector<16x1x8xbf16>,
      %69 = vector.extract_strided_slice %58 {offsets = [0, 1, 0], sizes = [16, 15, 8], strides = [1, 1, 1]} : vector<16x16x8xbf16> to vector<16x15x8xbf16>
      %c1_74 = arith.constant 1 : index
      %c0_75 = arith.constant 0 : index
      %c16_76 = arith.constant 16 : index
      %70 = vector.load %arg7[%c1_74, %c0_75, %c16_76] : memref<18x16x24xbf16, #tpu.memory_space<vmem>>, vector<16x15x8xbf16>
      tpu.vector_store %arg7[%c1_74, %c0_75, %c16_76], %69 {strides = array<i32>} : memref<18x16x24xbf16, #tpu.memory_space<vmem>>, vector<16x15x8xbf16>,
    } else {
    }
    %c16_i32 = arith.constant 16 : i32
    %3 = arith.muli %arg1, %c16_i32 : i32
    %c0_i32_1 = arith.constant 0 : i32
    %4 = arith.addi %3, %c0_i32_1 : i32
    %5 = arith.index_cast %4 : i32 to index
    %c0 = arith.constant 0 : index
    %c0_2 = arith.constant 0 : index
    %6 = vector.load %arg7[%5, %c0, %c0_2] : memref<18x16x24xbf16, #tpu.memory_space<vmem>>, vector<16x16x24xbf16>
    %c0_3 = arith.constant 0 : index
    %c0_4 = arith.constant 0 : index
    %c0_5 = arith.constant 0 : index
    %7 = vector.load %arg4[%c0_3, %c0_4, %c0_5] : memref<3x24x8xbf16, #tpu.memory_space<vmem>>, vector<1x24x8xbf16>
    %8 = vector.shape_cast %7 : vector<1x24x8xbf16> to vector<24x8xbf16>
    %cst = arith.constant dense<0.000000e+00> : vector<16x16x8xf32>
    %9 = tpu.matmul %6, %8, %cst {dimension_numbers = #tpu.dot_dimension_numbers<[2], [0], [0, 1], [1], [0, 0, 0, 1, 1, 1], [], []>} : vector<16x16x24xbf16>, vector<24x8xbf16>, vector<16x16x8xf32> -> vector<16x16x8xf32>
    %c0_6 = arith.constant 0 : index
    %c0_7 = arith.constant 0 : index
    %c0_8 = arith.constant 0 : index
    %10 = vector.load %arg8[%c0_6, %c0_7, %c0_8] : memref<16x16x8xf32, #tpu.memory_space<vmem>>, vector<16x16x8xf32>
    tpu.vector_store %arg8[%c0_6, %c0_7, %c0_8], %9 {strides = array<i32>} : memref<16x16x8xf32, #tpu.memory_space<vmem>>, vector<16x16x8xf32>,
    %c1_i32 = arith.constant 1 : i32
    %11 = arith.addi %3, %c1_i32 : i32
    %12 = arith.index_cast %11 : i32 to index
    %c0_9 = arith.constant 0 : index
    %c0_10 = arith.constant 0 : index
    %13 = vector.load %arg7[%12, %c0_9, %c0_10] : memref<18x16x24xbf16, #tpu.memory_space<vmem>>, vector<16x16x24xbf16>
    %c1 = arith.constant 1 : index
    %c0_11 = arith.constant 0 : index
    %c0_12 = arith.constant 0 : index
    %14 = vector.load %arg4[%c1, %c0_11, %c0_12] : memref<3x24x8xbf16, #tpu.memory_space<vmem>>, vector<1x24x8xbf16>
    %15 = vector.shape_cast %14 : vector<1x24x8xbf16> to vector<24x8xbf16>
    %cst_13 = arith.constant dense<0.000000e+00> : vector<16x16x8xf32>
    %16 = tpu.matmul %13, %15, %cst_13 {dimension_numbers = #tpu.dot_dimension_numbers<[2], [0], [0, 1], [1], [0, 0, 0, 1, 1, 1], [], []>} : vector<16x16x24xbf16>, vector<24x8xbf16>, vector<16x16x8xf32> -> vector<16x16x8xf32>
    %c0_14 = arith.constant 0 : index
    %c0_15 = arith.constant 0 : index
    %c0_16 = arith.constant 0 : index
    %17 = vector.load %arg8[%c0_14, %c0_15, %c0_16] : memref<16x16x8xf32, #tpu.memory_space<vmem>>, vector<16x16x8xf32>
    %18 = arith.addf %17, %16 : vector<16x16x8xf32>
    %c0_17 = arith.constant 0 : index
    %c0_18 = arith.constant 0 : index
    %c0_19 = arith.constant 0 : index
    %19 = vector.load %arg8[%c0_17, %c0_18, %c0_19] : memref<16x16x8xf32, #tpu.memory_space<vmem>>, vector<16x16x8xf32>
    tpu.vector_store %arg8[%c0_17, %c0_18, %c0_19], %18 {strides = array<i32>} : memref<16x16x8xf32, #tpu.memory_space<vmem>>, vector<16x16x8xf32>,
    %c2_i32 = arith.constant 2 : i32
    %20 = arith.addi %3, %c2_i32 : i32
    %21 = arith.index_cast %20 : i32 to index
    %c0_20 = arith.constant 0 : index
    %c0_21 = arith.constant 0 : index
    %22 = vector.load %arg7[%21, %c0_20, %c0_21] : memref<18x16x24xbf16, #tpu.memory_space<vmem>>, vector<16x16x24xbf16>
    %c2 = arith.constant 2 : index
    %c0_22 = arith.constant 0 : index
    %c0_23 = arith.constant 0 : index
    %23 = vector.load %arg4[%c2, %c0_22, %c0_23] : memref<3x24x8xbf16, #tpu.memory_space<vmem>>, vector<1x24x8xbf16>
    %24 = vector.shape_cast %23 : vector<1x24x8xbf16> to vector<24x8xbf16>
    %cst_24 = arith.constant dense<0.000000e+00> : vector<16x16x8xf32>
    %25 = tpu.matmul %22, %24, %cst_24 {dimension_numbers = #tpu.dot_dimension_numbers<[2], [0], [0, 1], [1], [0, 0, 0, 1, 1, 1], [], []>} : vector<16x16x24xbf16>, vector<24x8xbf16>, vector<16x16x8xf32> -> vector<16x16x8xf32>
    %c0_25 = arith.constant 0 : index
    %c0_26 = arith.constant 0 : index
    %c0_27 = arith.constant 0 : index
    %26 = vector.load %arg8[%c0_25, %c0_26, %c0_27] : memref<16x16x8xf32, #tpu.memory_space<vmem>>, vector<16x16x8xf32>
    %27 = arith.addf %26, %25 : vector<16x16x8xf32>
    %c0_28 = arith.constant 0 : index
    %c0_29 = arith.constant 0 : index
    %c0_30 = arith.constant 0 : index
    %28 = vector.load %arg8[%c0_28, %c0_29, %c0_30] : memref<16x16x8xf32, #tpu.memory_space<vmem>>, vector<16x16x8xf32>
    tpu.vector_store %arg8[%c0_28, %c0_29, %c0_30], %27 {strides = array<i32>} : memref<16x16x8xf32, #tpu.memory_space<vmem>>, vector<16x16x8xf32>,
    %c0_31 = arith.constant 0 : index
    %c0_32 = arith.constant 0 : index
    %c0_33 = arith.constant 0 : index
    %29 = vector.load %arg8[%c0_31, %c0_32, %c0_33] : memref<16x16x8xf32, #tpu.memory_space<vmem>>, vector<16x16x8xf32>
    %30 = arith.truncf %29 : vector<16x16x8xf32> to vector<16x16x8xbf16>
    %c0_34 = arith.constant 0 : index
    %c0_35 = arith.constant 0 : index
    %c0_36 = arith.constant 0 : index
    %c0_37 = arith.constant 0 : index
    %31 = vector.load %arg5[%c0_34, %c0_35, %c0_36, %c0_37] : memref<1x16x16x8xbf16, #tpu.memory_space<vmem>>, vector<1x16x16x8xbf16>
    %32 = vector.shape_cast %31 : vector<1x16x16x8xbf16> to vector<16x16x8xbf16>
    %33 = vector.shape_cast %30 : vector<16x16x8xbf16> to vector<1x16x16x8xbf16>
    tpu.vector_store %arg5[%c0_34, %c0_35, %c0_36, %c0_37], %33 {strides = array<i32>} : memref<1x16x16x8xbf16, #tpu.memory_space<vmem>>, vector<1x16x16x8xbf16>,
    %cst_38 = arith.constant dense<0.000000e+00> : vector<8xf32>
    %34 = vector.multi_reduction <add>, %29, %cst_38 [0, 1] : vector<16x16x8xf32> to vector<8xf32>
    %35 = vector.shape_cast %34 : vector<8xf32> to vector<1x1x8xf32>
    %c0_39 = arith.constant 0 : index
    %c0_40 = arith.constant 0 : index
    %c0_41 = arith.constant 0 : index
    %c0_42 = arith.constant 0 : index
    %36 = vector.load %arg6[%c0_39, %c0_40, %c0_41, %c0_42] : memref<1x1x2x8xf32, #tpu.memory_space<vmem>>, vector<1x1x1x8xf32>
    %37 = vector.shape_cast %36 : vector<1x1x1x8xf32> to vector<1x1x8xf32>
    %38 = vector.shape_cast %35 : vector<1x1x8xf32> to vector<1x1x1x8xf32>
    tpu.vector_store %arg6[%c0_39, %c0_40, %c0_41, %c0_42], %38 {strides = array<i32>} : memref<1x1x2x8xf32, #tpu.memory_space<vmem>>, vector<1x1x1x8xf32>,
    %39 = arith.mulf %29, %29 : vector<16x16x8xf32>
    %cst_43 = arith.constant dense<0.000000e+00> : vector<8xf32>
    %40 = vector.multi_reduction <add>, %39, %cst_43 [0, 1] : vector<16x16x8xf32> to vector<8xf32>
    %41 = vector.shape_cast %40 : vector<8xf32> to vector<1x1x8xf32>
    %c0_44 = arith.constant 0 : index
    %c0_45 = arith.constant 0 : index
    %c1_46 = arith.constant 1 : index
    %c0_47 = arith.constant 0 : index
    %42 = vector.load %arg6[%c0_44, %c0_45, %c1_46, %c0_47] : memref<1x1x2x8xf32, #tpu.memory_space<vmem>>, vector<1x1x1x8xf32>
    %43 = vector.shape_cast %42 : vector<1x1x1x8xf32> to vector<1x1x8xf32>
    %44 = vector.shape_cast %41 : vector<1x1x8xf32> to vector<1x1x1x8xf32>
    tpu.vector_store %arg6[%c0_44, %c0_45, %c1_46, %c0_47], %44 {strides = array<i32>} : memref<1x1x2x8xf32, #tpu.memory_space<vmem>>, vector<1x1x1x8xf32>,
    return
  }
  func.func @transform_0(%arg0: i32, %arg1: i32, %arg2: memref<1xi32, #tpu.memory_space<smem>>) -> (i32, i32, i32, i32) {
    %c0_i32 = arith.constant 0 : i32
    %c0_i32_0 = arith.constant 0 : i32
    %c0_i32_1 = arith.constant 0 : i32
    %c0_i32_2 = arith.constant 0 : i32
    return %arg0, %c0_i32, %c0_i32_0, %c0_i32_1 : i32, i32, i32, i32
  }
  func.func @transform_1(%arg0: i32, %arg1: i32, %arg2: memref<1xi32, #tpu.memory_space<smem>>) -> (i32, i32, i32) {
    %c0_i32 = arith.constant 0 : i32
    %c0_i32_0 = arith.constant 0 : i32
    %c0_i32_1 = arith.constant 0 : i32
    %c0_i32_2 = arith.constant 0 : i32
    return %c0_i32, %c0_i32_0, %c0_i32_1 : i32, i32, i32
  }
  func.func @transform_2(%arg0: i32, %arg1: i32, %arg2: memref<1xi32, #tpu.memory_space<smem>>) -> (i32, i32, i32, i32) {
    %c0_i32 = arith.constant 0 : i32
    %c0_i32_0 = arith.constant 0 : i32
    %c0_i32_1 = arith.constant 0 : i32
    return %arg0, %arg1, %c0_i32, %c0_i32_0 : i32, i32, i32, i32
  }
  func.func @transform_3(%arg0: i32, %arg1: i32, %arg2: memref<1xi32, #tpu.memory_space<smem>>) -> (i32, i32, i32, i32) {
    %c0_i32 = arith.constant 0 : i32
    %c0_i32_0 = arith.constant 0 : i32
    %c0_i32_1 = arith.constant 0 : i32
    return %arg0, %arg1, %c0_i32, %c0_i32_0 : i32, i32, i32, i32
  }
}

</mosaic_0001>

<llo_original>
// kernel: tpu_custom_call.1
$region0: #{tpu_custom_call.1}
  #allocation0 [shape = 'u32[]', space=smem, size = 0x4, offset = 0x4, fixed_abs, tag = 'smem constant byte address 0x4 - core index']
  #allocation1 [shape = 'u32[144,128]{1,0:T(1,128)}', space=vmem, size = 0x12000, scoped, tag = 'internal scratch']
  #allocation2 [shape = 'bf16[18,16,24]{2,1,0:T(16,128)(2,1)}', space=vmem, size = 0x12000, scoped, tag = 'scratch operand']
  #allocation3 [shape = 'f32[16,16,8]{2,1,0:T(8,128)}', space=vmem, size = 0x20000, scoped, tag = 'scratch operand']
  #allocation4 [shape = 's32[1]{0}', space=sflag, size = 0x4, scoped, tag = 'scoped memory for tpu_custom_call.1']
  #allocation5 [shape = 's32[1]{0:T(128)S(6)}', space=smem, size = 0x200, scoped, tag = 'prefetched SMEM operand 0']
  %s0 = inlined_call_operand.<no memory space> [shape: s32[1], index: 0, kind: input, shape index: {}]
  %s1 = inlined_call_operand.vmem [shape: f32[2,16,16,8], index: 1, kind: input, shape index: {}]
  %s2 = inlined_call_operand.vmem [shape: bf16[3,24,8], index: 2, kind: input, shape index: {}]
  %s3 = inlined_call_operand.vmem [shape: bf16[2,16,16,8], index: 3, kind: output, shape index: {0}]
  %s4 = inlined_call_operand.hbm [shape: f32[2,1,2,8], index: 4, kind: output, shape index: {1}]
  %5 = xla_tuple %s3, %s4
  %s6 = sld [smem:[#allocation0]]
  $region53: #{tpu_custom_call.1} parent=0
    _
  %s8 = ssub.s32 1, %s6
  %s9 = scalar_select 0, %s8, %s6
  %10 = sst [smem:[#allocation5]] %s0
  $region1: #{tpu_custom_call.1} parent=0
    #allocation6 [shape = 'u8[2048]{0}', space=vmem, size = 0x800, scoped, tag = 'output window, operand 1']
    #allocation7 [shape = 's32[2]{0}', space=sflag, size = 0x8, scoped, tag = 'scoped memory for tpu_custom_call.1']
    %11 = vsyncpa [#allocation7], 0
    %s12 = scalar_lea.sflag [#allocation7], 1
    %13 = vsyncpa %s12, 0
    loop: start=0, step=1, limit=4
    $region2: #{tpu_custom_call.1} parent=1 // loop_pre_header
      _
    $region3: #{tpu_custom_call.1} parent=1 // loop_header
      %s15 = sphi 0, %s19
      %p16 = scmp.ge.s32.totalorder %s15, 4
      %s22 = sphi 0, %s34
      %s23 = sphi 0, %s30
      %s24 = sphi 0, %s22
      %s25 = sphi 0, %s23
      %s26 = sphi 0, %s24
      %s27 = sphi 0, %s25
      %s37 = sphi 0, %s39
      %s40 = sphi 0, %s37
      %s41 = sphi 0, %s40
      %s57 = sphi 0, %s41
      %s61 = sphi 0, %s61
      %s63 = sphi 0, %s61
      %s64 = sphi 0, %s63
      %s78 = sphi 0, %s64
      %s86 = sphi 0, %s88
      %s89 = sphi 0, %s86
      %s90 = sphi 0, %s89
      %s106 = sphi 0, %s90
      %s114 = sphi 0, %s116
      %s117 = sphi 0, %s114
      %s118 = sphi 0, %s117
      %s134 = sphi 0, %s118
    $region4: #{tpu_custom_call.1} parent=1 // loop_header_branch
      %18 = sbr.rel (%p16) target = $region8
    $region5: #{tpu_custom_call.1} parent=1 // loop_body
      %s20 = ssub.s32 %s15, 1
      %s21 = ssub.s32 %s15, 2
      %s28 = sadd.s32 1, %s23
      %p29 = scmp.ge.s32.totalorder %s28, 1
      %s30 = scalar_select %p29, 0, %s28
      %s31 = sadd.s32 1, %s22
      %s32 = scalar_select %p29, %s31, %s22
      %p33 = scmp.ge.s32.totalorder %s32, 2
      %s34 = scalar_select %p33, 0, %s32
      %s35 = ssub.s32 %s22, %s34
      %p36 = scmp.eq.s32.totalorder %s35, 0
      %s38 = sadd.s32 %s37, 1
      %s39 = scalar_select %p36, %s37, %s38
      %p42 = pneg %p36
      %p43 = scmp.eq.s32.totalorder %s15, 1
      %p44 = por %p42, %p43
      %p45 = scmp.ne.s32.totalorder %s37, %s40
      %p46 = scmp.eq.s32.totalorder %s15, 0
      %p47 = por %p45, %p46
      %p48 = scmp.ne.s32.totalorder %s37, %s40
      %p49 = scmp.eq.s32.totalorder %s20, 1
      %p50 = por %p48, %p49
      %p51 = scmp.ne.s32.totalorder %s40, %s41
      %p52 = scmp.eq.s32.totalorder %s20, 0
      %p53 = por %p51, %p52
      %p54 = scmp.ne.s32.totalorder %s40, %s41
      %p55 = scmp.eq.s32.totalorder %s21, 1
      %p56 = por %p54, %p55
      %p58 = scmp.ne.s32.totalorder %s41, %s57
      %p59 = scmp.eq.s32.totalorder %s21, 0
      %p60 = por %p58, %p59
      %s62 = sadd.s32 %s61, 1
      %p65 = scmp.eq.s32.totalorder %s15, 1
      %p66 = scmp.ne.s32.totalorder %s61, %s63
      %p67 = scmp.eq.s32.totalorder %s15, 0
      %p68 = por %p66, %p67
      %p69 = scmp.ne.s32.totalorder %s61, %s63
      %p70 = scmp.eq.s32.totalorder %s20, 1
      %p71 = por %p69, %p70
      %p72 = scmp.ne.s32.totalorder %s63, %s64
      %p73 = scmp.eq.s32.totalorder %s20, 0
      %p74 = por %p72, %p73
      %p75 = scmp.ne.s32.totalorder %s63, %s64
      %p76 = scmp.eq.s32.totalorder %s21, 1
      %p77 = por %p75, %p76
      %p79 = scmp.ne.s32.totalorder %s64, %s78
      %p80 = scmp.eq.s32.totalorder %s21, 0
      %p81 = por %p79, %p80
      %s82 = ssub.s32 %s22, %s34
      %s83 = ssub.s32 %s23, %s30
      %s84 = sor.u32 %s82, %s83
      %p85 = scmp.eq.s32.totalorder %s84, 0
      %s87 = sadd.s32 %s86, 1
      %s88 = scalar_select %p85, %s86, %s87
      %p91 = pneg %p85
      %p92 = scmp.eq.s32.totalorder %s15, 1
      %p93 = por %p91, %p92
      %p94 = scmp.ne.s32.totalorder %s86, %s89
      %p95 = scmp.eq.s32.totalorder %s15, 0
      %p96 = por %p94, %p95
      %p97 = scmp.ne.s32.totalorder %s86, %s89
      %p98 = scmp.eq.s32.totalorder %s20, 1
      %p99 = por %p97, %p98
      %p100 = scmp.ne.s32.totalorder %s89, %s90
      %p101 = scmp.eq.s32.totalorder %s20, 0
      %p102 = por %p100, %p101
      %p103 = scmp.ne.s32.totalorder %s89, %s90
      %p104 = scmp.eq.s32.totalorder %s21, 1
      %p105 = por %p103, %p104
      %p107 = scmp.ne.s32.totalorder %s90, %s106
      %p108 = scmp.eq.s32.totalorder %s21, 0
      %p109 = por %p107, %p108
      %s110 = ssub.s32 %s22, %s34
      %s111 = ssub.s32 %s23, %s30
      %s112 = sor.u32 %s110, %s111
      %p113 = scmp.eq.s32.totalorder %s112, 0
      %s115 = sadd.s32 %s114, 1
      %s116 = scalar_select %p113, %s114, %s115
      %p119 = pneg %p113
      %p120 = scmp.eq.s32.totalorder %s15, 1
      %p121 = por %p119, %p120
      %p122 = scmp.ne.s32.totalorder %s114, %s117
      %p123 = scmp.eq.s32.totalorder %s15, 0
      %p124 = por %p122, %p123
      %p125 = scmp.ne.s32.totalorder %s114, %s117
      %p126 = scmp.eq.s32.totalorder %s20, 1
      %p127 = por %p125, %p126
      %p128 = scmp.ne.s32.totalorder %s117, %s118
      %p129 = scmp.eq.s32.totalorder %s20, 0
      %p130 = por %p128, %p129
      %p131 = scmp.ne.s32.totalorder %s117, %s118
      %p132 = scmp.eq.s32.totalorder %s21, 1
      %p133 = por %p131, %p132
      %p135 = scmp.ne.s32.totalorder %s118, %s134
      %p136 = scmp.eq.s32.totalorder %s21, 0
      %p137 = por %p135, %p136
      %p138 = scmp.le.s32.totalorder 1, %s15
      %p139 = scmp.lt.s32.totalorder %s15, 3
      %p140 = pnand %p138, %p139
      %p141 = pneg %p140
      // Predicated region
      $region9: #{tpu_custom_call.1} parent=5 // pred_check
        _
      $region10: #{tpu_custom_call.1} parent=5 // pred_check_branch
        %143 = sbr.rel (%p140) target = $region12
      $region11: #{tpu_custom_call.1} parent=5 // pred_region
        %s144 = ssub.s32 %s15, 1
        // Predicated region
        $region13: #{tpu_custom_call.1} parent=11 // pred_check
          %p145 = pneg %p74
        $region14: #{tpu_custom_call.1} parent=11 // pred_check_branch
          %147 = sbr.rel (%p145) target = $region16
        $region15: #{tpu_custom_call.1} parent=11 // pred_region
          _
        $region16: #{tpu_custom_call.1} parent=11 // pred_fallthru
          _
      $region12: #{tpu_custom_call.1} parent=5 // pred_fallthru
        _
      %p148 = scmp.lt.s32.totalorder %s15, 2
      // Predicated region
      $region17: #{tpu_custom_call.1} parent=5 // pred_check
        %p149 = pneg %p148
      $region18: #{tpu_custom_call.1} parent=5 // pred_check_branch
        %151 = sbr.rel (%p149) target = $region20
      $region19: #{tpu_custom_call.1} parent=5 // pred_region
        // Predicated region
        $region21: #{tpu_custom_call.1} parent=19 // pred_check
          %p152 = pneg %p47
        $region22: #{tpu_custom_call.1} parent=19 // pred_check_branch
          %154 = sbr.rel (%p152) target = $region24
        $region23: #{tpu_custom_call.1} parent=19 // pred_region
          %p155 = scmp.lt.s32.totalorder %s22, 1
          %s156 = scalar_select %p155, %s22, 1
          %s157 = smul.addr %s156, 32
          %s158 = smul.addr %s157, 8
          %s159 = scalar_lea.vmem %s1, %s158
        $region24: #{tpu_custom_call.1} parent=19 // pred_fallthru
          _
      $region20: #{tpu_custom_call.1} parent=5 // pred_fallthru
        _
      %p160 = scmp.le.s32.totalorder 1, %s15
      %p161 = scmp.lt.s32.totalorder %s15, 3
      %p162 = pnand %p160, %p161
      %p163 = pneg %p162
      // Predicated region
      $region25: #{tpu_custom_call.1} parent=5 // pred_check
        _
      $region26: #{tpu_custom_call.1} parent=5 // pred_check_branch
        %165 = sbr.rel (%p162) target = $region28
      $region27: #{tpu_custom_call.1} parent=5 // pred_region
        %s166 = ssub.s32 %s15, 1
        %p167 = scmp.lt.s32.totalorder %s24, 1
        %s168 = scalar_select %p167, %s24, 1
        %s169 = smul.addr %s168, 32
        %s170 = smul.addr %s169, 8
        %s171 = scalar_lea.vmem %s1, %s170
        %p172 = pneg %p53
        %p173 = pneg %p50
        %p174 = pneg %p74
        %p175 = pneg %p71
        %p176 = pneg %p102
        %p177 = pneg %p99
        %s178 = smul.u32 16, %s25
        %p179 = scmp.lt.s32.totalorder %s24, 1
        %s180 = scalar_select %p179, %s24, 1
        %p181 = scmp.lt.s32.totalorder %s178, 15
        %s182 = scalar_select %p181, %s178, 15
        %s183 = smul.addr %s182, 2
        %s184 = smul.addr %s180, 32
        %s185 = sadd.s32 %s183, %s184
        %s186 = smul.addr %s185, 4
        %s187 = scalar_lea.vmem %s3, %s186
        %p188 = pneg %p130
        %p189 = pneg %p127
        %s190 = sand.u32 %s117, 1
        %s191 = scalar_lea.sflag [#allocation7], %s190
        %s192 = sand.u32 %s117, 1
        %s193 = smul.addr %s192, 2
        %s194 = scalar_lea.vmem [#allocation6], %s193
        %p195 = scmp.lt.s32.totalorder %s24, 1
        %s196 = scalar_select %p195, %s24, 1
        %s197 = smul.addr %s196, 32
        %s198 = smul.addr %s197, 8
        %s199 = scalar_lea.vmem %s1, %s198
        %s200 = smul.u32 16, %s25
        %p201 = scmp.lt.s32.totalorder %s24, 1
        %s202 = scalar_select %p201, %s24, 1
        %p203 = scmp.lt.s32.totalorder %s200, 15
        %s204 = scalar_select %p203, %s200, 15
        %s205 = smul.addr %s204, 2
        %s206 = smul.addr %s202, 32
        %s207 = sadd.s32 %s205, %s206
        %s208 = smul.addr %s207, 4
        %s209 = scalar_lea.vmem %s3, %s208
        %s210 = smul.u32 16, %s25
        %p212 = scmp.eq.s32.totalorder %s25, 0
        // Predicated region
        $region29: #{tpu_custom_call.1} parent=27 // pred_check
          %p213 = pneg %p212
        $region30: #{tpu_custom_call.1} parent=27 // pred_check_branch
          %215 = sbr.rel (%p213) target = $region32
        $region31: #{tpu_custom_call.1} parent=27 // pred_region
          %s216 = sld [smem:[#allocation5]]
          %s217 = scvt.s32.f32 %s216
          %v218 = vld [vmem:[%s199] sm:$0xff]
          %v219 = vld [vmem:[%s199 + $0x8] sm:$0xff]
          %v220 = vld [vmem:[%s199 + $0x10] sm:$0xff]
          %v221 = vld [vmem:[%s199 + $0x18] sm:$0xff]
          %v222 = vld [vmem:[%s199 + $0x20] sm:$0xff]
          %v223 = vld [vmem:[%s199 + $0x28] sm:$0xff]
          %v224 = vld [vmem:[%s199 + $0x30] sm:$0xff]
          %v225 = vld [vmem:[%s199 + $0x38] sm:$0xff]
          %v226 = vld [vmem:[%s199 + $0x40] sm:$0xff]
          %v227 = vld [vmem:[%s199 + $0x48] sm:$0xff]
          %v228 = vld [vmem:[%s199 + $0x50] sm:$0xff]
          %v229 = vld [vmem:[%s199 + $0x58] sm:$0xff]
          %v230 = vld [vmem:[%s199 + $0x60] sm:$0xff]
          %v231 = vld [vmem:[%s199 + $0x68] sm:$0xff]
          %v232 = vld [vmem:[%s199 + $0x70] sm:$0xff]
          %v233 = vld [vmem:[%s199 + $0x78] sm:$0xff]
          %v234 = vld [vmem:[%s199 + $0x80] sm:$0xff]
          %v235 = vld [vmem:[%s199 + $0x88] sm:$0xff]
          %v236 = vld [vmem:[%s199 + $0x90] sm:$0xff]
          %v237 = vld [vmem:[%s199 + $0x98] sm:$0xff]
          %v238 = vld [vmem:[%s199 + $0xa0] sm:$0xff]
          %v239 = vld [vmem:[%s199 + $0xa8] sm:$0xff]
          %v240 = vld [vmem:[%s199 + $0xb0] sm:$0xff]
          %v241 = vld [vmem:[%s199 + $0xb8] sm:$0xff]
          %v242 = vld [vmem:[%s199 + $0xc0] sm:$0xff]
          %v243 = vld [vmem:[%s199 + $0xc8] sm:$0xff]
          %v244 = vld [vmem:[%s199 + $0xd0] sm:$0xff]
          %v245 = vld [vmem:[%s199 + $0xd8] sm:$0xff]
          %v246 = vld [vmem:[%s199 + $0xe0] sm:$0xff]
          %v247 = vld [vmem:[%s199 + $0xe8] sm:$0xff]
          %v248 = vld [vmem:[%s199 + $0xf0] sm:$0xff]
          %v249 = vld [vmem:[%s199 + $0xf8] sm:$0xff]
          %vm250 = vcmp.gt.f32.partialorder %v218, 0.0
          %vm251 = vcmp.gt.f32.partialorder %v219, 0.0
          %vm252 = vcmp.gt.f32.partialorder %v220, 0.0
          %vm253 = vcmp.gt.f32.partialorder %v221, 0.0
          %vm254 = vcmp.gt.f32.partialorder %v222, 0.0
          %vm255 = vcmp.gt.f32.partialorder %v223, 0.0
          %vm256 = vcmp.gt.f32.partialorder %v224, 0.0
          %vm257 = vcmp.gt.f32.partialorder %v225, 0.0
          %vm258 = vcmp.gt.f32.partialorder %v226, 0.0
          %vm259 = vcmp.gt.f32.partialorder %v227, 0.0
          %vm260 = vcmp.gt.f32.partialorder %v228, 0.0
          %vm261 = vcmp.gt.f32.partialorder %v229, 0.0
          %vm262 = vcmp.gt.f32.partialorder %v230, 0.0
          %vm263 = vcmp.gt.f32.partialorder %v231, 0.0
          %vm264 = vcmp.gt.f32.partialorder %v232, 0.0
          %vm265 = vcmp.gt.f32.partialorder %v233, 0.0
          %vm266 = vcmp.gt.f32.partialorder %v234, 0.0
          %vm267 = vcmp.gt.f32.partialorder %v235, 0.0
          %vm268 = vcmp.gt.f32.partialorder %v236, 0.0
          %vm269 = vcmp.gt.f32.partialorder %v237, 0.0
          %vm270 = vcmp.gt.f32.partialorder %v238, 0.0
          %vm271 = vcmp.gt.f32.partialorder %v239, 0.0
          %vm272 = vcmp.gt.f32.partialorder %v240, 0.0
          %vm273 = vcmp.gt.f32.partialorder %v241, 0.0
          %vm274 = vcmp.gt.f32.partialorder %v242, 0.0
          %vm275 = vcmp.gt.f32.partialorder %v243, 0.0
          %vm276 = vcmp.gt.f32.partialorder %v244, 0.0
          %vm277 = vcmp.gt.f32.partialorder %v245, 0.0
          %vm278 = vcmp.gt.f32.partialorder %v246, 0.0
          %vm279 = vcmp.gt.f32.partialorder %v247, 0.0
          %vm280 = vcmp.gt.f32.partialorder %v248, 0.0
          %vm281 = vcmp.gt.f32.partialorder %v249, 0.0
          %vm282 = vcmp.lt.f32.partialorder %v218, 0.0
          %vm283 = vcmp.lt.f32.partialorder %v219, 0.0
          %vm284 = vcmp.lt.f32.partialorder %v220, 0.0
          %vm285 = vcmp.lt.f32.partialorder %v221, 0.0
          %vm286 = vcmp.lt.f32.partialorder %v222, 0.0
          %vm287 = vcmp.lt.f32.partialorder %v223, 0.0
          %vm288 = vcmp.lt.f32.partialorder %v224, 0.0
          %vm289 = vcmp.lt.f32.partialorder %v225, 0.0
          %vm290 = vcmp.lt.f32.partialorder %v226, 0.0
          %vm291 = vcmp.lt.f32.partialorder %v227, 0.0
          %vm292 = vcmp.lt.f32.partialorder %v228, 0.0
          %vm293 = vcmp.lt.f32.partialorder %v229, 0.0
          %vm294 = vcmp.lt.f32.partialorder %v230, 0.0
          %vm295 = vcmp.lt.f32.partialorder %v231, 0.0
          %vm296 = vcmp.lt.f32.partialorder %v232, 0.0
          %vm297 = vcmp.lt.f32.partialorder %v233, 0.0
          %vm298 = vcmp.lt.f32.partialorder %v234, 0.0
          %vm299 = vcmp.lt.f32.partialorder %v235, 0.0
          %vm300 = vcmp.lt.f32.partialorder %v236, 0.0
          %vm301 = vcmp.lt.f32.partialorder %v237, 0.0
          %vm302 = vcmp.lt.f32.partialorder %v238, 0.0
          %vm303 = vcmp.lt.f32.partialorder %v239, 0.0
          %vm304 = vcmp.lt.f32.partialorder %v240, 0.0
          %vm305 = vcmp.lt.f32.partialorder %v241, 0.0
          %vm306 = vcmp.lt.f32.partialorder %v242, 0.0
          %vm307 = vcmp.lt.f32.partialorder %v243, 0.0
          %vm308 = vcmp.lt.f32.partialorder %v244, 0.0
          %vm309 = vcmp.lt.f32.partialorder %v245, 0.0
          %vm310 = vcmp.lt.f32.partialorder %v246, 0.0
          %vm311 = vcmp.lt.f32.partialorder %v247, 0.0
          %vm312 = vcmp.lt.f32.partialorder %v248, 0.0
          %vm313 = vcmp.lt.f32.partialorder %v249, 0.0
          %v314 = vstv %s217
          %v315 = vsel %vm282, %v314, 0.0
          %v316 = vsel %vm283, %v314, 0.0
          %v317 = vsel %vm284, %v314, 0.0
          %v318 = vsel %vm285, %v314, 0.0
          %v319 = vsel %vm286, %v314, 0.0
          %v320 = vsel %vm287, %v314, 0.0
          %v321 = vsel %vm288, %v314, 0.0
          %v322 = vsel %vm289, %v314, 0.0
          %v323 = vsel %vm290, %v314, 0.0
          %v324 = vsel %vm291, %v314, 0.0
          %v325 = vsel %vm292, %v314, 0.0
          %v326 = vsel %vm293, %v314, 0.0
          %v327 = vsel %vm294, %v314, 0.0
          %v328 = vsel %vm295, %v314, 0.0
          %v329 = vsel %vm296, %v314, 0.0
          %v330 = vsel %vm297, %v314, 0.0
          %v331 = vsel %vm298, %v314, 0.0
          %v332 = vsel %vm299, %v314, 0.0
          %v333 = vsel %vm300, %v314, 0.0
          %v334 = vsel %vm301, %v314, 0.0
          %v335 = vsel %vm302, %v314, 0.0
          %v336 = vsel %vm303, %v314, 0.0
          %v337 = vsel %vm304, %v314, 0.0
          %v338 = vsel %vm305, %v314, 0.0
          %v339 = vsel %vm306, %v314, 0.0
          %v340 = vsel %vm307, %v314, 0.0
          %v341 = vsel %vm308, %v314, 0.0
          %v342 = vsel %vm309, %v314, 0.0
          %v343 = vsel %vm310, %v314, 0.0
          %v344 = vsel %vm311, %v314, 0.0
          %v345 = vsel %vm312, %v314, 0.0
          %v346 = vsel %vm313, %v314, 0.0
          %v347 = vsel %vm250, 1.0, %v315
          %v348 = vsel %vm251, 1.0, %v316
          %v349 = vsel %vm252, 1.0, %v317
          %v350 = vsel %vm253, 1.0, %v318
          %v351 = vsel %vm254, 1.0, %v319
          %v352 = vsel %vm255, 1.0, %v320
          %v353 = vsel %vm256, 1.0, %v321
          %v354 = vsel %vm257, 1.0, %v322
          %v355 = vsel %vm258, 1.0, %v323
          %v356 = vsel %vm259, 1.0, %v324
          %v357 = vsel %vm260, 1.0, %v325
          %v358 = vsel %vm261, 1.0, %v326
          %v359 = vsel %vm262, 1.0, %v327
          %v360 = vsel %vm263, 1.0, %v328
          %v361 = vsel %vm264, 1.0, %v329
          %v362 = vsel %vm265, 1.0, %v330
          %v363 = vsel %vm266, 1.0, %v331
          %v364 = vsel %vm267, 1.0, %v332
          %v365 = vsel %vm268, 1.0, %v333
          %v366 = vsel %vm269, 1.0, %v334
          %v367 = vsel %vm270, 1.0, %v335
          %v368 = vsel %vm271, 1.0, %v336
          %v369 = vsel %vm272, 1.0, %v337
          %v370 = vsel %vm273, 1.0, %v338
          %v371 = vsel %vm274, 1.0, %v339
          %v372 = vsel %vm275, 1.0, %v340
          %v373 = vsel %vm276, 1.0, %v341
          %v374 = vsel %vm277, 1.0, %v342
          %v375 = vsel %vm278, 1.0, %v343
          %v376 = vsel %vm279, 1.0, %v344
          %v377 = vsel %vm280, 1.0, %v345
          %v378 = vsel %vm281, 1.0, %v346
          %v379 = vpack.c.bf16 %v348, %v347
          %v380 = vpack.c.bf16 %v350, %v349
          %v381 = vpack.c.bf16 %v352, %v351
          %v382 = vpack.c.bf16 %v354, %v353
          %v383 = vpack.c.bf16 %v356, %v355
          %v384 = vpack.c.bf16 %v358, %v357
          %v385 = vpack.c.bf16 %v360, %v359
          %v386 = vpack.c.bf16 %v362, %v361
          %v387 = vpack.c.bf16 %v364, %v363
          %v388 = vpack.c.bf16 %v366, %v365
          %v389 = vpack.c.bf16 %v368, %v367
          %v390 = vpack.c.bf16 %v370, %v369
          %v391 = vpack.c.bf16 %v372, %v371
          %v392 = vpack.c.bf16 %v374, %v373
          %v393 = vpack.c.bf16 %v376, %v375
          %v394 = vpack.c.bf16 %v378, %v377
          %vm395 = vcmask 195584
          %396 = vst.msk [vmem:[#allocation2] sm:$0xff] %vm395, 0
          %s397 = scalar_lea.vmem [#allocation2], 136
          %398 = vst.msk [vmem:[%s397] sm:$0xff] %vm395, 0
          %s399 = scalar_lea.vmem [#allocation2], 8
          %vm400 = vcmask 57344
          %vm401 = vsmask.f32 256
          %vm402 = vmand %vm400, %vm401
          %v403 = vld [vmem:[%s399] sm:$0x1]
          %v404 = vsel %vm402, 0, %v403
          %405 = vst [vmem:[%s399] sm:$0x1] %v404
          %v406 = vld [vmem:[%s399 + $0x8] sm:$0x1]
          %v407 = vsel %vm402, 0, %v406
          %408 = vst [vmem:[%s399 + $0x8] sm:$0x1] %v407
          %v409 = vld [vmem:[%s399 + $0x10] sm:$0x1]
          %v410 = vsel %vm402, 0, %v409
          %411 = vst [vmem:[%s399 + $0x10] sm:$0x1] %v410
          %v412 = vld [vmem:[%s399 + $0x18] sm:$0x1]
          %v413 = vsel %vm402, 0, %v412
          %414 = vst [vmem:[%s399 + $0x18] sm:$0x1] %v413
          %v415 = vld [vmem:[%s399 + $0x20] sm:$0x1]
          %v416 = vsel %vm402, 0, %v415
          %417 = vst [vmem:[%s399 + $0x20] sm:$0x1] %v416
          %v418 = vld [vmem:[%s399 + $0x28] sm:$0x1]
          %v419 = vsel %vm402, 0, %v418
          %420 = vst [vmem:[%s399 + $0x28] sm:$0x1] %v419
          %v421 = vld [vmem:[%s399 + $0x30] sm:$0x1]
          %v422 = vsel %vm402, 0, %v421
          %423 = vst [vmem:[%s399 + $0x30] sm:$0x1] %v422
          %v424 = vld [vmem:[%s399 + $0x38] sm:$0x1]
          %v425 = vsel %vm402, 0, %v424
          %426 = vst [vmem:[%s399 + $0x38] sm:$0x1] %v425
          %v427 = vld [vmem:[%s399 + $0x40] sm:$0x1]
          %v428 = vsel %vm402, 0, %v427
          %429 = vst [vmem:[%s399 + $0x40] sm:$0x1] %v428
          %v430 = vld [vmem:[%s399 + $0x48] sm:$0x1]
          %v431 = vsel %vm402, 0, %v430
          %432 = vst [vmem:[%s399 + $0x48] sm:$0x1] %v431
          %v433 = vld [vmem:[%s399 + $0x50] sm:$0x1]
          %v434 = vsel %vm402, 0, %v433
          %435 = vst [vmem:[%s399 + $0x50] sm:$0x1] %v434
          %v436 = vld [vmem:[%s399 + $0x58] sm:$0x1]
          %v437 = vsel %vm402, 0, %v436
          %438 = vst [vmem:[%s399 + $0x58] sm:$0x1] %v437
          %v439 = vld [vmem:[%s399 + $0x60] sm:$0x1]
          %v440 = vsel %vm402, 0, %v439
          %441 = vst [vmem:[%s399 + $0x60] sm:$0x1] %v440
          %v442 = vld [vmem:[%s399 + $0x68] sm:$0x1]
          %v443 = vsel %vm402, 0, %v442
          %444 = vst [vmem:[%s399 + $0x68] sm:$0x1] %v443
          %v445 = vld [vmem:[%s399 + $0x70] sm:$0x1]
          %v446 = vsel %vm402, 0, %v445
          %447 = vst [vmem:[%s399 + $0x70] sm:$0x1] %v446
          %v448 = vld [vmem:[%s399 + $0x78] sm:$0x1]
          %v449 = vsel %vm402, 0, %v448
          %450 = vst [vmem:[%s399 + $0x78] sm:$0x1] %v449
          %v452 = vshrl.u32 %v379, 16
          %v454 = vrot.slane %v452, 7
          %v455 = vshll.u32 %v379, 16
          %v457 = vor.u32 %v454, %v455
          %v459 = vshrl.u32 %v380, 16
          %v461 = vrot.slane %v459, 7
          %v462 = vshll.u32 %v380, 16
          %v464 = vor.u32 %v461, %v462
          %v466 = vshrl.u32 %v381, 16
          %v468 = vrot.slane %v466, 7
          %v469 = vshll.u32 %v381, 16
          %v471 = vor.u32 %v468, %v469
          %v473 = vshrl.u32 %v382, 16
          %v475 = vrot.slane %v473, 7
          %v476 = vshll.u32 %v382, 16
          %v478 = vor.u32 %v475, %v476
          %v480 = vshrl.u32 %v383, 16
          %v482 = vrot.slane %v480, 7
          %v483 = vshll.u32 %v383, 16
          %v485 = vor.u32 %v482, %v483
          %v487 = vshrl.u32 %v384, 16
          %v489 = vrot.slane %v487, 7
          %v490 = vshll.u32 %v384, 16
          %v492 = vor.u32 %v489, %v490
          %v494 = vshrl.u32 %v385, 16
          %v496 = vrot.slane %v494, 7
          %v497 = vshll.u32 %v385, 16
          %v499 = vor.u32 %v496, %v497
          %v501 = vshrl.u32 %v386, 16
          %v503 = vrot.slane %v501, 7
          %v504 = vshll.u32 %v386, 16
          %v506 = vor.u32 %v503, %v504
          %v508 = vshrl.u32 %v387, 16
          %v510 = vrot.slane %v508, 7
          %v511 = vshll.u32 %v387, 16
          %v513 = vor.u32 %v510, %v511
          %v515 = vshrl.u32 %v388, 16
          %v517 = vrot.slane %v515, 7
          %v518 = vshll.u32 %v388, 16
          %v520 = vor.u32 %v517, %v518
          %v522 = vshrl.u32 %v389, 16
          %v524 = vrot.slane %v522, 7
          %v525 = vshll.u32 %v389, 16
          %v527 = vor.u32 %v524, %v525
          %v529 = vshrl.u32 %v390, 16
          %v531 = vrot.slane %v529, 7
          %v532 = vshll.u32 %v390, 16
          %v534 = vor.u32 %v531, %v532
          %v536 = vshrl.u32 %v391, 16
          %v538 = vrot.slane %v536, 7
          %v539 = vshll.u32 %v391, 16
          %v541 = vor.u32 %v538, %v539
          %v543 = vshrl.u32 %v392, 16
          %v545 = vrot.slane %v543, 7
          %v546 = vshll.u32 %v392, 16
          %v548 = vor.u32 %v545, %v546
          %v550 = vshrl.u32 %v393, 16
          %v552 = vrot.slane %v550, 7
          %v553 = vshll.u32 %v393, 16
          %v555 = vor.u32 %v552, %v553
          %v557 = vshrl.u32 %v394, 16
          %v559 = vrot.slane %v557, 7
          %v560 = vshll.u32 %v394, 16
          %v562 = vor.u32 %v559, %v560
          %vm579 = vcmask 64512
          %vm580 = vsmask.f32 7938
          %vm581 = vmand %vm579, %vm580
          %v582 = vld [vmem:[%s399] sm:$0xff]
          %v583 = vsel %vm581, %v457, %v582
          %584 = vst [vmem:[%s399] sm:$0xff] %v583
          %v585 = vld [vmem:[%s399 + $0x8] sm:$0xff]
          %v586 = vsel %vm581, %v464, %v585
          %587 = vst [vmem:[%s399 + $0x8] sm:$0xff] %v586
          %v588 = vld [vmem:[%s399 + $0x10] sm:$0xff]
          %v589 = vsel %vm581, %v471, %v588
          %590 = vst [vmem:[%s399 + $0x10] sm:$0xff] %v589
          %v591 = vld [vmem:[%s399 + $0x18] sm:$0xff]
          %v592 = vsel %vm581, %v478, %v591
          %593 = vst [vmem:[%s399 + $0x18] sm:$0xff] %v592
          %v594 = vld [vmem:[%s399 + $0x20] sm:$0xff]
          %v595 = vsel %vm581, %v485, %v594
          %596 = vst [vmem:[%s399 + $0x20] sm:$0xff] %v595
          %v597 = vld [vmem:[%s399 + $0x28] sm:$0xff]
          %v598 = vsel %vm581, %v492, %v597
          %599 = vst [vmem:[%s399 + $0x28] sm:$0xff] %v598
          %v600 = vld [vmem:[%s399 + $0x30] sm:$0xff]
          %v601 = vsel %vm581, %v499, %v600
          %602 = vst [vmem:[%s399 + $0x30] sm:$0xff] %v601
          %v603 = vld [vmem:[%s399 + $0x38] sm:$0xff]
          %v604 = vsel %vm581, %v506, %v603
          %605 = vst [vmem:[%s399 + $0x38] sm:$0xff] %v604
          %v606 = vld [vmem:[%s399 + $0x40] sm:$0xff]
          %v607 = vsel %vm581, %v513, %v606
          %608 = vst [vmem:[%s399 + $0x40] sm:$0xff] %v607
          %v609 = vld [vmem:[%s399 + $0x48] sm:$0xff]
          %v610 = vsel %vm581, %v520, %v609
          %611 = vst [vmem:[%s399 + $0x48] sm:$0xff] %v610
          %v612 = vld [vmem:[%s399 + $0x50] sm:$0xff]
          %v613 = vsel %vm581, %v527, %v612
          %614 = vst [vmem:[%s399 + $0x50] sm:$0xff] %v613
          %v615 = vld [vmem:[%s399 + $0x58] sm:$0xff]
          %v616 = vsel %vm581, %v534, %v615
          %617 = vst [vmem:[%s399 + $0x58] sm:$0xff] %v616
          %v618 = vld [vmem:[%s399 + $0x60] sm:$0xff]
          %v619 = vsel %vm581, %v541, %v618
          %620 = vst [vmem:[%s399 + $0x60] sm:$0xff] %v619
          %v621 = vld [vmem:[%s399 + $0x68] sm:$0xff]
          %v622 = vsel %vm581, %v548, %v621
          %623 = vst [vmem:[%s399 + $0x68] sm:$0xff] %v622
          %v624 = vld [vmem:[%s399 + $0x70] sm:$0xff]
          %v625 = vsel %vm581, %v555, %v624
          %626 = vst [vmem:[%s399 + $0x70] sm:$0xff] %v625
          %v627 = vld [vmem:[%s399 + $0x78] sm:$0xff]
          %v628 = vsel %vm581, %v562, %v627
          %629 = vst [vmem:[%s399 + $0x78] sm:$0xff] %v628
          %646 = vrot.lane.b32.xlu0 %v379, 8
          %v647 = vpop.permute.xlu0 %646
          %648 = vrot.lane.b32.xlu0 %v380, 8
          %v649 = vpop.permute.xlu0 %648
          %650 = vrot.lane.b32.xlu0 %v381, 8
          %v651 = vpop.permute.xlu0 %650
          %652 = vrot.lane.b32.xlu0 %v382, 8
          %v653 = vpop.permute.xlu0 %652
          %654 = vrot.lane.b32.xlu0 %v383, 8
          %v655 = vpop.permute.xlu0 %654
          %656 = vrot.lane.b32.xlu0 %v384, 8
          %v657 = vpop.permute.xlu0 %656
          %658 = vrot.lane.b32.xlu0 %v385, 8
          %v659 = vpop.permute.xlu0 %658
          %660 = vrot.lane.b32.xlu0 %v386, 8
          %v661 = vpop.permute.xlu0 %660
          %662 = vrot.lane.b32.xlu0 %v387, 8
          %v663 = vpop.permute.xlu0 %662
          %664 = vrot.lane.b32.xlu0 %v388, 8
          %v665 = vpop.permute.xlu0 %664
          %666 = vrot.lane.b32.xlu0 %v389, 8
          %v667 = vpop.permute.xlu0 %666
          %668 = vrot.lane.b32.xlu0 %v390, 8
          %v669 = vpop.permute.xlu0 %668
          %670 = vrot.lane.b32.xlu0 %v391, 8
          %v671 = vpop.permute.xlu0 %670
          %672 = vrot.lane.b32.xlu0 %v392, 8
          %v673 = vpop.permute.xlu0 %672
          %674 = vrot.lane.b32.xlu0 %v393, 8
          %v675 = vpop.permute.xlu0 %674
          %676 = vrot.lane.b32.xlu0 %v394, 8
          %v677 = vpop.permute.xlu0 %676
          %vm694 = vcmask 130112
          %695 = vst.msk [vmem:[%s399] sm:$0xff] %vm694, %v647
          %696 = vst.msk [vmem:[%s399 + $0x8] sm:$0xff] %vm694, %v649
          %697 = vst.msk [vmem:[%s399 + $0x10] sm:$0xff] %vm694, %v651
          %698 = vst.msk [vmem:[%s399 + $0x18] sm:$0xff] %vm694, %v653
          %699 = vst.msk [vmem:[%s399 + $0x20] sm:$0xff] %vm694, %v655
          %700 = vst.msk [vmem:[%s399 + $0x28] sm:$0xff] %vm694, %v657
          %701 = vst.msk [vmem:[%s399 + $0x30] sm:$0xff] %vm694, %v659
          %702 = vst.msk [vmem:[%s399 + $0x38] sm:$0xff] %vm694, %v661
          %703 = vst.msk [vmem:[%s399 + $0x40] sm:$0xff] %vm694, %v663
          %704 = vst.msk [vmem:[%s399 + $0x48] sm:$0xff] %vm694, %v665
          %705 = vst.msk [vmem:[%s399 + $0x50] sm:$0xff] %vm694, %v667
          %706 = vst.msk [vmem:[%s399 + $0x58] sm:$0xff] %vm694, %v669
          %707 = vst.msk [vmem:[%s399 + $0x60] sm:$0xff] %vm694, %v671
          %708 = vst.msk [vmem:[%s399 + $0x68] sm:$0xff] %vm694, %v673
          %709 = vst.msk [vmem:[%s399 + $0x70] sm:$0xff] %vm694, %v675
          %710 = vst.msk [vmem:[%s399 + $0x78] sm:$0xff] %vm694, %v677
          %vm711 = vcmask 195719
          %vm712 = vsmask.f32 7966
          %vm713 = vmand %vm711, %vm712
          %v714 = vld [vmem:[%s399] sm:$0x80]
          %v715 = vsel %vm713, 0, %v714
          %716 = vst [vmem:[%s399] sm:$0x80] %v715
          %v717 = vld [vmem:[%s399 + $0x8] sm:$0x80]
          %v718 = vsel %vm713, 0, %v717
          %719 = vst [vmem:[%s399 + $0x8] sm:$0x80] %v718
          %v720 = vld [vmem:[%s399 + $0x10] sm:$0x80]
          %v721 = vsel %vm713, 0, %v720
          %722 = vst [vmem:[%s399 + $0x10] sm:$0x80] %v721
          %v723 = vld [vmem:[%s399 + $0x18] sm:$0x80]
          %v724 = vsel %vm713, 0, %v723
          %725 = vst [vmem:[%s399 + $0x18] sm:$0x80] %v724
          %v726 = vld [vmem:[%s399 + $0x20] sm:$0x80]
          %v727 = vsel %vm713, 0, %v726
          %728 = vst [vmem:[%s399 + $0x20] sm:$0x80] %v727
          %v729 = vld [vmem:[%s399 + $0x28] sm:$0x80]
          %v730 = vsel %vm713, 0, %v729
          %731 = vst [vmem:[%s399 + $0x28] sm:$0x80] %v730
          %v732 = vld [vmem:[%s399 + $0x30] sm:$0x80]
          %v733 = vsel %vm713, 0, %v732
          %734 = vst [vmem:[%s399 + $0x30] sm:$0x80] %v733
          %v735 = vld [vmem:[%s399 + $0x38] sm:$0x80]
          %v736 = vsel %vm713, 0, %v735
          %737 = vst [vmem:[%s399 + $0x38] sm:$0x80] %v736
          %v738 = vld [vmem:[%s399 + $0x40] sm:$0x80]
          %v739 = vsel %vm713, 0, %v738
          %740 = vst [vmem:[%s399 + $0x40] sm:$0x80] %v739
          %v741 = vld [vmem:[%s399 + $0x48] sm:$0x80]
          %v742 = vsel %vm713, 0, %v741
          %743 = vst [vmem:[%s399 + $0x48] sm:$0x80] %v742
          %v744 = vld [vmem:[%s399 + $0x50] sm:$0x80]
          %v745 = vsel %vm713, 0, %v744
          %746 = vst [vmem:[%s399 + $0x50] sm:$0x80] %v745
          %v747 = vld [vmem:[%s399 + $0x58] sm:$0x80]
          %v748 = vsel %vm713, 0, %v747
          %749 = vst [vmem:[%s399 + $0x58] sm:$0x80] %v748
          %v750 = vld [vmem:[%s399 + $0x60] sm:$0x80]
          %v751 = vsel %vm713, 0, %v750
          %752 = vst [vmem:[%s399 + $0x60] sm:$0x80] %v751
          %v753 = vld [vmem:[%s399 + $0x68] sm:$0x80]
          %v754 = vsel %vm713, 0, %v753
          %755 = vst [vmem:[%s399 + $0x68] sm:$0x80] %v754
          %v756 = vld [vmem:[%s399 + $0x70] sm:$0x80]
          %v757 = vsel %vm713, 0, %v756
          %758 = vst [vmem:[%s399 + $0x70] sm:$0x80] %v757
          %v759 = vld [vmem:[%s399 + $0x78] sm:$0x80]
          %v760 = vsel %vm713, 0, %v759
          %761 = vst [vmem:[%s399 + $0x78] sm:$0x80] %v760
          %v762 = vrot.slane %v455, 1
          %v763 = vor.u32 %v452, %v762
          %v764 = vrot.slane %v462, 1
          %v765 = vor.u32 %v459, %v764
          %v766 = vrot.slane %v469, 1
          %v767 = vor.u32 %v466, %v766
          %v768 = vrot.slane %v476, 1
          %v769 = vor.u32 %v473, %v768
          %v770 = vrot.slane %v483, 1
          %v771 = vor.u32 %v480, %v770
          %v772 = vrot.slane %v490, 1
          %v773 = vor.u32 %v487, %v772
          %v774 = vrot.slane %v497, 1
          %v775 = vor.u32 %v494, %v774
          %v776 = vrot.slane %v504, 1
          %v777 = vor.u32 %v501, %v776
          %v778 = vrot.slane %v511, 1
          %v779 = vor.u32 %v508, %v778
          %v780 = vrot.slane %v518, 1
          %v781 = vor.u32 %v515, %v780
          %v782 = vrot.slane %v525, 1
          %v783 = vor.u32 %v522, %v782
          %v784 = vrot.slane %v532, 1
          %v785 = vor.u32 %v529, %v784
          %v786 = vrot.slane %v539, 1
          %v787 = vor.u32 %v536, %v786
          %v788 = vrot.slane %v546, 1
          %v789 = vor.u32 %v543, %v788
          %v790 = vrot.slane %v553, 1
          %v791 = vor.u32 %v550, %v790
          %v792 = vrot.slane %v560, 1
          %v793 = vor.u32 %v557, %v792
          %794 = vrot.lane.b32.xlu0 %v763, 16
          %v795 = vpop.permute.xlu0 %794
          %796 = vrot.lane.b32.xlu0 %v765, 16
          %v797 = vpop.permute.xlu0 %796
          %798 = vrot.lane.b32.xlu0 %v767, 16
          %v799 = vpop.permute.xlu0 %798
          %800 = vrot.lane.b32.xlu0 %v769, 16
          %v801 = vpop.permute.xlu0 %800
          %802 = vrot.lane.b32.xlu0 %v771, 16
          %v803 = vpop.permute.xlu0 %802
          %804 = vrot.lane.b32.xlu0 %v773, 16
          %v805 = vpop.permute.xlu0 %804
          %806 = vrot.lane.b32.xlu0 %v775, 16
          %v807 = vpop.permute.xlu0 %806
          %808 = vrot.lane.b32.xlu0 %v777, 16
          %v809 = vpop.permute.xlu0 %808
          %810 = vrot.lane.b32.xlu0 %v779, 16
          %v811 = vpop.permute.xlu0 %810
          %812 = vrot.lane.b32.xlu0 %v781, 16
          %v813 = vpop.permute.xlu0 %812
          %814 = vrot.lane.b32.xlu0 %v783, 16
          %v815 = vpop.permute.xlu0 %814
          %816 = vrot.lane.b32.xlu0 %v785, 16
          %v817 = vpop.permute.xlu0 %816
          %818 = vrot.lane.b32.xlu0 %v787, 16
          %v819 = vpop.permute.xlu0 %818
          %820 = vrot.lane.b32.xlu0 %v789, 16
          %v821 = vpop.permute.xlu0 %820
          %822 = vrot.lane.b32.xlu0 %v791, 16
          %v823 = vpop.permute.xlu0 %822
          %824 = vrot.lane.b32.xlu0 %v793, 16
          %v825 = vpop.permute.xlu0 %824
          %vm842 = vcmask 195712
          %vm843 = vsmask.f32 7424
          %vm844 = vmand %vm842, %vm843
          %v845 = vld [vmem:[%s399] sm:$0xff]
          %v846 = vsel %vm844, %v795, %v845
          %847 = vst [vmem:[%s399] sm:$0xff] %v846
          %v848 = vld [vmem:[%s399 + $0x8] sm:$0xff]
          %v849 = vsel %vm844, %v797, %v848
          %850 = vst [vmem:[%s399 + $0x8] sm:$0xff] %v849
          %v851 = vld [vmem:[%s399 + $0x10] sm:$0xff]
          %v852 = vsel %vm844, %v799, %v851
          %853 = vst [vmem:[%s399 + $0x10] sm:$0xff] %v852
          %v854 = vld [vmem:[%s399 + $0x18] sm:$0xff]
          %v855 = vsel %vm844, %v801, %v854
          %856 = vst [vmem:[%s399 + $0x18] sm:$0xff] %v855
          %v857 = vld [vmem:[%s399 + $0x20] sm:$0xff]
          %v858 = vsel %vm844, %v803, %v857
          %859 = vst [vmem:[%s399 + $0x20] sm:$0xff] %v858
          %v860 = vld [vmem:[%s399 + $0x28] sm:$0xff]
          %v861 = vsel %vm844, %v805, %v860
          %862 = vst [vmem:[%s399 + $0x28] sm:$0xff] %v861
          %v863 = vld [vmem:[%s399 + $0x30] sm:$0xff]
          %v864 = vsel %vm844, %v807, %v863
          %865 = vst [vmem:[%s399 + $0x30] sm:$0xff] %v864
          %v866 = vld [vmem:[%s399 + $0x38] sm:$0xff]
          %v867 = vsel %vm844, %v809, %v866
          %868 = vst [vmem:[%s399 + $0x38] sm:$0xff] %v867
          %v869 = vld [vmem:[%s399 + $0x40] sm:$0xff]
          %v870 = vsel %vm844, %v811, %v869
          %871 = vst [vmem:[%s399 + $0x40] sm:$0xff] %v870
          %v872 = vld [vmem:[%s399 + $0x48] sm:$0xff]
          %v873 = vsel %vm844, %v813, %v872
          %874 = vst [vmem:[%s399 + $0x48] sm:$0xff] %v873
          %v875 = vld [vmem:[%s399 + $0x50] sm:$0xff]
          %v876 = vsel %vm844, %v815, %v875
          %877 = vst [vmem:[%s399 + $0x50] sm:$0xff] %v876
          %v878 = vld [vmem:[%s399 + $0x58] sm:$0xff]
          %v879 = vsel %vm844, %v817, %v878
          %880 = vst [vmem:[%s399 + $0x58] sm:$0xff] %v879
          %v881 = vld [vmem:[%s399 + $0x60] sm:$0xff]
          %v882 = vsel %vm844, %v819, %v881
          %883 = vst [vmem:[%s399 + $0x60] sm:$0xff] %v882
          %v884 = vld [vmem:[%s399 + $0x68] sm:$0xff]
          %v885 = vsel %vm844, %v821, %v884
          %886 = vst [vmem:[%s399 + $0x68] sm:$0xff] %v885
          %v887 = vld [vmem:[%s399 + $0x70] sm:$0xff]
          %v888 = vsel %vm844, %v823, %v887
          %889 = vst [vmem:[%s399 + $0x70] sm:$0xff] %v888
          %v890 = vld [vmem:[%s399 + $0x78] sm:$0xff]
          %v891 = vsel %vm844, %v825, %v890
          %892 = vst [vmem:[%s399 + $0x78] sm:$0xff] %v891
        $region32: #{tpu_custom_call.1} parent=27 // pred_fallthru
          _
        %s893 = smul.u32 %s25, 16
        %s894 = smul.addr %s893, 8
        %s895 = scalar_lea.vmem [#allocation2], %s894
        %v896 = vld [vmem:[%s895] sm:$0xff]
        %v897 = vld [vmem:[%s895 + $0x8] sm:$0xff]
        %v898 = vld [vmem:[%s895 + $0x10] sm:$0xff]
        %v899 = vld [vmem:[%s895 + $0x18] sm:$0xff]
        %v900 = vld [vmem:[%s895 + $0x20] sm:$0xff]
        %v901 = vld [vmem:[%s895 + $0x28] sm:$0xff]
        %v902 = vld [vmem:[%s895 + $0x30] sm:$0xff]
        %v903 = vld [vmem:[%s895 + $0x38] sm:$0xff]
        %v904 = vld [vmem:[%s895 + $0x40] sm:$0xff]
        %v905 = vld [vmem:[%s895 + $0x48] sm:$0xff]
        %v906 = vld [vmem:[%s895 + $0x50] sm:$0xff]
        %v907 = vld [vmem:[%s895 + $0x58] sm:$0xff]
        %v908 = vld [vmem:[%s895 + $0x60] sm:$0xff]
        %v909 = vld [vmem:[%s895 + $0x68] sm:$0xff]
        %v910 = vld [vmem:[%s895 + $0x70] sm:$0xff]
        %v911 = vld [vmem:[%s895 + $0x78] sm:$0xff]
        %v912 = vld [vmem:[%s2] sm:$0xf]
        %v913 = vld [vmem:[%s2 + $0x4] sm:$0xf]
        %v914 = vld [vmem:[%s2 + $0x8] sm:$0xf]
        %v918 = vunpack.c.l.b16 %v912
        %v919 = vunpack.c.l.b16 %v913
        %v920 = vunpack.c.l.b16 %v914
        %v921 = vpack.c.b16 %v919, %v918
        %v922 = vpack.c.b16 %v920, %v920
        %vm924 = vcmask 195584
        %v926 = vsel %vm924, %v896, 0
        %v929 = vsel %vm924, %v897, 0
        %v932 = vsel %vm924, %v898, 0
        %v935 = vsel %vm924, %v899, 0
        %v938 = vsel %vm924, %v900, 0
        %v941 = vsel %vm924, %v901, 0
        %v944 = vsel %vm924, %v902, 0
        %v947 = vsel %vm924, %v903, 0
        %v950 = vsel %vm924, %v904, 0
        %v953 = vsel %vm924, %v905, 0
        %v956 = vsel %vm924, %v906, 0
        %v959 = vsel %vm924, %v907, 0
        %v962 = vsel %vm924, %v908, 0
        %v965 = vsel %vm924, %v909, 0
        %v968 = vsel %vm924, %v910, 0
        %v971 = vsel %vm924, %v911, 0
        %vm973 = vcmask 1043456
        %v975 = vsel %vm973, %v922, 0
        %977 = vmatprep.subr.bf16.mxu0 0
        %978 = vmatpush1.bf16.msra.mxu0 %v921
        %979 = vmatprep.subr.bf16.mxu0 0
        %980 = vmatpush1.bf16.msra.mxu0 %v975
        %981 = vmatprep.subr.bf16.mxu0 0
        %982 = vmatpush1.bf16.msra.mxu0 0
        %983 = vmatprep.subr.bf16.mxu0 0
        %984 = vmatpush1.bf16.msra.mxu0 0
        %985 = vmatprep.subr.bf16.mxu0 0
        %986 = vmatpush1.bf16.msra.mxu0 0
        %987 = vmatprep.subr.bf16.mxu0 0
        %988 = vmatpush1.bf16.msra.mxu0 0
        %989 = vmatprep.subr.bf16.mxu0 0
        %990 = vmatpush1.bf16.msra.mxu0 0
        %991 = vmatprep.subr.bf16.mxu0 0
        %992 = vmatpush1.bf16.msra.mxu0 0
        %993 = vmatprep.subr.bf16.mxu0 0
        %994 = vmatpush1.bf16.msra.mxu0 0
        %995 = vmatprep.subr.bf16.mxu0 0
        %996 = vmatpush1.bf16.msra.mxu0 0
        %997 = vmatprep.subr.bf16.mxu0 0
        %998 = vmatpush1.bf16.msra.mxu0 0
        %999 = vmatprep.subr.bf16.mxu0 0
        %1000 = vmatpush1.bf16.msra.mxu0 0
        %1001 = vmatprep.subr.bf16.mxu0 0
        %1002 = vmatpush1.bf16.msra.mxu0 0
        %1003 = vmatprep.subr.bf16.mxu0 0
        %1004 = vmatpush1.bf16.msra.mxu0 0
        %1005 = vmatprep.subr.bf16.mxu0 0
        %1006 = vmatpush1.bf16.msra.mxu0 0
        %1007 = vmatprep.subr.bf16.mxu0 0
        %1008 = vmatpush1.bf16.msra.mxu0 0
        %1009 = vmatprep.mubr.bf16.mxu0 0
        %1010 = vmatmul.mubr.bf16.gmra.mrb[0].mxu0 %v926
        %v1011 = vpop.f32.mrb[0].mxu0
        %v1012 = vadd.f32 0.0, %v1011
        %v1013 = vpop.f32.mrb[0].mxu0
        %v1014 = vpop.f32.mrb[0].mxu0
        %v1015 = vadd.f32 0.0, %v1014
        %v1016 = vpop.f32.mrb[0].mxu0
        %1017 = vmatprep.mubr.bf16.mxu0 0
        %1018 = vmatmul.mubr.bf16.gmra.mrb[0].mxu0 %v929
        %v1019 = vpop.f32.mrb[0].mxu0
        %v1020 = vadd.f32 0.0, %v1019
        %v1021 = vpop.f32.mrb[0].mxu0
        %v1022 = vpop.f32.mrb[0].mxu0
        %v1023 = vadd.f32 0.0, %v1022
        %v1024 = vpop.f32.mrb[0].mxu0
        %1025 = vmatprep.mubr.bf16.mxu0 0
        %1026 = vmatmul.mubr.bf16.gmra.mrb[0].mxu0 %v932
        %v1027 = vpop.f32.mrb[0].mxu0
        %v1028 = vadd.f32 0.0, %v1027
        %v1029 = vpop.f32.mrb[0].mxu0
        %v1030 = vpop.f32.mrb[0].mxu0
        %v1031 = vadd.f32 0.0, %v1030
        %v1032 = vpop.f32.mrb[0].mxu0
        %1033 = vmatprep.mubr.bf16.mxu0 0
        %1034 = vmatmul.mubr.bf16.gmra.mrb[0].mxu0 %v935
        %v1035 = vpop.f32.mrb[0].mxu0
        %v1036 = vadd.f32 0.0, %v1035
        %v1037 = vpop.f32.mrb[0].mxu0
        %v1038 = vpop.f32.mrb[0].mxu0
        %v1039 = vadd.f32 0.0, %v1038
        %v1040 = vpop.f32.mrb[0].mxu0
        %1041 = vmatprep.mubr.bf16.mxu0 0
        %1042 = vmatmul.mubr.bf16.gmra.mrb[0].mxu0 %v938
        %v1043 = vpop.f32.mrb[0].mxu0
        %v1044 = vadd.f32 0.0, %v1043
        %v1045 = vpop.f32.mrb[0].mxu0
        %v1046 = vpop.f32.mrb[0].mxu0
        %v1047 = vadd.f32 0.0, %v1046
        %v1048 = vpop.f32.mrb[0].mxu0
        %1049 = vmatprep.mubr.bf16.mxu0 0
        %1050 = vmatmul.mubr.bf16.gmra.mrb[0].mxu0 %v941
        %v1051 = vpop.f32.mrb[0].mxu0
        %v1052 = vadd.f32 0.0, %v1051
        %v1053 = vpop.f32.mrb[0].mxu0
        %v1054 = vpop.f32.mrb[0].mxu0
        %v1055 = vadd.f32 0.0, %v1054
        %v1056 = vpop.f32.mrb[0].mxu0
        %1057 = vmatprep.mubr.bf16.mxu0 0
        %1058 = vmatmul.mubr.bf16.gmra.mrb[0].mxu0 %v944
        %v1059 = vpop.f32.mrb[0].mxu0
        %v1060 = vadd.f32 0.0, %v1059
        %v1061 = vpop.f32.mrb[0].mxu0
        %v1062 = vpop.f32.mrb[0].mxu0
        %v1063 = vadd.f32 0.0, %v1062
        %v1064 = vpop.f32.mrb[0].mxu0
        %1065 = vmatprep.mubr.bf16.mxu0 0
        %1066 = vmatmul.mubr.bf16.gmra.mrb[0].mxu0 %v947
        %v1067 = vpop.f32.mrb[0].mxu0
        %v1068 = vadd.f32 0.0, %v1067
        %v1069 = vpop.f32.mrb[0].mxu0
        %v1070 = vpop.f32.mrb[0].mxu0
        %v1071 = vadd.f32 0.0, %v1070
        %v1072 = vpop.f32.mrb[0].mxu0
        %1073 = vmatprep.mubr.bf16.mxu0 0
        %1074 = vmatmul.mubr.bf16.gmra.mrb[0].mxu0 %v950
        %v1075 = vpop.f32.mrb[0].mxu0
        %v1076 = vadd.f32 0.0, %v1075
        %v1077 = vpop.f32.mrb[0].mxu0
        %v1078 = vpop.f32.mrb[0].mxu0
        %v1079 = vadd.f32 0.0, %v1078
        %v1080 = vpop.f32.mrb[0].mxu0
        %1081 = vmatprep.mubr.bf16.mxu0 0
        %1082 = vmatmul.mubr.bf16.gmra.mrb[0].mxu0 %v953
        %v1083 = vpop.f32.mrb[0].mxu0
        %v1084 = vadd.f32 0.0, %v1083
        %v1085 = vpop.f32.mrb[0].mxu0
        %v1086 = vpop.f32.mrb[0].mxu0
        %v1087 = vadd.f32 0.0, %v1086
        %v1088 = vpop.f32.mrb[0].mxu0
        %1089 = vmatprep.mubr.bf16.mxu0 0
        %1090 = vmatmul.mubr.bf16.gmra.mrb[0].mxu0 %v956
        %v1091 = vpop.f32.mrb[0].mxu0
        %v1092 = vadd.f32 0.0, %v1091
        %v1093 = vpop.f32.mrb[0].mxu0
        %v1094 = vpop.f32.mrb[0].mxu0
        %v1095 = vadd.f32 0.0, %v1094
        %v1096 = vpop.f32.mrb[0].mxu0
        %1097 = vmatprep.mubr.bf16.mxu0 0
        %1098 = vmatmul.mubr.bf16.gmra.mrb[0].mxu0 %v959
        %v1099 = vpop.f32.mrb[0].mxu0
        %v1100 = vadd.f32 0.0, %v1099
        %v1101 = vpop.f32.mrb[0].mxu0
        %v1102 = vpop.f32.mrb[0].mxu0
        %v1103 = vadd.f32 0.0, %v1102
        %v1104 = vpop.f32.mrb[0].mxu0
        %1105 = vmatprep.mubr.bf16.mxu0 0
        %1106 = vmatmul.mubr.bf16.gmra.mrb[0].mxu0 %v962
        %v1107 = vpop.f32.mrb[0].mxu0
        %v1108 = vadd.f32 0.0, %v1107
        %v1109 = vpop.f32.mrb[0].mxu0
        %v1110 = vpop.f32.mrb[0].mxu0
        %v1111 = vadd.f32 0.0, %v1110
        %v1112 = vpop.f32.mrb[0].mxu0
        %1113 = vmatprep.mubr.bf16.mxu0 0
        %1114 = vmatmul.mubr.bf16.gmra.mrb[0].mxu0 %v965
        %v1115 = vpop.f32.mrb[0].mxu0
        %v1116 = vadd.f32 0.0, %v1115
        %v1117 = vpop.f32.mrb[0].mxu0
        %v1118 = vpop.f32.mrb[0].mxu0
        %v1119 = vadd.f32 0.0, %v1118
        %v1120 = vpop.f32.mrb[0].mxu0
        %1121 = vmatprep.mubr.bf16.mxu0 0
        %1122 = vmatmul.mubr.bf16.gmra.mrb[0].mxu0 %v968
        %v1123 = vpop.f32.mrb[0].mxu0
        %v1124 = vadd.f32 0.0, %v1123
        %v1125 = vpop.f32.mrb[0].mxu0
        %v1126 = vpop.f32.mrb[0].mxu0
        %v1127 = vadd.f32 0.0, %v1126
        %v1128 = vpop.f32.mrb[0].mxu0
        %1129 = vmatprep.mubr.bf16.mxu0 0
        %1130 = vmatmul.mubr.bf16.gmra.mrb[0].mxu0 %v971
        %v1131 = vpop.f32.mrb[0].mxu0
        %v1132 = vadd.f32 0.0, %v1131
        %v1133 = vpop.f32.mrb[0].mxu0
        %v1134 = vpop.f32.mrb[0].mxu0
        %v1135 = vadd.f32 0.0, %v1134
        %v1136 = vpop.f32.mrb[0].mxu0
        %1137 = vdwg.mxu0
        %vm1138 = vcmask 64512
        %1139 = vst.msk [vmem:[#allocation3] sm:$0xff] %vm1138, %v1012
        %1140 = vst.msk [vmem:[#allocation3 + $0x8] sm:$0xff] %vm1138, %v1015
        %1141 = vst.msk [vmem:[#allocation3 + $0x10] sm:$0xff] %vm1138, %v1020
        %1142 = vst.msk [vmem:[#allocation3 + $0x18] sm:$0xff] %vm1138, %v1023
        %1143 = vst.msk [vmem:[#allocation3 + $0x20] sm:$0xff] %vm1138, %v1028
        %1144 = vst.msk [vmem:[#allocation3 + $0x28] sm:$0xff] %vm1138, %v1031
        %1145 = vst.msk [vmem:[#allocation3 + $0x30] sm:$0xff] %vm1138, %v1036
        %1146 = vst.msk [vmem:[#allocation3 + $0x38] sm:$0xff] %vm1138, %v1039
        %1147 = vst.msk [vmem:[#allocation3 + $0x40] sm:$0xff] %vm1138, %v1044
        %1148 = vst.msk [vmem:[#allocation3 + $0x48] sm:$0xff] %vm1138, %v1047
        %1149 = vst.msk [vmem:[#allocation3 + $0x50] sm:$0xff] %vm1138, %v1052
        %1150 = vst.msk [vmem:[#allocation3 + $0x58] sm:$0xff] %vm1138, %v1055
        %1151 = vst.msk [vmem:[#allocation3 + $0x60] sm:$0xff] %vm1138, %v1060
        %1152 = vst.msk [vmem:[#allocation3 + $0x68] sm:$0xff] %vm1138, %v1063
        %1153 = vst.msk [vmem:[#allocation3 + $0x70] sm:$0xff] %vm1138, %v1068
        %1154 = vst.msk [vmem:[#allocation3 + $0x78] sm:$0xff] %vm1138, %v1071
        %1155 = vst.msk [vmem:[#allocation3 + $0x80] sm:$0xff] %vm1138, %v1076
        %1156 = vst.msk [vmem:[#allocation3 + $0x88] sm:$0xff] %vm1138, %v1079
        %1157 = vst.msk [vmem:[#allocation3 + $0x90] sm:$0xff] %vm1138, %v1084
        %1158 = vst.msk [vmem:[#allocation3 + $0x98] sm:$0xff] %vm1138, %v1087
        %1159 = vst.msk [vmem:[#allocation3 + $0xa0] sm:$0xff] %vm1138, %v1092
        %1160 = vst.msk [vmem:[#allocation3 + $0xa8] sm:$0xff] %vm1138, %v1095
        %1161 = vst.msk [vmem:[#allocation3 + $0xb0] sm:$0xff] %vm1138, %v1100
        %1162 = vst.msk [vmem:[#allocation3 + $0xb8] sm:$0xff] %vm1138, %v1103
        %1163 = vst.msk [vmem:[#allocation3 + $0xc0] sm:$0xff] %vm1138, %v1108
        %1164 = vst.msk [vmem:[#allocation3 + $0xc8] sm:$0xff] %vm1138, %v1111
        %1165 = vst.msk [vmem:[#allocation3 + $0xd0] sm:$0xff] %vm1138, %v1116
        %1166 = vst.msk [vmem:[#allocation3 + $0xd8] sm:$0xff] %vm1138, %v1119
        %1167 = vst.msk [vmem:[#allocation3 + $0xe0] sm:$0xff] %vm1138, %v1124
        %1168 = vst.msk [vmem:[#allocation3 + $0xe8] sm:$0xff] %vm1138, %v1127
        %1169 = vst.msk [vmem:[#allocation3 + $0xf0] sm:$0xff] %vm1138, %v1132
        %1170 = vst.msk [vmem:[#allocation3 + $0xf8] sm:$0xff] %vm1138, %v1135
        %s1171 = sadd.s32 %s893, 1
        %s1172 = smul.addr %s1171, 8
        %s1173 = scalar_lea.vmem [#allocation2], %s1172
        %v1174 = vld [vmem:[%s1173] sm:$0xff]
        %v1175 = vld [vmem:[%s1173 + $0x8] sm:$0xff]
        %v1176 = vld [vmem:[%s1173 + $0x10] sm:$0xff]
        %v1177 = vld [vmem:[%s1173 + $0x18] sm:$0xff]
        %v1178 = vld [vmem:[%s1173 + $0x20] sm:$0xff]
        %v1179 = vld [vmem:[%s1173 + $0x28] sm:$0xff]
        %v1180 = vld [vmem:[%s1173 + $0x30] sm:$0xff]
        %v1181 = vld [vmem:[%s1173 + $0x38] sm:$0xff]
        %v1182 = vld [vmem:[%s1173 + $0x40] sm:$0xff]
        %v1183 = vld [vmem:[%s1173 + $0x48] sm:$0xff]
        %v1184 = vld [vmem:[%s1173 + $0x50] sm:$0xff]
        %v1185 = vld [vmem:[%s1173 + $0x58] sm:$0xff]
        %v1186 = vld [vmem:[%s1173 + $0x60] sm:$0xff]
        %v1187 = vld [vmem:[%s1173 + $0x68] sm:$0xff]
        %v1188 = vld [vmem:[%s1173 + $0x70] sm:$0xff]
        %v1189 = vld [vmem:[%s1173 + $0x78] sm:$0xff]
        %s1190 = scalar_lea.vmem %s2, 12
        %v1191 = vld [vmem:[%s1190] sm:$0xf]
        %v1192 = vld [vmem:[%s1190 + $0x4] sm:$0xf]
        %v1193 = vld [vmem:[%s1190 + $0x8] sm:$0xf]
        %v1197 = vunpack.c.l.b16 %v1191
        %v1198 = vunpack.c.l.b16 %v1192
        %v1199 = vunpack.c.l.b16 %v1193
        %v1200 = vpack.c.b16 %v1198, %v1197
        %v1201 = vpack.c.b16 %v1199, %v1199
        %v1204 = vsel %vm924, %v1174, 0
        %v1207 = vsel %vm924, %v1175, 0
        %v1210 = vsel %vm924, %v1176, 0
        %v1213 = vsel %vm924, %v1177, 0
        %v1216 = vsel %vm924, %v1178, 0
        %v1219 = vsel %vm924, %v1179, 0
        %v1222 = vsel %vm924, %v1180, 0
        %v1225 = vsel %vm924, %v1181, 0
        %v1228 = vsel %vm924, %v1182, 0
        %v1231 = vsel %vm924, %v1183, 0
        %v1234 = vsel %vm924, %v1184, 0
        %v1237 = vsel %vm924, %v1185, 0
        %v1240 = vsel %vm924, %v1186, 0
        %v1243 = vsel %vm924, %v1187, 0
        %v1246 = vsel %vm924, %v1188, 0
        %v1249 = vsel %vm924, %v1189, 0
        %v1252 = vsel %vm973, %v1201, 0
        %1254 = vmatprep.subr.bf16.mxu0 0
        %1255 = vmatpush1.bf16.msra.mxu0 %v1200
        %1256 = vmatprep.subr.bf16.mxu0 0
        %1257 = vmatpush1.bf16.msra.mxu0 %v1252
        %1258 = vmatprep.subr.bf16.mxu0 0
        %1259 = vmatpush1.bf16.msra.mxu0 0
        %1260 = vmatprep.subr.bf16.mxu0 0
        %1261 = vmatpush1.bf16.msra.mxu0 0
        %1262 = vmatprep.subr.bf16.mxu0 0
        %1263 = vmatpush1.bf16.msra.mxu0 0
        %1264 = vmatprep.subr.bf16.mxu0 0
        %1265 = vmatpush1.bf16.msra.mxu0 0
        %1266 = vmatprep.subr.bf16.mxu0 0
        %1267 = vmatpush1.bf16.msra.mxu0 0
        %1268 = vmatprep.subr.bf16.mxu0 0
        %1269 = vmatpush1.bf16.msra.mxu0 0
        %1270 = vmatprep.subr.bf16.mxu0 0
        %1271 = vmatpush1.bf16.msra.mxu0 0
        %1272 = vmatprep.subr.bf16.mxu0 0
        %1273 = vmatpush1.bf16.msra.mxu0 0
        %1274 = vmatprep.subr.bf16.mxu0 0
        %1275 = vmatpush1.bf16.msra.mxu0 0
        %1276 = vmatprep.subr.bf16.mxu0 0
        %1277 = vmatpush1.bf16.msra.mxu0 0
        %1278 = vmatprep.subr.bf16.mxu0 0
        %1279 = vmatpush1.bf16.msra.mxu0 0
        %1280 = vmatprep.subr.bf16.mxu0 0
        %1281 = vmatpush1.bf16.msra.mxu0 0
        %1282 = vmatprep.subr.bf16.mxu0 0
        %1283 = vmatpush1.bf16.msra.mxu0 0
        %1284 = vmatprep.subr.bf16.mxu0 0
        %1285 = vmatpush1.bf16.msra.mxu0 0
        %1286 = vmatprep.mubr.bf16.mxu0 0
        %1287 = vmatmul.mubr.bf16.gmra.mrb[0].mxu0 %v1204
        %v1288 = vpop.f32.mrb[0].mxu0
        %v1289 = vadd.f32 0.0, %v1288
        %v1290 = vpop.f32.mrb[0].mxu0
        %v1291 = vpop.f32.mrb[0].mxu0
        %v1292 = vadd.f32 0.0, %v1291
        %v1293 = vpop.f32.mrb[0].mxu0
        %1294 = vmatprep.mubr.bf16.mxu0 0
        %1295 = vmatmul.mubr.bf16.gmra.mrb[0].mxu0 %v1207
        %v1296 = vpop.f32.mrb[0].mxu0
        %v1297 = vadd.f32 0.0, %v1296
        %v1298 = vpop.f32.mrb[0].mxu0
        %v1299 = vpop.f32.mrb[0].mxu0
        %v1300 = vadd.f32 0.0, %v1299
        %v1301 = vpop.f32.mrb[0].mxu0
        %1302 = vmatprep.mubr.bf16.mxu0 0
        %1303 = vmatmul.mubr.bf16.gmra.mrb[0].mxu0 %v1210
        %v1304 = vpop.f32.mrb[0].mxu0
        %v1305 = vadd.f32 0.0, %v1304
        %v1306 = vpop.f32.mrb[0].mxu0
        %v1307 = vpop.f32.mrb[0].mxu0
        %v1308 = vadd.f32 0.0, %v1307
        %v1309 = vpop.f32.mrb[0].mxu0
        %1310 = vmatprep.mubr.bf16.mxu0 0
        %1311 = vmatmul.mubr.bf16.gmra.mrb[0].mxu0 %v1213
        %v1312 = vpop.f32.mrb[0].mxu0
        %v1313 = vadd.f32 0.0, %v1312
        %v1314 = vpop.f32.mrb[0].mxu0
        %v1315 = vpop.f32.mrb[0].mxu0
        %v1316 = vadd.f32 0.0, %v1315
        %v1317 = vpop.f32.mrb[0].mxu0
        %1318 = vmatprep.mubr.bf16.mxu0 0
        %1319 = vmatmul.mubr.bf16.gmra.mrb[0].mxu0 %v1216
        %v1320 = vpop.f32.mrb[0].mxu0
        %v1321 = vadd.f32 0.0, %v1320
        %v1322 = vpop.f32.mrb[0].mxu0
        %v1323 = vpop.f32.mrb[0].mxu0
        %v1324 = vadd.f32 0.0, %v1323
        %v1325 = vpop.f32.mrb[0].mxu0
        %1326 = vmatprep.mubr.bf16.mxu0 0
        %1327 = vmatmul.mubr.bf16.gmra.mrb[0].mxu0 %v1219
        %v1328 = vpop.f32.mrb[0].mxu0
        %v1329 = vadd.f32 0.0, %v1328
        %v1330 = vpop.f32.mrb[0].mxu0
        %v1331 = vpop.f32.mrb[0].mxu0
        %v1332 = vadd.f32 0.0, %v1331
        %v1333 = vpop.f32.mrb[0].mxu0
        %1334 = vmatprep.mubr.bf16.mxu0 0
        %1335 = vmatmul.mubr.bf16.gmra.mrb[0].mxu0 %v1222
        %v1336 = vpop.f32.mrb[0].mxu0
        %v1337 = vadd.f32 0.0, %v1336
        %v1338 = vpop.f32.mrb[0].mxu0
        %v1339 = vpop.f32.mrb[0].mxu0
        %v1340 = vadd.f32 0.0, %v1339
        %v1341 = vpop.f32.mrb[0].mxu0
        %1342 = vmatprep.mubr.bf16.mxu0 0
        %1343 = vmatmul.mubr.bf16.gmra.mrb[0].mxu0 %v1225
        %v1344 = vpop.f32.mrb[0].mxu0
        %v1345 = vadd.f32 0.0, %v1344
        %v1346 = vpop.f32.mrb[0].mxu0
        %v1347 = vpop.f32.mrb[0].mxu0
        %v1348 = vadd.f32 0.0, %v1347
        %v1349 = vpop.f32.mrb[0].mxu0
        %1350 = vmatprep.mubr.bf16.mxu0 0
        %1351 = vmatmul.mubr.bf16.gmra.mrb[0].mxu0 %v1228
        %v1352 = vpop.f32.mrb[0].mxu0
        %v1353 = vadd.f32 0.0, %v1352
        %v1354 = vpop.f32.mrb[0].mxu0
        %v1355 = vpop.f32.mrb[0].mxu0
        %v1356 = vadd.f32 0.0, %v1355
        %v1357 = vpop.f32.mrb[0].mxu0
        %1358 = vmatprep.mubr.bf16.mxu0 0
        %1359 = vmatmul.mubr.bf16.gmra.mrb[0].mxu0 %v1231
        %v1360 = vpop.f32.mrb[0].mxu0
        %v1361 = vadd.f32 0.0, %v1360
        %v1362 = vpop.f32.mrb[0].mxu0
        %v1363 = vpop.f32.mrb[0].mxu0
        %v1364 = vadd.f32 0.0, %v1363
        %v1365 = vpop.f32.mrb[0].mxu0
        %1366 = vmatprep.mubr.bf16.mxu0 0
        %1367 = vmatmul.mubr.bf16.gmra.mrb[0].mxu0 %v1234
        %v1368 = vpop.f32.mrb[0].mxu0
        %v1369 = vadd.f32 0.0, %v1368
        %v1370 = vpop.f32.mrb[0].mxu0
        %v1371 = vpop.f32.mrb[0].mxu0
        %v1372 = vadd.f32 0.0, %v1371
        %v1373 = vpop.f32.mrb[0].mxu0
        %1374 = vmatprep.mubr.bf16.mxu0 0
        %1375 = vmatmul.mubr.bf16.gmra.mrb[0].mxu0 %v1237
        %v1376 = vpop.f32.mrb[0].mxu0
        %v1377 = vadd.f32 0.0, %v1376
        %v1378 = vpop.f32.mrb[0].mxu0
        %v1379 = vpop.f32.mrb[0].mxu0
        %v1380 = vadd.f32 0.0, %v1379
        %v1381 = vpop.f32.mrb[0].mxu0
        %1382 = vmatprep.mubr.bf16.mxu0 0
        %1383 = vmatmul.mubr.bf16.gmra.mrb[0].mxu0 %v1240
        %v1384 = vpop.f32.mrb[0].mxu0
        %v1385 = vadd.f32 0.0, %v1384
        %v1386 = vpop.f32.mrb[0].mxu0
        %v1387 = vpop.f32.mrb[0].mxu0
        %v1388 = vadd.f32 0.0, %v1387
        %v1389 = vpop.f32.mrb[0].mxu0
        %1390 = vmatprep.mubr.bf16.mxu0 0
        %1391 = vmatmul.mubr.bf16.gmra.mrb[0].mxu0 %v1243
        %v1392 = vpop.f32.mrb[0].mxu0
        %v1393 = vadd.f32 0.0, %v1392
        %v1394 = vpop.f32.mrb[0].mxu0
        %v1395 = vpop.f32.mrb[0].mxu0
        %v1396 = vadd.f32 0.0, %v1395
        %v1397 = vpop.f32.mrb[0].mxu0
        %1398 = vmatprep.mubr.bf16.mxu0 0
        %1399 = vmatmul.mubr.bf16.gmra.mrb[0].mxu0 %v1246
        %v1400 = vpop.f32.mrb[0].mxu0
        %v1401 = vadd.f32 0.0, %v1400
        %v1402 = vpop.f32.mrb[0].mxu0
        %v1403 = vpop.f32.mrb[0].mxu0
        %v1404 = vadd.f32 0.0, %v1403
        %v1405 = vpop.f32.mrb[0].mxu0
        %1406 = vmatprep.mubr.bf16.mxu0 0
        %1407 = vmatmul.mubr.bf16.gmra.mrb[0].mxu0 %v1249
        %v1408 = vpop.f32.mrb[0].mxu0
        %v1409 = vadd.f32 0.0, %v1408
        %v1410 = vpop.f32.mrb[0].mxu0
        %v1411 = vpop.f32.mrb[0].mxu0
        %v1412 = vadd.f32 0.0, %v1411
        %v1413 = vpop.f32.mrb[0].mxu0
        %1414 = vdwg.mxu0
        %v1415 = vld [vmem:[#allocation3] sm:$0xff]
        %v1416 = vld [vmem:[#allocation3 + $0x8] sm:$0xff]
        %v1417 = vld [vmem:[#allocation3 + $0x10] sm:$0xff]
        %v1418 = vld [vmem:[#allocation3 + $0x18] sm:$0xff]
        %v1419 = vld [vmem:[#allocation3 + $0x20] sm:$0xff]
        %v1420 = vld [vmem:[#allocation3 + $0x28] sm:$0xff]
        %v1421 = vld [vmem:[#allocation3 + $0x30] sm:$0xff]
        %v1422 = vld [vmem:[#allocation3 + $0x38] sm:$0xff]
        %v1423 = vld [vmem:[#allocation3 + $0x40] sm:$0xff]
        %v1424 = vld [vmem:[#allocation3 + $0x48] sm:$0xff]
        %v1425 = vld [vmem:[#allocation3 + $0x50] sm:$0xff]
        %v1426 = vld [vmem:[#allocation3 + $0x58] sm:$0xff]
        %v1427 = vld [vmem:[#allocation3 + $0x60] sm:$0xff]
        %v1428 = vld [vmem:[#allocation3 + $0x68] sm:$0xff]
        %v1429 = vld [vmem:[#allocation3 + $0x70] sm:$0xff]
        %v1430 = vld [vmem:[#allocation3 + $0x78] sm:$0xff]
        %v1431 = vld [vmem:[#allocation3 + $0x80] sm:$0xff]
        %v1432 = vld [vmem:[#allocation3 + $0x88] sm:$0xff]
        %v1433 = vld [vmem:[#allocation3 + $0x90] sm:$0xff]
        %v1434 = vld [vmem:[#allocation3 + $0x98] sm:$0xff]
        %v1435 = vld [vmem:[#allocation3 + $0xa0] sm:$0xff]
        %v1436 = vld [vmem:[#allocation3 + $0xa8] sm:$0xff]
        %v1437 = vld [vmem:[#allocation3 + $0xb0] sm:$0xff]
        %v1438 = vld [vmem:[#allocation3 + $0xb8] sm:$0xff]
        %v1439 = vld [vmem:[#allocation3 + $0xc0] sm:$0xff]
        %v1440 = vld [vmem:[#allocation3 + $0xc8] sm:$0xff]
        %v1441 = vld [vmem:[#allocation3 + $0xd0] sm:$0xff]
        %v1442 = vld [vmem:[#allocation3 + $0xd8] sm:$0xff]
        %v1443 = vld [vmem:[#allocation3 + $0xe0] sm:$0xff]
        %v1444 = vld [vmem:[#allocation3 + $0xe8] sm:$0xff]
        %v1445 = vld [vmem:[#allocation3 + $0xf0] sm:$0xff]
        %v1446 = vld [vmem:[#allocation3 + $0xf8] sm:$0xff]
        %v1447 = vadd.f32 %v1415, %v1289
        %v1448 = vadd.f32 %v1416, %v1292
        %v1449 = vadd.f32 %v1417, %v1297
        %v1450 = vadd.f32 %v1418, %v1300
        %v1451 = vadd.f32 %v1419, %v1305
        %v1452 = vadd.f32 %v1420, %v1308
        %v1453 = vadd.f32 %v1421, %v1313
        %v1454 = vadd.f32 %v1422, %v1316
        %v1455 = vadd.f32 %v1423, %v1321
        %v1456 = vadd.f32 %v1424, %v1324
        %v1457 = vadd.f32 %v1425, %v1329
        %v1458 = vadd.f32 %v1426, %v1332
        %v1459 = vadd.f32 %v1427, %v1337
        %v1460 = vadd.f32 %v1428, %v1340
        %v1461 = vadd.f32 %v1429, %v1345
        %v1462 = vadd.f32 %v1430, %v1348
        %v1463 = vadd.f32 %v1431, %v1353
        %v1464 = vadd.f32 %v1432, %v1356
        %v1465 = vadd.f32 %v1433, %v1361
        %v1466 = vadd.f32 %v1434, %v1364
        %v1467 = vadd.f32 %v1435, %v1369
        %v1468 = vadd.f32 %v1436, %v1372
        %v1469 = vadd.f32 %v1437, %v1377
        %v1470 = vadd.f32 %v1438, %v1380
        %v1471 = vadd.f32 %v1439, %v1385
        %v1472 = vadd.f32 %v1440, %v1388
        %v1473 = vadd.f32 %v1441, %v1393
        %v1474 = vadd.f32 %v1442, %v1396
        %v1475 = vadd.f32 %v1443, %v1401
        %v1476 = vadd.f32 %v1444, %v1404
        %v1477 = vadd.f32 %v1445, %v1409
        %v1478 = vadd.f32 %v1446, %v1412
        %1479 = vst.msk [vmem:[#allocation3] sm:$0xff] %vm1138, %v1447
        %1480 = vst.msk [vmem:[#allocation3 + $0x8] sm:$0xff] %vm1138, %v1448
        %1481 = vst.msk [vmem:[#allocation3 + $0x10] sm:$0xff] %vm1138, %v1449
        %1482 = vst.msk [vmem:[#allocation3 + $0x18] sm:$0xff] %vm1138, %v1450
        %1483 = vst.msk [vmem:[#allocation3 + $0x20] sm:$0xff] %vm1138, %v1451
        %1484 = vst.msk [vmem:[#allocation3 + $0x28] sm:$0xff] %vm1138, %v1452
        %1485 = vst.msk [vmem:[#allocation3 + $0x30] sm:$0xff] %vm1138, %v1453
        %1486 = vst.msk [vmem:[#allocation3 + $0x38] sm:$0xff] %vm1138, %v1454
        %1487 = vst.msk [vmem:[#allocation3 + $0x40] sm:$0xff] %vm1138, %v1455
        %1488 = vst.msk [vmem:[#allocation3 + $0x48] sm:$0xff] %vm1138, %v1456
        %1489 = vst.msk [vmem:[#allocation3 + $0x50] sm:$0xff] %vm1138, %v1457
        %1490 = vst.msk [vmem:[#allocation3 + $0x58] sm:$0xff] %vm1138, %v1458
        %1491 = vst.msk [vmem:[#allocation3 + $0x60] sm:$0xff] %vm1138, %v1459
        %1492 = vst.msk [vmem:[#allocation3 + $0x68] sm:$0xff] %vm1138, %v1460
        %1493 = vst.msk [vmem:[#allocation3 + $0x70] sm:$0xff] %vm1138, %v1461
        %1494 = vst.msk [vmem:[#allocation3 + $0x78] sm:$0xff] %vm1138, %v1462
        %1495 = vst.msk [vmem:[#allocation3 + $0x80] sm:$0xff] %vm1138, %v1463
        %1496 = vst.msk [vmem:[#allocation3 + $0x88] sm:$0xff] %vm1138, %v1464
        %1497 = vst.msk [vmem:[#allocation3 + $0x90] sm:$0xff] %vm1138, %v1465
        %1498 = vst.msk [vmem:[#allocation3 + $0x98] sm:$0xff] %vm1138, %v1466
        %1499 = vst.msk [vmem:[#allocation3 + $0xa0] sm:$0xff] %vm1138, %v1467
        %1500 = vst.msk [vmem:[#allocation3 + $0xa8] sm:$0xff] %vm1138, %v1468
        %1501 = vst.msk [vmem:[#allocation3 + $0xb0] sm:$0xff] %vm1138, %v1469
        %1502 = vst.msk [vmem:[#allocation3 + $0xb8] sm:$0xff] %vm1138, %v1470
        %1503 = vst.msk [vmem:[#allocation3 + $0xc0] sm:$0xff] %vm1138, %v1471
        %1504 = vst.msk [vmem:[#allocation3 + $0xc8] sm:$0xff] %vm1138, %v1472
        %1505 = vst.msk [vmem:[#allocation3 + $0xd0] sm:$0xff] %vm1138, %v1473
        %1506 = vst.msk [vmem:[#allocation3 + $0xd8] sm:$0xff] %vm1138, %v1474
        %1507 = vst.msk [vmem:[#allocation3 + $0xe0] sm:$0xff] %vm1138, %v1475
        %1508 = vst.msk [vmem:[#allocation3 + $0xe8] sm:$0xff] %vm1138, %v1476
        %1509 = vst.msk [vmem:[#allocation3 + $0xf0] sm:$0xff] %vm1138, %v1477
        %1510 = vst.msk [vmem:[#allocation3 + $0xf8] sm:$0xff] %vm1138, %v1478
        %s1511 = sadd.s32 %s893, 2
        %s1512 = smul.addr %s1511, 8
        %s1513 = scalar_lea.vmem [#allocation2], %s1512
        %v1514 = vld [vmem:[%s1513] sm:$0xff]
        %v1515 = vld [vmem:[%s1513 + $0x8] sm:$0xff]
        %v1516 = vld [vmem:[%s1513 + $0x10] sm:$0xff]
        %v1517 = vld [vmem:[%s1513 + $0x18] sm:$0xff]
        %v1518 = vld [vmem:[%s1513 + $0x20] sm:$0xff]
        %v1519 = vld [vmem:[%s1513 + $0x28] sm:$0xff]
        %v1520 = vld [vmem:[%s1513 + $0x30] sm:$0xff]
        %v1521 = vld [vmem:[%s1513 + $0x38] sm:$0xff]
        %v1522 = vld [vmem:[%s1513 + $0x40] sm:$0xff]
        %v1523 = vld [vmem:[%s1513 + $0x48] sm:$0xff]
        %v1524 = vld [vmem:[%s1513 + $0x50] sm:$0xff]
        %v1525 = vld [vmem:[%s1513 + $0x58] sm:$0xff]
        %v1526 = vld [vmem:[%s1513 + $0x60] sm:$0xff]
        %v1527 = vld [vmem:[%s1513 + $0x68] sm:$0xff]
        %v1528 = vld [vmem:[%s1513 + $0x70] sm:$0xff]
        %v1529 = vld [vmem:[%s1513 + $0x78] sm:$0xff]
        %s1530 = scalar_lea.vmem %s2, 24
        %v1531 = vld [vmem:[%s1530] sm:$0xf]
        %v1532 = vld [vmem:[%s1530 + $0x4] sm:$0xf]
        %v1533 = vld [vmem:[%s1530 + $0x8] sm:$0xf]
        %v1537 = vunpack.c.l.b16 %v1531
        %v1538 = vunpack.c.l.b16 %v1532
        %v1539 = vunpack.c.l.b16 %v1533
        %v1540 = vpack.c.b16 %v1538, %v1537
        %v1541 = vpack.c.b16 %v1539, %v1539
        %v1544 = vsel %vm924, %v1514, 0
        %v1547 = vsel %vm924, %v1515, 0
        %v1550 = vsel %vm924, %v1516, 0
        %v1553 = vsel %vm924, %v1517, 0
        %v1556 = vsel %vm924, %v1518, 0
        %v1559 = vsel %vm924, %v1519, 0
        %v1562 = vsel %vm924, %v1520, 0
        %v1565 = vsel %vm924, %v1521, 0
        %v1568 = vsel %vm924, %v1522, 0
        %v1571 = vsel %vm924, %v1523, 0
        %v1574 = vsel %vm924, %v1524, 0
        %v1577 = vsel %vm924, %v1525, 0
        %v1580 = vsel %vm924, %v1526, 0
        %v1583 = vsel %vm924, %v1527, 0
        %v1586 = vsel %vm924, %v1528, 0
        %v1589 = vsel %vm924, %v1529, 0
        %v1592 = vsel %vm973, %v1541, 0
        %1594 = vmatprep.subr.bf16.mxu0 0
        %1595 = vmatpush1.bf16.msra.mxu0 %v1540
        %1596 = vmatprep.subr.bf16.mxu0 0
        %1597 = vmatpush1.bf16.msra.mxu0 %v1592
        %1598 = vmatprep.subr.bf16.mxu0 0
        %1599 = vmatpush1.bf16.msra.mxu0 0
        %1600 = vmatprep.subr.bf16.mxu0 0
        %1601 = vmatpush1.bf16.msra.mxu0 0
        %1602 = vmatprep.subr.bf16.mxu0 0
        %1603 = vmatpush1.bf16.msra.mxu0 0
        %1604 = vmatprep.subr.bf16.mxu0 0
        %1605 = vmatpush1.bf16.msra.mxu0 0
        %1606 = vmatprep.subr.bf16.mxu0 0
        %1607 = vmatpush1.bf16.msra.mxu0 0
        %1608 = vmatprep.subr.bf16.mxu0 0
        %1609 = vmatpush1.bf16.msra.mxu0 0
        %1610 = vmatprep.subr.bf16.mxu0 0
        %1611 = vmatpush1.bf16.msra.mxu0 0
        %1612 = vmatprep.subr.bf16.mxu0 0
        %1613 = vmatpush1.bf16.msra.mxu0 0
        %1614 = vmatprep.subr.bf16.mxu0 0
        %1615 = vmatpush1.bf16.msra.mxu0 0
        %1616 = vmatprep.subr.bf16.mxu0 0
        %1617 = vmatpush1.bf16.msra.mxu0 0
        %1618 = vmatprep.subr.bf16.mxu0 0
        %1619 = vmatpush1.bf16.msra.mxu0 0
        %1620 = vmatprep.subr.bf16.mxu0 0
        %1621 = vmatpush1.bf16.msra.mxu0 0
        %1622 = vmatprep.subr.bf16.mxu0 0
        %1623 = vmatpush1.bf16.msra.mxu0 0
        %1624 = vmatprep.subr.bf16.mxu0 0
        %1625 = vmatpush1.bf16.msra.mxu0 0
        %1626 = vmatprep.mubr.bf16.mxu0 0
        %1627 = vmatmul.mubr.bf16.gmra.mrb[0].mxu0 %v1544
        %v1628 = vpop.f32.mrb[0].mxu0
        %v1629 = vadd.f32 0.0, %v1628
        %v1630 = vpop.f32.mrb[0].mxu0
        %v1631 = vpop.f32.mrb[0].mxu0
        %v1632 = vadd.f32 0.0, %v1631
        %v1633 = vpop.f32.mrb[0].mxu0
        %1634 = vmatprep.mubr.bf16.mxu0 0
        %1635 = vmatmul.mubr.bf16.gmra.mrb[0].mxu0 %v1547
        %v1636 = vpop.f32.mrb[0].mxu0
        %v1637 = vadd.f32 0.0, %v1636
        %v1638 = vpop.f32.mrb[0].mxu0
        %v1639 = vpop.f32.mrb[0].mxu0
        %v1640 = vadd.f32 0.0, %v1639
        %v1641 = vpop.f32.mrb[0].mxu0
        %1642 = vmatprep.mubr.bf16.mxu0 0
        %1643 = vmatmul.mubr.bf16.gmra.mrb[0].mxu0 %v1550
        %v1644 = vpop.f32.mrb[0].mxu0
        %v1645 = vadd.f32 0.0, %v1644
        %v1646 = vpop.f32.mrb[0].mxu0
        %v1647 = vpop.f32.mrb[0].mxu0
        %v1648 = vadd.f32 0.0, %v1647
        %v1649 = vpop.f32.mrb[0].mxu0
        %1650 = vmatprep.mubr.bf16.mxu0 0
        %1651 = vmatmul.mubr.bf16.gmra.mrb[0].mxu0 %v1553
        %v1652 = vpop.f32.mrb[0].mxu0
        %v1653 = vadd.f32 0.0, %v1652
        %v1654 = vpop.f32.mrb[0].mxu0
        %v1655 = vpop.f32.mrb[0].mxu0
        %v1656 = vadd.f32 0.0, %v1655
        %v1657 = vpop.f32.mrb[0].mxu0
        %1658 = vmatprep.mubr.bf16.mxu0 0
        %1659 = vmatmul.mubr.bf16.gmra.mrb[0].mxu0 %v1556
        %v1660 = vpop.f32.mrb[0].mxu0
        %v1661 = vadd.f32 0.0, %v1660
        %v1662 = vpop.f32.mrb[0].mxu0
        %v1663 = vpop.f32.mrb[0].mxu0
        %v1664 = vadd.f32 0.0, %v1663
        %v1665 = vpop.f32.mrb[0].mxu0
        %1666 = vmatprep.mubr.bf16.mxu0 0
        %1667 = vmatmul.mubr.bf16.gmra.mrb[0].mxu0 %v1559
        %v1668 = vpop.f32.mrb[0].mxu0
        %v1669 = vadd.f32 0.0, %v1668
        %v1670 = vpop.f32.mrb[0].mxu0
        %v1671 = vpop.f32.mrb[0].mxu0
        %v1672 = vadd.f32 0.0, %v1671
        %v1673 = vpop.f32.mrb[0].mxu0
        %1674 = vmatprep.mubr.bf16.mxu0 0
        %1675 = vmatmul.mubr.bf16.gmra.mrb[0].mxu0 %v1562
        %v1676 = vpop.f32.mrb[0].mxu0
        %v1677 = vadd.f32 0.0, %v1676
        %v1678 = vpop.f32.mrb[0].mxu0
        %v1679 = vpop.f32.mrb[0].mxu0
        %v1680 = vadd.f32 0.0, %v1679
        %v1681 = vpop.f32.mrb[0].mxu0
        %1682 = vmatprep.mubr.bf16.mxu0 0
        %1683 = vmatmul.mubr.bf16.gmra.mrb[0].mxu0 %v1565
        %v1684 = vpop.f32.mrb[0].mxu0
        %v1685 = vadd.f32 0.0, %v1684
        %v1686 = vpop.f32.mrb[0].mxu0
        %v1687 = vpop.f32.mrb[0].mxu0
        %v1688 = vadd.f32 0.0, %v1687
        %v1689 = vpop.f32.mrb[0].mxu0
        %1690 = vmatprep.mubr.bf16.mxu0 0
        %1691 = vmatmul.mubr.bf16.gmra.mrb[0].mxu0 %v1568
        %v1692 = vpop.f32.mrb[0].mxu0
        %v1693 = vadd.f32 0.0, %v1692
        %v1694 = vpop.f32.mrb[0].mxu0
        %v1695 = vpop.f32.mrb[0].mxu0
        %v1696 = vadd.f32 0.0, %v1695
        %v1697 = vpop.f32.mrb[0].mxu0
        %1698 = vmatprep.mubr.bf16.mxu0 0
        %1699 = vmatmul.mubr.bf16.gmra.mrb[0].mxu0 %v1571
        %v1700 = vpop.f32.mrb[0].mxu0
        %v1701 = vadd.f32 0.0, %v1700
        %v1702 = vpop.f32.mrb[0].mxu0
        %v1703 = vpop.f32.mrb[0].mxu0
        %v1704 = vadd.f32 0.0, %v1703
        %v1705 = vpop.f32.mrb[0].mxu0
        %1706 = vmatprep.mubr.bf16.mxu0 0
        %1707 = vmatmul.mubr.bf16.gmra.mrb[0].mxu0 %v1574
        %v1708 = vpop.f32.mrb[0].mxu0
        %v1709 = vadd.f32 0.0, %v1708
        %v1710 = vpop.f32.mrb[0].mxu0
        %v1711 = vpop.f32.mrb[0].mxu0
        %v1712 = vadd.f32 0.0, %v1711
        %v1713 = vpop.f32.mrb[0].mxu0
        %1714 = vmatprep.mubr.bf16.mxu0 0
        %1715 = vmatmul.mubr.bf16.gmra.mrb[0].mxu0 %v1577
        %v1716 = vpop.f32.mrb[0].mxu0
        %v1717 = vadd.f32 0.0, %v1716
        %v1718 = vpop.f32.mrb[0].mxu0
        %v1719 = vpop.f32.mrb[0].mxu0
        %v1720 = vadd.f32 0.0, %v1719
        %v1721 = vpop.f32.mrb[0].mxu0
        %1722 = vmatprep.mubr.bf16.mxu0 0
        %1723 = vmatmul.mubr.bf16.gmra.mrb[0].mxu0 %v1580
        %v1724 = vpop.f32.mrb[0].mxu0
        %v1725 = vadd.f32 0.0, %v1724
        %v1726 = vpop.f32.mrb[0].mxu0
        %v1727 = vpop.f32.mrb[0].mxu0
        %v1728 = vadd.f32 0.0, %v1727
        %v1729 = vpop.f32.mrb[0].mxu0
        %1730 = vmatprep.mubr.bf16.mxu0 0
        %1731 = vmatmul.mubr.bf16.gmra.mrb[0].mxu0 %v1583
        %v1732 = vpop.f32.mrb[0].mxu0
        %v1733 = vadd.f32 0.0, %v1732
        %v1734 = vpop.f32.mrb[0].mxu0
        %v1735 = vpop.f32.mrb[0].mxu0
        %v1736 = vadd.f32 0.0, %v1735
        %v1737 = vpop.f32.mrb[0].mxu0
        %1738 = vmatprep.mubr.bf16.mxu0 0
        %1739 = vmatmul.mubr.bf16.gmra.mrb[0].mxu0 %v1586
        %v1740 = vpop.f32.mrb[0].mxu0
        %v1741 = vadd.f32 0.0, %v1740
        %v1742 = vpop.f32.mrb[0].mxu0
        %v1743 = vpop.f32.mrb[0].mxu0
        %v1744 = vadd.f32 0.0, %v1743
        %v1745 = vpop.f32.mrb[0].mxu0
        %1746 = vmatprep.mubr.bf16.mxu0 0
        %1747 = vmatmul.mubr.bf16.gmra.mrb[0].mxu0 %v1589
        %v1748 = vpop.f32.mrb[0].mxu0
        %v1749 = vadd.f32 0.0, %v1748
        %v1750 = vpop.f32.mrb[0].mxu0
        %v1751 = vpop.f32.mrb[0].mxu0
        %v1752 = vadd.f32 0.0, %v1751
        %v1753 = vpop.f32.mrb[0].mxu0
        %1754 = vdwg.mxu0
        %v1755 = vld [vmem:[#allocation3] sm:$0xff]
        %v1756 = vld [vmem:[#allocation3 + $0x8] sm:$0xff]
        %v1757 = vld [vmem:[#allocation3 + $0x10] sm:$0xff]
        %v1758 = vld [vmem:[#allocation3 + $0x18] sm:$0xff]
        %v1759 = vld [vmem:[#allocation3 + $0x20] sm:$0xff]
        %v1760 = vld [vmem:[#allocation3 + $0x28] sm:$0xff]
        %v1761 = vld [vmem:[#allocation3 + $0x30] sm:$0xff]
        %v1762 = vld [vmem:[#allocation3 + $0x38] sm:$0xff]
        %v1763 = vld [vmem:[#allocation3 + $0x40] sm:$0xff]
        %v1764 = vld [vmem:[#allocation3 + $0x48] sm:$0xff]
        %v1765 = vld [vmem:[#allocation3 + $0x50] sm:$0xff]
        %v1766 = vld [vmem:[#allocation3 + $0x58] sm:$0xff]
        %v1767 = vld [vmem:[#allocation3 + $0x60] sm:$0xff]
        %v1768 = vld [vmem:[#allocation3 + $0x68] sm:$0xff]
        %v1769 = vld [vmem:[#allocation3 + $0x70] sm:$0xff]
        %v1770 = vld [vmem:[#allocation3 + $0x78] sm:$0xff]
        %v1771 = vld [vmem:[#allocation3 + $0x80] sm:$0xff]
        %v1772 = vld [vmem:[#allocation3 + $0x88] sm:$0xff]
        %v1773 = vld [vmem:[#allocation3 + $0x90] sm:$0xff]
        %v1774 = vld [vmem:[#allocation3 + $0x98] sm:$0xff]
        %v1775 = vld [vmem:[#allocation3 + $0xa0] sm:$0xff]
        %v1776 = vld [vmem:[#allocation3 + $0xa8] sm:$0xff]
        %v1777 = vld [vmem:[#allocation3 + $0xb0] sm:$0xff]
        %v1778 = vld [vmem:[#allocation3 + $0xb8] sm:$0xff]
        %v1779 = vld [vmem:[#allocation3 + $0xc0] sm:$0xff]
        %v1780 = vld [vmem:[#allocation3 + $0xc8] sm:$0xff]
        %v1781 = vld [vmem:[#allocation3 + $0xd0] sm:$0xff]
        %v1782 = vld [vmem:[#allocation3 + $0xd8] sm:$0xff]
        %v1783 = vld [vmem:[#allocation3 + $0xe0] sm:$0xff]
        %v1784 = vld [vmem:[#allocation3 + $0xe8] sm:$0xff]
        %v1785 = vld [vmem:[#allocation3 + $0xf0] sm:$0xff]
        %v1786 = vld [vmem:[#allocation3 + $0xf8] sm:$0xff]
        %v1787 = vadd.f32 %v1755, %v1629
        %v1788 = vadd.f32 %v1756, %v1632
        %v1789 = vadd.f32 %v1757, %v1637
        %v1790 = vadd.f32 %v1758, %v1640
        %v1791 = vadd.f32 %v1759, %v1645
        %v1792 = vadd.f32 %v1760, %v1648
        %v1793 = vadd.f32 %v1761, %v1653
        %v1794 = vadd.f32 %v1762, %v1656
        %v1795 = vadd.f32 %v1763, %v1661
        %v1796 = vadd.f32 %v1764, %v1664
        %v1797 = vadd.f32 %v1765, %v1669
        %v1798 = vadd.f32 %v1766, %v1672
        %v1799 = vadd.f32 %v1767, %v1677
        %v1800 = vadd.f32 %v1768, %v1680
        %v1801 = vadd.f32 %v1769, %v1685
        %v1802 = vadd.f32 %v1770, %v1688
        %v1803 = vadd.f32 %v1771, %v1693
        %v1804 = vadd.f32 %v1772, %v1696
        %v1805 = vadd.f32 %v1773, %v1701
        %v1806 = vadd.f32 %v1774, %v1704
        %v1807 = vadd.f32 %v1775, %v1709
        %v1808 = vadd.f32 %v1776, %v1712
        %v1809 = vadd.f32 %v1777, %v1717
        %v1810 = vadd.f32 %v1778, %v1720
        %v1811 = vadd.f32 %v1779, %v1725
        %v1812 = vadd.f32 %v1780, %v1728
        %v1813 = vadd.f32 %v1781, %v1733
        %v1814 = vadd.f32 %v1782, %v1736
        %v1815 = vadd.f32 %v1783, %v1741
        %v1816 = vadd.f32 %v1784, %v1744
        %v1817 = vadd.f32 %v1785, %v1749
        %v1818 = vadd.f32 %v1786, %v1752
        %1819 = vst.msk [vmem:[#allocation3] sm:$0xff] %vm1138, %v1787
        %1820 = vst.msk [vmem:[#allocation3 + $0x8] sm:$0xff] %vm1138, %v1788
        %1821 = vst.msk [vmem:[#allocation3 + $0x10] sm:$0xff] %vm1138, %v1789
        %1822 = vst.msk [vmem:[#allocation3 + $0x18] sm:$0xff] %vm1138, %v1790
        %1823 = vst.msk [vmem:[#allocation3 + $0x20] sm:$0xff] %vm1138, %v1791
        %1824 = vst.msk [vmem:[#allocation3 + $0x28] sm:$0xff] %vm1138, %v1792
        %1825 = vst.msk [vmem:[#allocation3 + $0x30] sm:$0xff] %vm1138, %v1793
        %1826 = vst.msk [vmem:[#allocation3 + $0x38] sm:$0xff] %vm1138, %v1794
        %1827 = vst.msk [vmem:[#allocation3 + $0x40] sm:$0xff] %vm1138, %v1795
        %1828 = vst.msk [vmem:[#allocation3 + $0x48] sm:$0xff] %vm1138, %v1796
        %1829 = vst.msk [vmem:[#allocation3 + $0x50] sm:$0xff] %vm1138, %v1797
        %1830 = vst.msk [vmem:[#allocation3 + $0x58] sm:$0xff] %vm1138, %v1798
        %1831 = vst.msk [vmem:[#allocation3 + $0x60] sm:$0xff] %vm1138, %v1799
        %1832 = vst.msk [vmem:[#allocation3 + $0x68] sm:$0xff] %vm1138, %v1800
        %1833 = vst.msk [vmem:[#allocation3 + $0x70] sm:$0xff] %vm1138, %v1801
        %1834 = vst.msk [vmem:[#allocation3 + $0x78] sm:$0xff] %vm1138, %v1802
        %1835 = vst.msk [vmem:[#allocation3 + $0x80] sm:$0xff] %vm1138, %v1803
        %1836 = vst.msk [vmem:[#allocation3 + $0x88] sm:$0xff] %vm1138, %v1804
        %1837 = vst.msk [vmem:[#allocation3 + $0x90] sm:$0xff] %vm1138, %v1805
        %1838 = vst.msk [vmem:[#allocation3 + $0x98] sm:$0xff] %vm1138, %v1806
        %1839 = vst.msk [vmem:[#allocation3 + $0xa0] sm:$0xff] %vm1138, %v1807
        %1840 = vst.msk [vmem:[#allocation3 + $0xa8] sm:$0xff] %vm1138, %v1808
        %1841 = vst.msk [vmem:[#allocation3 + $0xb0] sm:$0xff] %vm1138, %v1809
        %1842 = vst.msk [vmem:[#allocation3 + $0xb8] sm:$0xff] %vm1138, %v1810
        %1843 = vst.msk [vmem:[#allocation3 + $0xc0] sm:$0xff] %vm1138, %v1811
        %1844 = vst.msk [vmem:[#allocation3 + $0xc8] sm:$0xff] %vm1138, %v1812
        %1845 = vst.msk [vmem:[#allocation3 + $0xd0] sm:$0xff] %vm1138, %v1813
        %1846 = vst.msk [vmem:[#allocation3 + $0xd8] sm:$0xff] %vm1138, %v1814
        %1847 = vst.msk [vmem:[#allocation3 + $0xe0] sm:$0xff] %vm1138, %v1815
        %1848 = vst.msk [vmem:[#allocation3 + $0xe8] sm:$0xff] %vm1138, %v1816
        %1849 = vst.msk [vmem:[#allocation3 + $0xf0] sm:$0xff] %vm1138, %v1817
        %1850 = vst.msk [vmem:[#allocation3 + $0xf8] sm:$0xff] %vm1138, %v1818
        %v1851 = vld [vmem:[#allocation3] sm:$0xff]
        %v1852 = vld [vmem:[#allocation3 + $0x8] sm:$0xff]
        %v1853 = vld [vmem:[#allocation3 + $0x10] sm:$0xff]
        %v1854 = vld [vmem:[#allocation3 + $0x18] sm:$0xff]
        %v1855 = vld [vmem:[#allocation3 + $0x20] sm:$0xff]
        %v1856 = vld [vmem:[#allocation3 + $0x28] sm:$0xff]
        %v1857 = vld [vmem:[#allocation3 + $0x30] sm:$0xff]
        %v1858 = vld [vmem:[#allocation3 + $0x38] sm:$0xff]
        %v1859 = vld [vmem:[#allocation3 + $0x40] sm:$0xff]
        %v1860 = vld [vmem:[#allocation3 + $0x48] sm:$0xff]
        %v1861 = vld [vmem:[#allocation3 + $0x50] sm:$0xff]
        %v1862 = vld [vmem:[#allocation3 + $0x58] sm:$0xff]
        %v1863 = vld [vmem:[#allocation3 + $0x60] sm:$0xff]
        %v1864 = vld [vmem:[#allocation3 + $0x68] sm:$0xff]
        %v1865 = vld [vmem:[#allocation3 + $0x70] sm:$0xff]
        %v1866 = vld [vmem:[#allocation3 + $0x78] sm:$0xff]
        %v1867 = vld [vmem:[#allocation3 + $0x80] sm:$0xff]
        %v1868 = vld [vmem:[#allocation3 + $0x88] sm:$0xff]
        %v1869 = vld [vmem:[#allocation3 + $0x90] sm:$0xff]
        %v1870 = vld [vmem:[#allocation3 + $0x98] sm:$0xff]
        %v1871 = vld [vmem:[#allocation3 + $0xa0] sm:$0xff]
        %v1872 = vld [vmem:[#allocation3 + $0xa8] sm:$0xff]
        %v1873 = vld [vmem:[#allocation3 + $0xb0] sm:$0xff]
        %v1874 = vld [vmem:[#allocation3 + $0xb8] sm:$0xff]
        %v1875 = vld [vmem:[#allocation3 + $0xc0] sm:$0xff]
        %v1876 = vld [vmem:[#allocation3 + $0xc8] sm:$0xff]
        %v1877 = vld [vmem:[#allocation3 + $0xd0] sm:$0xff]
        %v1878 = vld [vmem:[#allocation3 + $0xd8] sm:$0xff]
        %v1879 = vld [vmem:[#allocation3 + $0xe0] sm:$0xff]
        %v1880 = vld [vmem:[#allocation3 + $0xe8] sm:$0xff]
        %v1881 = vld [vmem:[#allocation3 + $0xf0] sm:$0xff]
        %v1882 = vld [vmem:[#allocation3 + $0xf8] sm:$0xff]
        %v1883 = vpack.c.bf16 %v1852, %v1851
        %v1884 = vpack.c.bf16 %v1854, %v1853
        %v1885 = vpack.c.bf16 %v1856, %v1855
        %v1886 = vpack.c.bf16 %v1858, %v1857
        %v1887 = vpack.c.bf16 %v1860, %v1859
        %v1888 = vpack.c.bf16 %v1862, %v1861
        %v1889 = vpack.c.bf16 %v1864, %v1863
        %v1890 = vpack.c.bf16 %v1866, %v1865
        %v1891 = vpack.c.bf16 %v1868, %v1867
        %v1892 = vpack.c.bf16 %v1870, %v1869
        %v1893 = vpack.c.bf16 %v1872, %v1871
        %v1894 = vpack.c.bf16 %v1874, %v1873
        %v1895 = vpack.c.bf16 %v1876, %v1875
        %v1896 = vpack.c.bf16 %v1878, %v1877
        %v1897 = vpack.c.bf16 %v1880, %v1879
        %v1898 = vpack.c.bf16 %v1882, %v1881
        %v1915 = vunpack.c.l.b16 %v1883
        %v1916 = vunpack.c.h.b16 %v1883
        %v1917 = vunpack.c.l.b16 %v1884
        %v1918 = vunpack.c.h.b16 %v1884
        %v1919 = vunpack.c.l.b16 %v1885
        %v1920 = vunpack.c.h.b16 %v1885
        %v1921 = vunpack.c.l.b16 %v1886
        %v1922 = vunpack.c.h.b16 %v1886
        %v1923 = vunpack.c.l.b16 %v1887
        %v1924 = vunpack.c.h.b16 %v1887
        %v1925 = vunpack.c.l.b16 %v1888
        %v1926 = vunpack.c.h.b16 %v1888
        %v1927 = vunpack.c.l.b16 %v1889
        %v1928 = vunpack.c.h.b16 %v1889
        %v1929 = vunpack.c.l.b16 %v1890
        %v1930 = vunpack.c.h.b16 %v1890
        %v1931 = vunpack.c.l.b16 %v1891
        %v1932 = vunpack.c.h.b16 %v1891
        %v1933 = vunpack.c.l.b16 %v1892
        %v1934 = vunpack.c.h.b16 %v1892
        %v1935 = vunpack.c.l.b16 %v1893
        %v1936 = vunpack.c.h.b16 %v1893
        %v1937 = vunpack.c.l.b16 %v1894
        %v1938 = vunpack.c.h.b16 %v1894
        %v1939 = vunpack.c.l.b16 %v1895
        %v1940 = vunpack.c.h.b16 %v1895
        %v1941 = vunpack.c.l.b16 %v1896
        %v1942 = vunpack.c.h.b16 %v1896
        %v1943 = vunpack.c.l.b16 %v1897
        %v1944 = vunpack.c.h.b16 %v1897
        %v1945 = vunpack.c.l.b16 %v1898
        %v1946 = vunpack.c.h.b16 %v1898
        %v1947 = vpack.c.b16 %v1915, %v1915
        %v1948 = vpack.c.b16 %v1916, %v1916
        %v1949 = vpack.c.b16 %v1917, %v1917
        %v1950 = vpack.c.b16 %v1918, %v1918
        %v1951 = vpack.c.b16 %v1919, %v1919
        %v1952 = vpack.c.b16 %v1920, %v1920
        %v1953 = vpack.c.b16 %v1921, %v1921
        %v1954 = vpack.c.b16 %v1922, %v1922
        %v1955 = vpack.c.b16 %v1923, %v1923
        %v1956 = vpack.c.b16 %v1924, %v1924
        %v1957 = vpack.c.b16 %v1925, %v1925
        %v1958 = vpack.c.b16 %v1926, %v1926
        %v1959 = vpack.c.b16 %v1927, %v1927
        %v1960 = vpack.c.b16 %v1928, %v1928
        %v1961 = vpack.c.b16 %v1929, %v1929
        %v1962 = vpack.c.b16 %v1930, %v1930
        %v1963 = vpack.c.b16 %v1931, %v1931
        %v1964 = vpack.c.b16 %v1932, %v1932
        %v1965 = vpack.c.b16 %v1933, %v1933
        %v1966 = vpack.c.b16 %v1934, %v1934
        %v1967 = vpack.c.b16 %v1935, %v1935
        %v1968 = vpack.c.b16 %v1936, %v1936
        %v1969 = vpack.c.b16 %v1937, %v1937
        %v1970 = vpack.c.b16 %v1938, %v1938
        %v1971 = vpack.c.b16 %v1939, %v1939
        %v1972 = vpack.c.b16 %v1940, %v1940
        %v1973 = vpack.c.b16 %v1941, %v1941
        %v1974 = vpack.c.b16 %v1942, %v1942
        %v1975 = vpack.c.b16 %v1943, %v1943
        %v1976 = vpack.c.b16 %v1944, %v1944
        %v1977 = vpack.c.b16 %v1945, %v1945
        %v1978 = vpack.c.b16 %v1946, %v1946
        %vm2011 = vcmask 60416
        %2012 = vst.msk [vmem:[%s209] sm:$0xf] %vm2011, %v1947
        %2013 = vst.msk [vmem:[%s209 + $0x4] sm:$0xf] %vm2011, %v1948
        %2014 = vst.msk [vmem:[%s209 + $0x8] sm:$0xf] %vm2011, %v1949
        %2015 = vst.msk [vmem:[%s209 + $0xc] sm:$0xf] %vm2011, %v1950
        %2016 = vst.msk [vmem:[%s209 + $0x10] sm:$0xf] %vm2011, %v1951
        %2017 = vst.msk [vmem:[%s209 + $0x14] sm:$0xf] %vm2011, %v1952
        %2018 = vst.msk [vmem:[%s209 + $0x18] sm:$0xf] %vm2011, %v1953
        %2019 = vst.msk [vmem:[%s209 + $0x1c] sm:$0xf] %vm2011, %v1954
        %2020 = vst.msk [vmem:[%s209 + $0x20] sm:$0xf] %vm2011, %v1955
        %2021 = vst.msk [vmem:[%s209 + $0x24] sm:$0xf] %vm2011, %v1956
        %2022 = vst.msk [vmem:[%s209 + $0x28] sm:$0xf] %vm2011, %v1957
        %2023 = vst.msk [vmem:[%s209 + $0x2c] sm:$0xf] %vm2011, %v1958
        %2024 = vst.msk [vmem:[%s209 + $0x30] sm:$0xf] %vm2011, %v1959
        %2025 = vst.msk [vmem:[%s209 + $0x34] sm:$0xf] %vm2011, %v1960
        %2026 = vst.msk [vmem:[%s209 + $0x38] sm:$0xf] %vm2011, %v1961
        %2027 = vst.msk [vmem:[%s209 + $0x3c] sm:$0xf] %vm2011, %v1962
        %2028 = vst.msk [vmem:[%s209 + $0x40] sm:$0xf] %vm2011, %v1963
        %2029 = vst.msk [vmem:[%s209 + $0x44] sm:$0xf] %vm2011, %v1964
        %2030 = vst.msk [vmem:[%s209 + $0x48] sm:$0xf] %vm2011, %v1965
        %2031 = vst.msk [vmem:[%s209 + $0x4c] sm:$0xf] %vm2011, %v1966
        %2032 = vst.msk [vmem:[%s209 + $0x50] sm:$0xf] %vm2011, %v1967
        %2033 = vst.msk [vmem:[%s209 + $0x54] sm:$0xf] %vm2011, %v1968
        %2034 = vst.msk [vmem:[%s209 + $0x58] sm:$0xf] %vm2011, %v1969
        %2035 = vst.msk [vmem:[%s209 + $0x5c] sm:$0xf] %vm2011, %v1970
        %2036 = vst.msk [vmem:[%s209 + $0x60] sm:$0xf] %vm2011, %v1971
        %2037 = vst.msk [vmem:[%s209 + $0x64] sm:$0xf] %vm2011, %v1972
        %2038 = vst.msk [vmem:[%s209 + $0x68] sm:$0xf] %vm2011, %v1973
        %2039 = vst.msk [vmem:[%s209 + $0x6c] sm:$0xf] %vm2011, %v1974
        %2040 = vst.msk [vmem:[%s209 + $0x70] sm:$0xf] %vm2011, %v1975
        %2041 = vst.msk [vmem:[%s209 + $0x74] sm:$0xf] %vm2011, %v1976
        %2042 = vst.msk [vmem:[%s209 + $0x78] sm:$0xf] %vm2011, %v1977
        %2043 = vst.msk [vmem:[%s209 + $0x7c] sm:$0xf] %vm2011, %v1978
        %v2044 = vsel %vm1138, %v1851, 0.0
        %v2045 = vsel %vm1138, %v1852, 0.0
        %v2046 = vadd.f32 %v2044, %v2045
        %v2047 = vsel %vm1138, %v1853, 0.0
        %v2048 = vadd.f32 %v2046, %v2047
        %v2049 = vsel %vm1138, %v1854, 0.0
        %v2050 = vadd.f32 %v2048, %v2049
        %v2051 = vsel %vm1138, %v1855, 0.0
        %v2052 = vadd.f32 %v2050, %v2051
        %v2053 = vsel %vm1138, %v1856, 0.0
        %v2054 = vadd.f32 %v2052, %v2053
        %v2055 = vsel %vm1138, %v1857, 0.0
        %v2056 = vadd.f32 %v2054, %v2055
        %v2057 = vsel %vm1138, %v1858, 0.0
        %v2058 = vadd.f32 %v2056, %v2057
        %v2059 = vsel %vm1138, %v1859, 0.0
        %v2060 = vadd.f32 %v2058, %v2059
        %v2061 = vsel %vm1138, %v1860, 0.0
        %v2062 = vadd.f32 %v2060, %v2061
        %v2063 = vsel %vm1138, %v1861, 0.0
        %v2064 = vadd.f32 %v2062, %v2063
        %v2065 = vsel %vm1138, %v1862, 0.0
        %v2066 = vadd.f32 %v2064, %v2065
        %v2067 = vsel %vm1138, %v1863, 0.0
        %v2068 = vadd.f32 %v2066, %v2067
        %v2069 = vsel %vm1138, %v1864, 0.0
        %v2070 = vadd.f32 %v2068, %v2069
        %v2071 = vsel %vm1138, %v1865, 0.0
        %v2072 = vadd.f32 %v2070, %v2071
        %v2073 = vsel %vm1138, %v1866, 0.0
        %v2074 = vadd.f32 %v2072, %v2073
        %v2075 = vsel %vm1138, %v1867, 0.0
        %v2076 = vadd.f32 %v2074, %v2075
        %v2077 = vsel %vm1138, %v1868, 0.0
        %v2078 = vadd.f32 %v2076, %v2077
        %v2079 = vsel %vm1138, %v1869, 0.0
        %v2080 = vadd.f32 %v2078, %v2079
        %v2081 = vsel %vm1138, %v1870, 0.0
        %v2082 = vadd.f32 %v2080, %v2081
        %v2083 = vsel %vm1138, %v1871, 0.0
        %v2084 = vadd.f32 %v2082, %v2083
        %v2085 = vsel %vm1138, %v1872, 0.0
        %v2086 = vadd.f32 %v2084, %v2085
        %v2087 = vsel %vm1138, %v1873, 0.0
        %v2088 = vadd.f32 %v2086, %v2087
        %v2089 = vsel %vm1138, %v1874, 0.0
        %v2090 = vadd.f32 %v2088, %v2089
        %v2091 = vsel %vm1138, %v1875, 0.0
        %v2092 = vadd.f32 %v2090, %v2091
        %v2093 = vsel %vm1138, %v1876, 0.0
        %v2094 = vadd.f32 %v2092, %v2093
        %v2095 = vsel %vm1138, %v1877, 0.0
        %v2096 = vadd.f32 %v2094, %v2095
        %v2097 = vsel %vm1138, %v1878, 0.0
        %v2098 = vadd.f32 %v2096, %v2097
        %v2099 = vsel %vm1138, %v1879, 0.0
        %v2100 = vadd.f32 %v2098, %v2099
        %v2101 = vsel %vm1138, %v1880, 0.0
        %v2102 = vadd.f32 %v2100, %v2101
        %v2103 = vsel %vm1138, %v1881, 0.0
        %v2104 = vadd.f32 %v2102, %v2103
        %v2105 = vsel %vm1138, %v1882, 0.0
        %v2106 = vadd.f32 %v2104, %v2105
        %v2107 = vrot.slane %v2106, 4
        %v2108 = vadd.f32 %v2106, %v2107
        %v2109 = vrot.slane %v2108, 2
        %v2110 = vadd.f32 %v2108, %v2109
        %v2111 = vrot.slane %v2110, 1
        %v2112 = vadd.f32 %v2110, %v2111
        %vm2113 = vcmask 57344
        %2114 = vst.msk [vmem:[%s194] sm:$0x1] %vm2113, %v2112
        %v2115 = vmul.f32 %v1851, %v1851
        %v2116 = vmul.f32 %v1852, %v1852
        %v2117 = vmul.f32 %v1853, %v1853
        %v2118 = vmul.f32 %v1854, %v1854
        %v2119 = vmul.f32 %v1855, %v1855
        %v2120 = vmul.f32 %v1856, %v1856
        %v2121 = vmul.f32 %v1857, %v1857
        %v2122 = vmul.f32 %v1858, %v1858
        %v2123 = vmul.f32 %v1859, %v1859
        %v2124 = vmul.f32 %v1860, %v1860
        %v2125 = vmul.f32 %v1861, %v1861
        %v2126 = vmul.f32 %v1862, %v1862
        %v2127 = vmul.f32 %v1863, %v1863
        %v2128 = vmul.f32 %v1864, %v1864
        %v2129 = vmul.f32 %v1865, %v1865
        %v2130 = vmul.f32 %v1866, %v1866
        %v2131 = vmul.f32 %v1867, %v1867
        %v2132 = vmul.f32 %v1868, %v1868
        %v2133 = vmul.f32 %v1869, %v1869
        %v2134 = vmul.f32 %v1870, %v1870
        %v2135 = vmul.f32 %v1871, %v1871
        %v2136 = vmul.f32 %v1872, %v1872
        %v2137 = vmul.f32 %v1873, %v1873
        %v2138 = vmul.f32 %v1874, %v1874
        %v2139 = vmul.f32 %v1875, %v1875
        %v2140 = vmul.f32 %v1876, %v1876
        %v2141 = vmul.f32 %v1877, %v1877
        %v2142 = vmul.f32 %v1878, %v1878
        %v2143 = vmul.f32 %v1879, %v1879
        %v2144 = vmul.f32 %v1880, %v1880
        %v2145 = vmul.f32 %v1881, %v1881
        %v2146 = vmul.f32 %v1882, %v1882
        %v2147 = vsel %vm1138, %v2115, 0.0
        %v2148 = vsel %vm1138, %v2116, 0.0
        %v2149 = vadd.f32 %v2147, %v2148
        %v2150 = vsel %vm1138, %v2117, 0.0
        %v2151 = vadd.f32 %v2149, %v2150
        %v2152 = vsel %vm1138, %v2118, 0.0
        %v2153 = vadd.f32 %v2151, %v2152
        %v2154 = vsel %vm1138, %v2119, 0.0
        %v2155 = vadd.f32 %v2153, %v2154
        %v2156 = vsel %vm1138, %v2120, 0.0
        %v2157 = vadd.f32 %v2155, %v2156
        %v2158 = vsel %vm1138, %v2121, 0.0
        %v2159 = vadd.f32 %v2157, %v2158
        %v2160 = vsel %vm1138, %v2122, 0.0
        %v2161 = vadd.f32 %v2159, %v2160
        %v2162 = vsel %vm1138, %v2123, 0.0
        %v2163 = vadd.f32 %v2161, %v2162
        %v2164 = vsel %vm1138, %v2124, 0.0
        %v2165 = vadd.f32 %v2163, %v2164
        %v2166 = vsel %vm1138, %v2125, 0.0
        %v2167 = vadd.f32 %v2165, %v2166
        %v2168 = vsel %vm1138, %v2126, 0.0
        %v2169 = vadd.f32 %v2167, %v2168
        %v2170 = vsel %vm1138, %v2127, 0.0
        %v2171 = vadd.f32 %v2169, %v2170
        %v2172 = vsel %vm1138, %v2128, 0.0
        %v2173 = vadd.f32 %v2171, %v2172
        %v2174 = vsel %vm1138, %v2129, 0.0
        %v2175 = vadd.f32 %v2173, %v2174
        %v2176 = vsel %vm1138, %v2130, 0.0
        %v2177 = vadd.f32 %v2175, %v2176
        %v2178 = vsel %vm1138, %v2131, 0.0
        %v2179 = vadd.f32 %v2177, %v2178
        %v2180 = vsel %vm1138, %v2132, 0.0
        %v2181 = vadd.f32 %v2179, %v2180
        %v2182 = vsel %vm1138, %v2133, 0.0
        %v2183 = vadd.f32 %v2181, %v2182
        %v2184 = vsel %vm1138, %v2134, 0.0
        %v2185 = vadd.f32 %v2183, %v2184
        %v2186 = vsel %vm1138, %v2135, 0.0
        %v2187 = vadd.f32 %v2185, %v2186
        %v2188 = vsel %vm1138, %v2136, 0.0
        %v2189 = vadd.f32 %v2187, %v2188
        %v2190 = vsel %vm1138, %v2137, 0.0
        %v2191 = vadd.f32 %v2189, %v2190
        %v2192 = vsel %vm1138, %v2138, 0.0
        %v2193 = vadd.f32 %v2191, %v2192
        %v2194 = vsel %vm1138, %v2139, 0.0
        %v2195 = vadd.f32 %v2193, %v2194
        %v2196 = vsel %vm1138, %v2140, 0.0
        %v2197 = vadd.f32 %v2195, %v2196
        %v2198 = vsel %vm1138, %v2141, 0.0
        %v2199 = vadd.f32 %v2197, %v2198
        %v2200 = vsel %vm1138, %v2142, 0.0
        %v2201 = vadd.f32 %v2199, %v2200
        %v2202 = vsel %vm1138, %v2143, 0.0
        %v2203 = vadd.f32 %v2201, %v2202
        %v2204 = vsel %vm1138, %v2144, 0.0
        %v2205 = vadd.f32 %v2203, %v2204
        %v2206 = vsel %vm1138, %v2145, 0.0
        %v2207 = vadd.f32 %v2205, %v2206
        %v2208 = vsel %vm1138, %v2146, 0.0
        %v2209 = vadd.f32 %v2207, %v2208
        %v2210 = vrot.slane %v2209, 4
        %v2211 = vadd.f32 %v2209, %v2210
        %v2212 = vrot.slane %v2211, 2
        %v2213 = vadd.f32 %v2211, %v2212
        %v2214 = vrot.slane %v2213, 1
        %v2215 = vadd.f32 %v2213, %v2214
        %2216 = vst.msk [vmem:[%s194 + $0x1] sm:$0x1] %vm2113, %v2215
        %s2217 = smul.u32 16, %s25
        %p2218 = scmp.lt.s32.totalorder %s24, 1
        %s2219 = scalar_select %p2218, %s24, 1
        %p2220 = scmp.lt.s32.totalorder %s2217, 15
        %s2221 = scalar_select %p2220, %s2217, 15
        %s2222 = smul.addr %s2221, 2
        %s2223 = smul.addr %s2219, 32
        %s2224 = sadd.s32 %s2222, %s2223
        %s2225 = smul.addr %s2224, 4
        %s2226 = scalar_lea.vmem %s3, %s2225
        %s2227 = sand.u32 %s117, 1
        %s2228 = scalar_lea.sflag [#allocation7], %s2227
        %s2229 = sand.u32 %s117, 1
        %s2230 = smul.addr %s2229, 2
        %s2231 = scalar_lea.vmem [#allocation6], %s2230
        // Predicated region
        $region33: #{tpu_custom_call.1} parent=27 // pred_check
          %p2232 = pneg %p99
        $region34: #{tpu_custom_call.1} parent=27 // pred_check_branch
          %2234 = sbr.rel (%p2232) target = $region36
        $region35: #{tpu_custom_call.1} parent=27 // pred_region
          %s2235 = smul.u32 16, %s25
        $region36: #{tpu_custom_call.1} parent=27 // pred_fallthru
          _
        // Predicated region
        $region37: #{tpu_custom_call.1} parent=27 // pred_check
          %p2236 = pneg %p127
        $region38: #{tpu_custom_call.1} parent=27 // pred_check_branch
          %2238 = sbr.rel (%p2236) target = $region40
        $region39: #{tpu_custom_call.1} parent=27 // pred_region
          %s2240 = ssub.s32 32, 32
          %2241 = vsyncadd %s2228, %s2240
          %s2242 = sadd.s32 %s25, %s24
          %s2243 = smul.addr %s2242, 32
          %s2244 = scalar_lea.hbm %s4, %s2243
          %s2246 = sshll.u32 %s2231, 4
          %s2247 = int_to_ptr.vmem [resolvable:$true] %s2246
          %2249 = dma.vmem_to_hbm [thread:$0]  %s2247, 32, %s2244, %s2228
        $region40: #{tpu_custom_call.1} parent=27 // pred_fallthru
          _
      $region28: #{tpu_custom_call.1} parent=5 // pred_fallthru
        _
      %p2250 = scmp.le.s32.totalorder 2, %s15
      // Predicated region
      $region41: #{tpu_custom_call.1} parent=5 // pred_check
        %p2251 = pneg %p2250
      $region42: #{tpu_custom_call.1} parent=5 // pred_check_branch
        %2253 = sbr.rel (%p2251) target = $region44
      $region43: #{tpu_custom_call.1} parent=5 // pred_region
        %s2254 = ssub.s32 %s15, 2
        // Predicated region
        $region45: #{tpu_custom_call.1} parent=43 // pred_check
          %p2255 = pneg %p105
        $region46: #{tpu_custom_call.1} parent=43 // pred_check_branch
          %2257 = sbr.rel (%p2255) target = $region48
        $region47: #{tpu_custom_call.1} parent=43 // pred_region
          %s2258 = smul.u32 16, %s27
          %p2259 = scmp.lt.s32.totalorder %s26, 1
          %s2260 = scalar_select %p2259, %s26, 1
          %p2261 = scmp.lt.s32.totalorder %s2258, 15
          %s2262 = scalar_select %p2261, %s2258, 15
          %s2263 = smul.addr %s2262, 2
          %s2264 = smul.addr %s2260, 32
          %s2265 = sadd.s32 %s2263, %s2264
          %s2266 = smul.addr %s2265, 4
          %s2267 = scalar_lea.vmem %s3, %s2266
        $region48: #{tpu_custom_call.1} parent=43 // pred_fallthru
          _
        // Predicated region
        $region49: #{tpu_custom_call.1} parent=43 // pred_check
          %p2268 = pneg %p133
        $region50: #{tpu_custom_call.1} parent=43 // pred_check_branch
          %2270 = sbr.rel (%p2268) target = $region52
        $region51: #{tpu_custom_call.1} parent=43 // pred_region
          %s2271 = sand.u32 %s118, 1
          %s2272 = scalar_lea.sflag [#allocation7], %s2271
          %s2273 = sand.u32 %s118, 1
          %s2274 = smul.addr %s2273, 2
          %s2275 = scalar_lea.vmem [#allocation6], %s2274
          %2276 = dma.done %s2272, 32
        $region52: #{tpu_custom_call.1} parent=43 // pred_fallthru
          _
      $region44: #{tpu_custom_call.1} parent=5 // pred_fallthru
        _
    $region6: #{tpu_custom_call.1} parent=1 // loop_footer
      %s19 = sadd.s32 1, %s15
    $region7: #{tpu_custom_call.1} parent=1 // loop_footer_branch
      %14 = sbr.rel target = $region3
    $region8: #{tpu_custom_call.1} parent=1 // loop_exit
      _
    %2277 = vsyncpa [#allocation7], 1
    %s2278 = scalar_lea.sflag [#allocation7], 1
    %2279 = vsyncpa %s2278, 1

// kernel: tpu_custom_call.1
$region0: #{tpu_custom_call.1}
  #allocation0 [shape = 'u32[]', space=smem, size = 0x4, offset = 0x4, fixed_abs, tag = 'smem constant byte address 0x4 - core index']
  #allocation1 [shape = 'u32[144,128]{1,0:T(1,128)}', space=vmem, size = 0x12000, scoped, tag = 'internal scratch']
  #allocation2 [shape = 'bf16[18,16,24]{2,1,0:T(16,128)(2,1)}', space=vmem, size = 0x12000, scoped, tag = 'scratch operand']
  #allocation3 [shape = 'f32[16,16,8]{2,1,0:T(8,128)}', space=vmem, size = 0x20000, scoped, tag = 'scratch operand']
  #allocation4 [shape = 's32[1]{0}', space=sflag, size = 0x4, scoped, tag = 'scoped memory for tpu_custom_call.1']
  #allocation5 [shape = 's32[1]{0:T(128)S(6)}', space=smem, size = 0x200, scoped, tag = 'prefetched SMEM operand 0']
  %s0 = inlined_call_operand.<no memory space> [shape: s32[1], index: 0, kind: input, shape index: {}]
  %s1 = inlined_call_operand.vmem [shape: f32[2,16,16,8], index: 1, kind: input, shape index: {}]
  %s2 = inlined_call_operand.vmem [shape: bf16[3,24,8], index: 2, kind: input, shape index: {}]
  %s3 = inlined_call_operand.vmem [shape: bf16[2,16,16,8], index: 3, kind: output, shape index: {0}]
  %s4 = inlined_call_operand.hbm [shape: f32[2,1,2,8], index: 4, kind: output, shape index: {1}]
  %5 = xla_tuple %s3, %s4
  %s6 = sld [smem:[#allocation0]]
  $region53: #{tpu_custom_call.1} parent=0
    _
  %s8 = ssub.s32 1, %s6
  %s9 = scalar_select 0, %s8, %s6
  %10 = sst [smem:[#allocation5]] %s0
  $region1: #{tpu_custom_call.1} parent=0
    #allocation6 [shape = 'u8[2048]{0}', space=vmem, size = 0x800, scoped, tag = 'output window, operand 1']
    #allocation7 [shape = 's32[2]{0}', space=sflag, size = 0x8, scoped, tag = 'scoped memory for tpu_custom_call.1']
    %11 = vsyncpa [#allocation7], 0
    %s12 = scalar_lea.sflag [#allocation7], 1
    %13 = vsyncpa %s12, 0
    loop: start=0, step=1, limit=4
    $region2: #{tpu_custom_call.1} parent=1 // loop_pre_header
      _
    $region3: #{tpu_custom_call.1} parent=1 // loop_header
      %s15 = sphi 0, %s19
      %p16 = scmp.ge.s32.totalorder %s15, 4
      %s22 = sphi 0, %s34
      %s23 = sphi 0, %s30
      %s24 = sphi 0, %s22
      %s25 = sphi 0, %s23
      %s26 = sphi 0, %s24
      %s27 = sphi 0, %s25
      %s37 = sphi 0, %s39
      %s40 = sphi 0, %s37
      %s41 = sphi 0, %s40
      %s57 = sphi 0, %s41
      %s61 = sphi 0, %s61
      %s63 = sphi 0, %s61
      %s64 = sphi 0, %s63
      %s78 = sphi 0, %s64
      %s86 = sphi 0, %s88
      %s89 = sphi 0, %s86
      %s90 = sphi 0, %s89
      %s106 = sphi 0, %s90
      %s114 = sphi 0, %s116
      %s117 = sphi 0, %s114
      %s118 = sphi 0, %s117
      %s134 = sphi 0, %s118
    $region4: #{tpu_custom_call.1} parent=1 // loop_header_branch
      %18 = sbr.rel (%p16) target = $region8
    $region5: #{tpu_custom_call.1} parent=1 // loop_body
      %s20 = ssub.s32 %s15, 1
      %s21 = ssub.s32 %s15, 2
      %s28 = sadd.s32 1, %s23
      %p29 = scmp.ge.s32.totalorder %s28, 1
      %s30 = scalar_select %p29, 0, %s28
      %s31 = sadd.s32 1, %s22
      %s32 = scalar_select %p29, %s31, %s22
      %p33 = scmp.ge.s32.totalorder %s32, 2
      %s34 = scalar_select %p33, 0, %s32
      %s35 = ssub.s32 %s22, %s34
      %p36 = scmp.eq.s32.totalorder %s35, 0
      %s38 = sadd.s32 %s37, 1
      %s39 = scalar_select %p36, %s37, %s38
      %p42 = pneg %p36
      %p43 = scmp.eq.s32.totalorder %s15, 1
      %p44 = por %p42, %p43
      %p45 = scmp.ne.s32.totalorder %s37, %s40
      %p46 = scmp.eq.s32.totalorder %s15, 0
      %p47 = por %p45, %p46
      %p48 = scmp.ne.s32.totalorder %s37, %s40
      %p49 = scmp.eq.s32.totalorder %s20, 1
      %p50 = por %p48, %p49
      %p51 = scmp.ne.s32.totalorder %s40, %s41
      %p52 = scmp.eq.s32.totalorder %s20, 0
      %p53 = por %p51, %p52
      %p54 = scmp.ne.s32.totalorder %s40, %s41
      %p55 = scmp.eq.s32.totalorder %s21, 1
      %p56 = por %p54, %p55
      %p58 = scmp.ne.s32.totalorder %s41, %s57
      %p59 = scmp.eq.s32.totalorder %s21, 0
      %p60 = por %p58, %p59
      %s62 = sadd.s32 %s61, 1
      %p65 = scmp.eq.s32.totalorder %s15, 1
      %p66 = scmp.ne.s32.totalorder %s61, %s63
      %p67 = scmp.eq.s32.totalorder %s15, 0
      %p68 = por %p66, %p67
      %p69 = scmp.ne.s32.totalorder %s61, %s63
      %p70 = scmp.eq.s32.totalorder %s20, 1
      %p71 = por %p69, %p70
      %p72 = scmp.ne.s32.totalorder %s63, %s64
      %p73 = scmp.eq.s32.totalorder %s20, 0
      %p74 = por %p72, %p73
      %p75 = scmp.ne.s32.totalorder %s63, %s64
      %p76 = scmp.eq.s32.totalorder %s21, 1
      %p77 = por %p75, %p76
      %p79 = scmp.ne.s32.totalorder %s64, %s78
      %p80 = scmp.eq.s32.totalorder %s21, 0
      %p81 = por %p79, %p80
      %s82 = ssub.s32 %s22, %s34
      %s83 = ssub.s32 %s23, %s30
      %s84 = sor.u32 %s82, %s83
      %p85 = scmp.eq.s32.totalorder %s84, 0
      %s87 = sadd.s32 %s86, 1
      %s88 = scalar_select %p85, %s86, %s87
      %p91 = pneg %p85
      %p92 = scmp.eq.s32.totalorder %s15, 1
      %p93 = por %p91, %p92
      %p94 = scmp.ne.s32.totalorder %s86, %s89
      %p95 = scmp.eq.s32.totalorder %s15, 0
      %p96 = por %p94, %p95
      %p97 = scmp.ne.s32.totalorder %s86, %s89
      %p98 = scmp.eq.s32.totalorder %s20, 1
      %p99 = por %p97, %p98
      %p100 = scmp.ne.s32.totalorder %s89, %s90
      %p101 = scmp.eq.s32.totalorder %s20, 0
      %p102 = por %p100, %p101
      %p103 = scmp.ne.s32.totalorder %s89, %s90
      %p104 = scmp.eq.s32.totalorder %s21, 1
      %p105 = por %p103, %p104
      %p107 = scmp.ne.s32.totalorder %s90, %s106
      %p108 = scmp.eq.s32.totalorder %s21, 0
      %p109 = por %p107, %p108
      %s110 = ssub.s32 %s22, %s34
      %s111 = ssub.s32 %s23, %s30
      %s112 = sor.u32 %s110, %s111
      %p113 = scmp.eq.s32.totalorder %s112, 0
      %s115 = sadd.s32 %s114, 1
      %s116 = scalar_select %p113, %s114, %s115
      %p119 = pneg %p113
      %p120 = scmp.eq.s32.totalorder %s15, 1
      %p121 = por %p119, %p120
      %p122 = scmp.ne.s32.totalorder %s114, %s117
      %p123 = scmp.eq.s32.totalorder %s15, 0
      %p124 = por %p122, %p123
      %p125 = scmp.ne.s32.totalorder %s114, %s117
      %p126 = scmp.eq.s32.totalorder %s20, 1
      %p127 = por %p125, %p126
      %p128 = scmp.ne.s32.totalorder %s117, %s118
      %p129 = scmp.eq.s32.totalorder %s20, 0
      %p130 = por %p128, %p129
      %p131 = scmp.ne.s32.totalorder %s117, %s118
      %p132 = scmp.eq.s32.totalorder %s21, 1
      %p133 = por %p131, %p132
      %p135 = scmp.ne.s32.totalorder %s118, %s134
      %p136 = scmp.eq.s32.totalorder %s21, 0
      %p137 = por %p135, %p136
      %p138 = scmp.le.s32.totalorder 1, %s15
      %p139 = scmp.lt.s32.totalorder %s15, 3
      %p140 = pnand %p138, %p139
      %p141 = pneg %p140
      // Predicated region
      $region9: #{tpu_custom_call.1} parent=5 // pred_check
        _
      $region10: #{tpu_custom_call.1} parent=5 // pred_check_branch
        %143 = sbr.rel (%p140) target = $region12
      $region11: #{tpu_custom_call.1} parent=5 // pred_region
        %s144 = ssub.s32 %s15, 1
        // Predicated region
        $region13: #{tpu_custom_call.1} parent=11 // pred_check
          %p145 = pneg %p74
        $region14: #{tpu_custom_call.1} parent=11 // pred_check_branch
          %147 = sbr.rel (%p145) target = $region16
        $region15: #{tpu_custom_call.1} parent=11 // pred_region
          _
        $region16: #{tpu_custom_call.1} parent=11 // pred_fallthru
          _
      $region12: #{tpu_custom_call.1} parent=5 // pred_fallthru
        _
      %p148 = scmp.lt.s32.totalorder %s15, 2
      // Predicated region
      $region17: #{tpu_custom_call.1} parent=5 // pred_check
        %p149 = pneg %p148
      $region18: #{tpu_custom_call.1} parent=5 // pred_check_branch
        %151 = sbr.rel (%p149) target = $region20
      $region19: #{tpu_custom_call.1} parent=5 // pred_region
        // Predicated region
        $region21: #{tpu_custom_call.1} parent=19 // pred_check
          %p152 = pneg %p47
        $region22: #{tpu_custom_call.1} parent=19 // pred_check_branch
          %154 = sbr.rel (%p152) target = $region24
        $region23: #{tpu_custom_call.1} parent=19 // pred_region
          %p155 = scmp.lt.s32.totalorder %s22, 1
          %s156 = scalar_select %p155, %s22, 1
          %s157 = smul.addr %s156, 32
          %s158 = smul.addr %s157, 8
          %s159 = scalar_lea.vmem %s1, %s158
        $region24: #{tpu_custom_call.1} parent=19 // pred_fallthru
          _
      $region20: #{tpu_custom_call.1} parent=5 // pred_fallthru
        _
      %p160 = scmp.le.s32.totalorder 1, %s15
      %p161 = scmp.lt.s32.totalorder %s15, 3
      %p162 = pnand %p160, %p161
      %p163 = pneg %p162
      // Predicated region
      $region25: #{tpu_custom_call.1} parent=5 // pred_check
        _
      $region26: #{tpu_custom_call.1} parent=5 // pred_check_branch
        %165 = sbr.rel (%p162) target = $region28
      $region27: #{tpu_custom_call.1} parent=5 // pred_region
        %s166 = ssub.s32 %s15, 1
        %p167 = scmp.lt.s32.totalorder %s24, 1
        %s168 = scalar_select %p167, %s24, 1
        %s169 = smul.addr %s168, 32
        %s170 = smul.addr %s169, 8
        %s171 = scalar_lea.vmem %s1, %s170
        %p172 = pneg %p53
        %p173 = pneg %p50
        %p174 = pneg %p74
        %p175 = pneg %p71
        %p176 = pneg %p102
        %p177 = pneg %p99
        %s178 = smul.u32 16, %s25
        %p179 = scmp.lt.s32.totalorder %s24, 1
        %s180 = scalar_select %p179, %s24, 1
        %p181 = scmp.lt.s32.totalorder %s178, 15
        %s182 = scalar_select %p181, %s178, 15
        %s183 = smul.addr %s182, 2
        %s184 = smul.addr %s180, 32
        %s185 = sadd.s32 %s183, %s184
        %s186 = smul.addr %s185, 4
        %s187 = scalar_lea.vmem %s3, %s186
        %p188 = pneg %p130
        %p189 = pneg %p127
        %s190 = sand.u32 %s117, 1
        %s191 = scalar_lea.sflag [#allocation7], %s190
        %s192 = sand.u32 %s117, 1
        %s193 = smul.addr %s192, 2
        %s194 = scalar_lea.vmem [#allocation6], %s193
        %p195 = scmp.lt.s32.totalorder %s24, 1
        %s196 = scalar_select %p195, %s24, 1
        %s197 = smul.addr %s196, 32
        %s198 = smul.addr %s197, 8
        %s199 = scalar_lea.vmem %s1, %s198
        %s200 = smul.u32 16, %s25
        %p201 = scmp.lt.s32.totalorder %s24, 1
        %s202 = scalar_select %p201, %s24, 1
        %p203 = scmp.lt.s32.totalorder %s200, 15
        %s204 = scalar_select %p203, %s200, 15
        %s205 = smul.addr %s204, 2
        %s206 = smul.addr %s202, 32
        %s207 = sadd.s32 %s205, %s206
        %s208 = smul.addr %s207, 4
        %s209 = scalar_lea.vmem %s3, %s208
        %s210 = smul.u32 16, %s25
        %p212 = scmp.eq.s32.totalorder %s25, 0
        // Predicated region
        $region29: #{tpu_custom_call.1} parent=27 // pred_check
          %p213 = pneg %p212
        $region30: #{tpu_custom_call.1} parent=27 // pred_check_branch
          %215 = sbr.rel (%p213) target = $region32
        $region31: #{tpu_custom_call.1} parent=27 // pred_region
          %s216 = sld [smem:[#allocation5]]
          %s217 = scvt.s32.f32 %s216
          %v218 = vld [vmem:[%s199] sm:$0xff]
          %v219 = vld [vmem:[%s199 + $0x8] sm:$0xff]
          %v220 = vld [vmem:[%s199 + $0x10] sm:$0xff]
          %v221 = vld [vmem:[%s199 + $0x18] sm:$0xff]
          %v222 = vld [vmem:[%s199 + $0x20] sm:$0xff]
          %v223 = vld [vmem:[%s199 + $0x28] sm:$0xff]
          %v224 = vld [vmem:[%s199 + $0x30] sm:$0xff]
          %v225 = vld [vmem:[%s199 + $0x38] sm:$0xff]
          %v226 = vld [vmem:[%s199 + $0x40] sm:$0xff]
          %v227 = vld [vmem:[%s199 + $0x48] sm:$0xff]
          %v228 = vld [vmem:[%s199 + $0x50] sm:$0xff]
          %v229 = vld [vmem:[%s199 + $0x58] sm:$0xff]
          %v230 = vld [vmem:[%s199 + $0x60] sm:$0xff]
          %v231 = vld [vmem:[%s199 + $0x68] sm:$0xff]
          %v232 = vld [vmem:[%s199 + $0x70] sm:$0xff]
          %v233 = vld [vmem:[%s199 + $0x78] sm:$0xff]
          %v234 = vld [vmem:[%s199 + $0x80] sm:$0xff]
          %v235 = vld [vmem:[%s199 + $0x88] sm:$0xff]
          %v236 = vld [vmem:[%s199 + $0x90] sm:$0xff]
          %v237 = vld [vmem:[%s199 + $0x98] sm:$0xff]
          %v238 = vld [vmem:[%s199 + $0xa0] sm:$0xff]
          %v239 = vld [vmem:[%s199 + $0xa8] sm:$0xff]
          %v240 = vld [vmem:[%s199 + $0xb0] sm:$0xff]
          %v241 = vld [vmem:[%s199 + $0xb8] sm:$0xff]
          %v242 = vld [vmem:[%s199 + $0xc0] sm:$0xff]
          %v243 = vld [vmem:[%s199 + $0xc8] sm:$0xff]
          %v244 = vld [vmem:[%s199 + $0xd0] sm:$0xff]
          %v245 = vld [vmem:[%s199 + $0xd8] sm:$0xff]
          %v246 = vld [vmem:[%s199 + $0xe0] sm:$0xff]
          %v247 = vld [vmem:[%s199 + $0xe8] sm:$0xff]
          %v248 = vld [vmem:[%s199 + $0xf0] sm:$0xff]
          %v249 = vld [vmem:[%s199 + $0xf8] sm:$0xff]
          %vm250 = vcmp.gt.f32.partialorder %v218, 0.0
          %vm251 = vcmp.gt.f32.partialorder %v219, 0.0
          %vm252 = vcmp.gt.f32.partialorder %v220, 0.0
          %vm253 = vcmp.gt.f32.partialorder %v221, 0.0
          %vm254 = vcmp.gt.f32.partialorder %v222, 0.0
          %vm255 = vcmp.gt.f32.partialorder %v223, 0.0
          %vm256 = vcmp.gt.f32.partialorder %v224, 0.0
          %vm257 = vcmp.gt.f32.partialorder %v225, 0.0
          %vm258 = vcmp.gt.f32.partialorder %v226, 0.0
          %vm259 = vcmp.gt.f32.partialorder %v227, 0.0
          %vm260 = vcmp.gt.f32.partialorder %v228, 0.0
          %vm261 = vcmp.gt.f32.partialorder %v229, 0.0
          %vm262 = vcmp.gt.f32.partialorder %v230, 0.0
          %vm263 = vcmp.gt.f32.partialorder %v231, 0.0
          %vm264 = vcmp.gt.f32.partialorder %v232, 0.0
          %vm265 = vcmp.gt.f32.partialorder %v233, 0.0
          %vm266 = vcmp.gt.f32.partialorder %v234, 0.0
          %vm267 = vcmp.gt.f32.partialorder %v235, 0.0
          %vm268 = vcmp.gt.f32.partialorder %v236, 0.0
          %vm269 = vcmp.gt.f32.partialorder %v237, 0.0
          %vm270 = vcmp.gt.f32.partialorder %v238, 0.0
          %vm271 = vcmp.gt.f32.partialorder %v239, 0.0
          %vm272 = vcmp.gt.f32.partialorder %v240, 0.0
          %vm273 = vcmp.gt.f32.partialorder %v241, 0.0
          %vm274 = vcmp.gt.f32.partialorder %v242, 0.0
          %vm275 = vcmp.gt.f32.partialorder %v243, 0.0
          %vm276 = vcmp.gt.f32.partialorder %v244, 0.0
          %vm277 = vcmp.gt.f32.partialorder %v245, 0.0
          %vm278 = vcmp.gt.f32.partialorder %v246, 0.0
          %vm279 = vcmp.gt.f32.partialorder %v247, 0.0
          %vm280 = vcmp.gt.f32.partialorder %v248, 0.0
          %vm281 = vcmp.gt.f32.partialorder %v249, 0.0
          %vm282 = vcmp.lt.f32.partialorder %v218, 0.0
          %vm283 = vcmp.lt.f32.partialorder %v219, 0.0
          %vm284 = vcmp.lt.f32.partialorder %v220, 0.0
          %vm285 = vcmp.lt.f32.partialorder %v221, 0.0
          %vm286 = vcmp.lt.f32.partialorder %v222, 0.0
          %vm287 = vcmp.lt.f32.partialorder %v223, 0.0
          %vm288 = vcmp.lt.f32.partialorder %v224, 0.0
          %vm289 = vcmp.lt.f32.partialorder %v225, 0.0
          %vm290 = vcmp.lt.f32.partialorder %v226, 0.0
          %vm291 = vcmp.lt.f32.partialorder %v227, 0.0
          %vm292 = vcmp.lt.f32.partialorder %v228, 0.0
          %vm293 = vcmp.lt.f32.partialorder %v229, 0.0
          %vm294 = vcmp.lt.f32.partialorder %v230, 0.0
          %vm295 = vcmp.lt.f32.partialorder %v231, 0.0
          %vm296 = vcmp.lt.f32.partialorder %v232, 0.0
          %vm297 = vcmp.lt.f32.partialorder %v233, 0.0
          %vm298 = vcmp.lt.f32.partialorder %v234, 0.0
          %vm299 = vcmp.lt.f32.partialorder %v235, 0.0
          %vm300 = vcmp.lt.f32.partialorder %v236, 0.0
          %vm301 = vcmp.lt.f32.partialorder %v237, 0.0
          %vm302 = vcmp.lt.f32.partialorder %v238, 0.0
          %vm303 = vcmp.lt.f32.partialorder %v239, 0.0
          %vm304 = vcmp.lt.f32.partialorder %v240, 0.0
          %vm305 = vcmp.lt.f32.partialorder %v241, 0.0
          %vm306 = vcmp.lt.f32.partialorder %v242, 0.0
          %vm307 = vcmp.lt.f32.partialorder %v243, 0.0
          %vm308 = vcmp.lt.f32.partialorder %v244, 0.0
          %vm309 = vcmp.lt.f32.partialorder %v245, 0.0
          %vm310 = vcmp.lt.f32.partialorder %v246, 0.0
          %vm311 = vcmp.lt.f32.partialorder %v247, 0.0
          %vm312 = vcmp.lt.f32.partialorder %v248, 0.0
          %vm313 = vcmp.lt.f32.partialorder %v249, 0.0
          %v314 = vstv %s217
          %v315 = vsel %vm282, %v314, 0.0
          %v316 = vsel %vm283, %v314, 0.0
          %v317 = vsel %vm284, %v314, 0.0
          %v318 = vsel %vm285, %v314, 0.0
          %v319 = vsel %vm286, %v314, 0.0
          %v320 = vsel %vm287, %v314, 0.0
          %v321 = vsel %vm288, %v314, 0.0
          %v322 = vsel %vm289, %v314, 0.0
          %v323 = vsel %vm290, %v314, 0.0
          %v324 = vsel %vm291, %v314, 0.0
          %v325 = vsel %vm292, %v314, 0.0
          %v326 = vsel %vm293, %v314, 0.0
          %v327 = vsel %vm294, %v314, 0.0
          %v328 = vsel %vm295, %v314, 0.0
          %v329 = vsel %vm296, %v314, 0.0
          %v330 = vsel %vm297, %v314, 0.0
          %v331 = vsel %vm298, %v314, 0.0
          %v332 = vsel %vm299, %v314, 0.0
          %v333 = vsel %vm300, %v314, 0.0
          %v334 = vsel %vm301, %v314, 0.0
          %v335 = vsel %vm302, %v314, 0.0
          %v336 = vsel %vm303, %v314, 0.0
          %v337 = vsel %vm304, %v314, 0.0
          %v338 = vsel %vm305, %v314, 0.0
          %v339 = vsel %vm306, %v314, 0.0
          %v340 = vsel %vm307, %v314, 0.0
          %v341 = vsel %vm308, %v314, 0.0
          %v342 = vsel %vm309, %v314, 0.0
          %v343 = vsel %vm310, %v314, 0.0
          %v344 = vsel %vm311, %v314, 0.0
          %v345 = vsel %vm312, %v314, 0.0
          %v346 = vsel %vm313, %v314, 0.0
          %v347 = vsel %vm250, 1.0, %v315
          %v348 = vsel %vm251, 1.0, %v316
          %v349 = vsel %vm252, 1.0, %v317
          %v350 = vsel %vm253, 1.0, %v318
          %v351 = vsel %vm254, 1.0, %v319
          %v352 = vsel %vm255, 1.0, %v320
          %v353 = vsel %vm256, 1.0, %v321
          %v354 = vsel %vm257, 1.0, %v322
          %v355 = vsel %vm258, 1.0, %v323
          %v356 = vsel %vm259, 1.0, %v324
          %v357 = vsel %vm260, 1.0, %v325
          %v358 = vsel %vm261, 1.0, %v326
          %v359 = vsel %vm262, 1.0, %v327
          %v360 = vsel %vm263, 1.0, %v328
          %v361 = vsel %vm264, 1.0, %v329
          %v362 = vsel %vm265, 1.0, %v330
          %v363 = vsel %vm266, 1.0, %v331
          %v364 = vsel %vm267, 1.0, %v332
          %v365 = vsel %vm268, 1.0, %v333
          %v366 = vsel %vm269, 1.0, %v334
          %v367 = vsel %vm270, 1.0, %v335
          %v368 = vsel %vm271, 1.0, %v336
          %v369 = vsel %vm272, 1.0, %v337
          %v370 = vsel %vm273, 1.0, %v338
          %v371 = vsel %vm274, 1.0, %v339
          %v372 = vsel %vm275, 1.0, %v340
          %v373 = vsel %vm276, 1.0, %v341
          %v374 = vsel %vm277, 1.0, %v342
          %v375 = vsel %vm278, 1.0, %v343
          %v376 = vsel %vm279, 1.0, %v344
          %v377 = vsel %vm280, 1.0, %v345
          %v378 = vsel %vm281, 1.0, %v346
          %v379 = vpack.c.bf16 %v348, %v347
          %v380 = vpack.c.bf16 %v350, %v349
          %v381 = vpack.c.bf16 %v352, %v351
          %v382 = vpack.c.bf16 %v354, %v353
          %v383 = vpack.c.bf16 %v356, %v355
          %v384 = vpack.c.bf16 %v358, %v357
          %v385 = vpack.c.bf16 %v360, %v359
          %v386 = vpack.c.bf16 %v362, %v361
          %v387 = vpack.c.bf16 %v364, %v363
          %v388 = vpack.c.bf16 %v366, %v365
          %v389 = vpack.c.bf16 %v368, %v367
          %v390 = vpack.c.bf16 %v370, %v369
          %v391 = vpack.c.bf16 %v372, %v371
          %v392 = vpack.c.bf16 %v374, %v373
          %v393 = vpack.c.bf16 %v376, %v375
          %v394 = vpack.c.bf16 %v378, %v377
          %vm395 = vcmask 195584
          %396 = vst.msk [vmem:[#allocation2] sm:$0xff] %vm395, 0
          %s397 = scalar_lea.vmem [#allocation2], 136
          %398 = vst.msk [vmem:[%s397] sm:$0xff] %vm395, 0
          %s399 = scalar_lea.vmem [#allocation2], 8
          %vm400 = vcmask 57344
          %vm401 = vsmask.f32 256
          %vm402 = vmand %vm400, %vm401
          %v403 = vld [vmem:[%s399] sm:$0x1]
          %v404 = vsel %vm402, 0, %v403
          %405 = vst [vmem:[%s399] sm:$0x1] %v404
          %v406 = vld [vmem:[%s399 + $0x8] sm:$0x1]
          %v407 = vsel %vm402, 0, %v406
          %408 = vst [vmem:[%s399 + $0x8] sm:$0x1] %v407
          %v409 = vld [vmem:[%s399 + $0x10] sm:$0x1]
          %v410 = vsel %vm402, 0, %v409
          %411 = vst [vmem:[%s399 + $0x10] sm:$0x1] %v410
          %v412 = vld [vmem:[%s399 + $0x18] sm:$0x1]
          %v413 = vsel %vm402, 0, %v412
          %414 = vst [vmem:[%s399 + $0x18] sm:$0x1] %v413
          %v415 = vld [vmem:[%s399 + $0x20] sm:$0x1]
          %v416 = vsel %vm402, 0, %v415
          %417 = vst [vmem:[%s399 + $0x20] sm:$0x1] %v416
          %v418 = vld [vmem:[%s399 + $0x28] sm:$0x1]
          %v419 = vsel %vm402, 0, %v418
          %420 = vst [vmem:[%s399 + $0x28] sm:$0x1] %v419
          %v421 = vld [vmem:[%s399 + $0x30] sm:$0x1]
          %v422 = vsel %vm402, 0, %v421
          %423 = vst [vmem:[%s399 + $0x30] sm:$0x1] %v422
          %v424 = vld [vmem:[%s399 + $0x38] sm:$0x1]
          %v425 = vsel %vm402, 0, %v424
          %426 = vst [vmem:[%s399 + $0x38] sm:$0x1] %v425
          %v427 = vld [vmem:[%s399 + $0x40] sm:$0x1]
          %v428 = vsel %vm402, 0, %v427
          %429 = vst [vmem:[%s399 + $0x40] sm:$0x1] %v428
          %v430 = vld [vmem:[%s399 + $0x48] sm:$0x1]
          %v431 = vsel %vm402, 0, %v430
          %432 = vst [vmem:[%s399 + $0x48] sm:$0x1] %v431
          %v433 = vld [vmem:[%s399 + $0x50] sm:$0x1]
          %v434 = vsel %vm402, 0, %v433
          %435 = vst [vmem:[%s399 + $0x50] sm:$0x1] %v434
          %v436 = vld [vmem:[%s399 + $0x58] sm:$0x1]
          %v437 = vsel %vm402, 0, %v436
          %438 = vst [vmem:[%s399 + $0x58] sm:$0x1] %v437
          %v439 = vld [vmem:[%s399 + $0x60] sm:$0x1]
          %v440 = vsel %vm402, 0, %v439
          %441 = vst [vmem:[%s399 + $0x60] sm:$0x1] %v440
          %v442 = vld [vmem:[%s399 + $0x68] sm:$0x1]
          %v443 = vsel %vm402, 0, %v442
          %444 = vst [vmem:[%s399 + $0x68] sm:$0x1] %v443
          %v445 = vld [vmem:[%s399 + $0x70] sm:$0x1]
          %v446 = vsel %vm402, 0, %v445
          %447 = vst [vmem:[%s399 + $0x70] sm:$0x1] %v446
          %v448 = vld [vmem:[%s399 + $0x78] sm:$0x1]
          %v449 = vsel %vm402, 0, %v448
          %450 = vst [vmem:[%s399 + $0x78] sm:$0x1] %v449
          %v452 = vshrl.u32 %v379, 16
          %v454 = vrot.slane %v452, 7
          %v455 = vshll.u32 %v379, 16
          %v457 = vor.u32 %v454, %v455
          %v459 = vshrl.u32 %v380, 16
          %v461 = vrot.slane %v459, 7
          %v462 = vshll.u32 %v380, 16
          %v464 = vor.u32 %v461, %v462
          %v466 = vshrl.u32 %v381, 16
          %v468 = vrot.slane %v466, 7
          %v469 = vshll.u32 %v381, 16
          %v471 = vor.u32 %v468, %v469
          %v473 = vshrl.u32 %v382, 16
          %v475 = vrot.slane %v473, 7
          %v476 = vshll.u32 %v382, 16
          %v478 = vor.u32 %v475, %v476
          %v480 = vshrl.u32 %v383, 16
          %v482 = vrot.slane %v480, 7
          %v483 = vshll.u32 %v383, 16
          %v485 = vor.u32 %v482, %v483
          %v487 = vshrl.u32 %v384, 16
          %v489 = vrot.slane %v487, 7
          %v490 = vshll.u32 %v384, 16
          %v492 = vor.u32 %v489, %v490
          %v494 = vshrl.u32 %v385, 16
          %v496 = vrot.slane %v494, 7
          %v497 = vshll.u32 %v385, 16
          %v499 = vor.u32 %v496, %v497
          %v501 = vshrl.u32 %v386, 16
          %v503 = vrot.slane %v501, 7
          %v504 = vshll.u32 %v386, 16
          %v506 = vor.u32 %v503, %v504
          %v508 = vshrl.u32 %v387, 16
          %v510 = vrot.slane %v508, 7
          %v511 = vshll.u32 %v387, 16
          %v513 = vor.u32 %v510, %v511
          %v515 = vshrl.u32 %v388, 16
          %v517 = vrot.slane %v515, 7
          %v518 = vshll.u32 %v388, 16
          %v520 = vor.u32 %v517, %v518
          %v522 = vshrl.u32 %v389, 16
          %v524 = vrot.slane %v522, 7
          %v525 = vshll.u32 %v389, 16
          %v527 = vor.u32 %v524, %v525
          %v529 = vshrl.u32 %v390, 16
          %v531 = vrot.slane %v529, 7
          %v532 = vshll.u32 %v390, 16
          %v534 = vor.u32 %v531, %v532
          %v536 = vshrl.u32 %v391, 16
          %v538 = vrot.slane %v536, 7
          %v539 = vshll.u32 %v391, 16
          %v541 = vor.u32 %v538, %v539
          %v543 = vshrl.u32 %v392, 16
          %v545 = vrot.slane %v543, 7
          %v546 = vshll.u32 %v392, 16
          %v548 = vor.u32 %v545, %v546
          %v550 = vshrl.u32 %v393, 16
          %v552 = vrot.slane %v550, 7
          %v553 = vshll.u32 %v393, 16
          %v555 = vor.u32 %v552, %v553
          %v557 = vshrl.u32 %v394, 16
          %v559 = vrot.slane %v557, 7
          %v560 = vshll.u32 %v394, 16
          %v562 = vor.u32 %v559, %v560
          %vm579 = vcmask 64512
          %vm580 = vsmask.f32 7938
          %vm581 = vmand %vm579, %vm580
          %v582 = vld [vmem:[%s399] sm:$0xff]
          %v583 = vsel %vm581, %v457, %v582
          %584 = vst [vmem:[%s399] sm:$0xff] %v583
          %v585 = vld [vmem:[%s399 + $0x8] sm:$0xff]
          %v586 = vsel %vm581, %v464, %v585
          %587 = vst [vmem:[%s399 + $0x8] sm:$0xff] %v586
          %v588 = vld [vmem:[%s399 + $0x10] sm:$0xff]
          %v589 = vsel %vm581, %v471, %v588
          %590 = vst [vmem:[%s399 + $0x10] sm:$0xff] %v589
          %v591 = vld [vmem:[%s399 + $0x18] sm:$0xff]
          %v592 = vsel %vm581, %v478, %v591
          %593 = vst [vmem:[%s399 + $0x18] sm:$0xff] %v592
          %v594 = vld [vmem:[%s399 + $0x20] sm:$0xff]
          %v595 = vsel %vm581, %v485, %v594
          %596 = vst [vmem:[%s399 + $0x20] sm:$0xff] %v595
          %v597 = vld [vmem:[%s399 + $0x28] sm:$0xff]
          %v598 = vsel %vm581, %v492, %v597
          %599 = vst [vmem:[%s399 + $0x28] sm:$0xff] %v598
          %v600 = vld [vmem:[%s399 + $0x30] sm:$0xff]
          %v601 = vsel %vm581, %v499, %v600
          %602 = vst [vmem:[%s399 + $0x30] sm:$0xff] %v601
          %v603 = vld [vmem:[%s399 + $0x38] sm:$0xff]
          %v604 = vsel %vm581, %v506, %v603
          %605 = vst [vmem:[%s399 + $0x38] sm:$0xff] %v604
          %v606 = vld [vmem:[%s399 + $0x40] sm:$0xff]
          %v607 = vsel %vm581, %v513, %v606
          %608 = vst [vmem:[%s399 + $0x40] sm:$0xff] %v607
          %v609 = vld [vmem:[%s399 + $0x48] sm:$0xff]
          %v610 = vsel %vm581, %v520, %v609
          %611 = vst [vmem:[%s399 + $0x48] sm:$0xff] %v610
          %v612 = vld [vmem:[%s399 + $0x50] sm:$0xff]
          %v613 = vsel %vm581, %v527, %v612
          %614 = vst [vmem:[%s399 + $0x50] sm:$0xff] %v613
          %v615 = vld [vmem:[%s399 + $0x58] sm:$0xff]
          %v616 = vsel %vm581, %v534, %v615
          %617 = vst [vmem:[%s399 + $0x58] sm:$0xff] %v616
          %v618 = vld [vmem:[%s399 + $0x60] sm:$0xff]
          %v619 = vsel %vm581, %v541, %v618
          %620 = vst [vmem:[%s399 + $0x60] sm:$0xff] %v619
          %v621 = vld [vmem:[%s399 + $0x68] sm:$0xff]
          %v622 = vsel %vm581, %v548, %v621
          %623 = vst [vmem:[%s399 + $0x68] sm:$0xff] %v622
          %v624 = vld [vmem:[%s399 + $0x70] sm:$0xff]
          %v625 = vsel %vm581, %v555, %v624
          %626 = vst [vmem:[%s399 + $0x70] sm:$0xff] %v625
          %v627 = vld [vmem:[%s399 + $0x78] sm:$0xff]
          %v628 = vsel %vm581, %v562, %v627
          %629 = vst [vmem:[%s399 + $0x78] sm:$0xff] %v628
          %646 = vrot.lane.b32.xlu0 %v379, 8
          %v647 = vpop.permute.xlu0 %646
          %648 = vrot.lane.b32.xlu0 %v380, 8
          %v649 = vpop.permute.xlu0 %648
          %650 = vrot.lane.b32.xlu0 %v381, 8
          %v651 = vpop.permute.xlu0 %650
          %652 = vrot.lane.b32.xlu0 %v382, 8
          %v653 = vpop.permute.xlu0 %652
          %654 = vrot.lane.b32.xlu0 %v383, 8
          %v655 = vpop.permute.xlu0 %654
          %656 = vrot.lane.b32.xlu0 %v384, 8
          %v657 = vpop.permute.xlu0 %656
          %658 = vrot.lane.b32.xlu0 %v385, 8
          %v659 = vpop.permute.xlu0 %658
          %660 = vrot.lane.b32.xlu0 %v386, 8
          %v661 = vpop.permute.xlu0 %660
          %662 = vrot.lane.b32.xlu0 %v387, 8
          %v663 = vpop.permute.xlu0 %662
          %664 = vrot.lane.b32.xlu0 %v388, 8
          %v665 = vpop.permute.xlu0 %664
          %666 = vrot.lane.b32.xlu0 %v389, 8
          %v667 = vpop.permute.xlu0 %666
          %668 = vrot.lane.b32.xlu0 %v390, 8
          %v669 = vpop.permute.xlu0 %668
          %670 = vrot.lane.b32.xlu0 %v391, 8
          %v671 = vpop.permute.xlu0 %670
          %672 = vrot.lane.b32.xlu0 %v392, 8
          %v673 = vpop.permute.xlu0 %672
          %674 = vrot.lane.b32.xlu0 %v393, 8
          %v675 = vpop.permute.xlu0 %674
          %676 = vrot.lane.b32.xlu0 %v394, 8
          %v677 = vpop.permute.xlu0 %676
          %vm694 = vcmask 130112
          %695 = vst.msk [vmem:[%s399] sm:$0xff] %vm694, %v647
          %696 = vst.msk [vmem:[%s399 + $0x8] sm:$0xff] %vm694, %v649
          %697 = vst.msk [vmem:[%s399 + $0x10] sm:$0xff] %vm694, %v651
          %698 = vst.msk [vmem:[%s399 + $0x18] sm:$0xff] %vm694, %v653
          %699 = vst.msk [vmem:[%s399 + $0x20] sm:$0xff] %vm694, %v655
          %700 = vst.msk [vmem:[%s399 + $0x28] sm:$0xff] %vm694, %v657
          %701 = vst.msk [vmem:[%s399 + $0x30] sm:$0xff] %vm694, %v659
          %702 = vst.msk [vmem:[%s399 + $0x38] sm:$0xff] %vm694, %v661
          %703 = vst.msk [vmem:[%s399 + $0x40] sm:$0xff] %vm694, %v663
          %704 = vst.msk [vmem:[%s399 + $0x48] sm:$0xff] %vm694, %v665
          %705 = vst.msk [vmem:[%s399 + $0x50] sm:$0xff] %vm694, %v667
          %706 = vst.msk [vmem:[%s399 + $0x58] sm:$0xff] %vm694, %v669
          %707 = vst.msk [vmem:[%s399 + $0x60] sm:$0xff] %vm694, %v671
          %708 = vst.msk [vmem:[%s399 + $0x68] sm:$0xff] %vm694, %v673
          %709 = vst.msk [vmem:[%s399 + $0x70] sm:$0xff] %vm694, %v675
          %710 = vst.msk [vmem:[%s399 + $0x78] sm:$0xff] %vm694, %v677
          %vm711 = vcmask 195719
          %vm712 = vsmask.f32 7966
          %vm713 = vmand %vm711, %vm712
          %v714 = vld [vmem:[%s399] sm:$0x80]
          %v715 = vsel %vm713, 0, %v714
          %716 = vst [vmem:[%s399] sm:$0x80] %v715
          %v717 = vld [vmem:[%s399 + $0x8] sm:$0x80]
          %v718 = vsel %vm713, 0, %v717
          %719 = vst [vmem:[%s399 + $0x8] sm:$0x80] %v718
          %v720 = vld [vmem:[%s399 + $0x10] sm:$0x80]
          %v721 = vsel %vm713, 0, %v720
          %722 = vst [vmem:[%s399 + $0x10] sm:$0x80] %v721
          %v723 = vld [vmem:[%s399 + $0x18] sm:$0x80]
          %v724 = vsel %vm713, 0, %v723
          %725 = vst [vmem:[%s399 + $0x18] sm:$0x80] %v724
          %v726 = vld [vmem:[%s399 + $0x20] sm:$0x80]
          %v727 = vsel %vm713, 0, %v726
          %728 = vst [vmem:[%s399 + $0x20] sm:$0x80] %v727
          %v729 = vld [vmem:[%s399 + $0x28] sm:$0x80]
          %v730 = vsel %vm713, 0, %v729
          %731 = vst [vmem:[%s399 + $0x28] sm:$0x80] %v730
          %v732 = vld [vmem:[%s399 + $0x30] sm:$0x80]
          %v733 = vsel %vm713, 0, %v732
          %734 = vst [vmem:[%s399 + $0x30] sm:$0x80] %v733
          %v735 = vld [vmem:[%s399 + $0x38] sm:$0x80]
          %v736 = vsel %vm713, 0, %v735
          %737 = vst [vmem:[%s399 + $0x38] sm:$0x80] %v736
          %v738 = vld [vmem:[%s399 + $0x40] sm:$0x80]
          %v739 = vsel %vm713, 0, %v738
          %740 = vst [vmem:[%s399 + $0x40] sm:$0x80] %v739
          %v741 = vld [vmem:[%s399 + $0x48] sm:$0x80]
          %v742 = vsel %vm713, 0, %v741
          %743 = vst [vmem:[%s399 + $0x48] sm:$0x80] %v742
          %v744 = vld [vmem:[%s399 + $0x50] sm:$0x80]
          %v745 = vsel %vm713, 0, %v744
          %746 = vst [vmem:[%s399 + $0x50] sm:$0x80] %v745
          %v747 = vld [vmem:[%s399 + $0x58] sm:$0x80]
          %v748 = vsel %vm713, 0, %v747
          %749 = vst [vmem:[%s399 + $0x58] sm:$0x80] %v748
          %v750 = vld [vmem:[%s399 + $0x60] sm:$0x80]
          %v751 = vsel %vm713, 0, %v750
          %752 = vst [vmem:[%s399 + $0x60] sm:$0x80] %v751
          %v753 = vld [vmem:[%s399 + $0x68] sm:$0x80]
          %v754 = vsel %vm713, 0, %v753
          %755 = vst [vmem:[%s399 + $0x68] sm:$0x80] %v754
          %v756 = vld [vmem:[%s399 + $0x70] sm:$0x80]
          %v757 = vsel %vm713, 0, %v756
          %758 = vst [vmem:[%s399 + $0x70] sm:$0x80] %v757
          %v759 = vld [vmem:[%s399 + $0x78] sm:$0x80]
          %v760 = vsel %vm713, 0, %v759
          %761 = vst [vmem:[%s399 + $0x78] sm:$0x80] %v760
          %v762 = vrot.slane %v455, 1
          %v763 = vor.u32 %v452, %v762
          %v764 = vrot.slane %v462, 1
          %v765 = vor.u32 %v459, %v764
          %v766 = vrot.slane %v469, 1
          %v767 = vor.u32 %v466, %v766
          %v768 = vrot.slane %v476, 1
          %v769 = vor.u32 %v473, %v768
          %v770 = vrot.slane %v483, 1
          %v771 = vor.u32 %v480, %v770
          %v772 = vrot.slane %v490, 1
          %v773 = vor.u32 %v487, %v772
          %v774 = vrot.slane %v497, 1
          %v775 = vor.u32 %v494, %v774
          %v776 = vrot.slane %v504, 1
          %v777 = vor.u32 %v501, %v776
          %v778 = vrot.slane %v511, 1
          %v779 = vor.u32 %v508, %v778
          %v780 = vrot.slane %v518, 1
          %v781 = vor.u32 %v515, %v780
          %v782 = vrot.slane %v525, 1
          %v783 = vor.u32 %v522, %v782
          %v784 = vrot.slane %v532, 1
          %v785 = vor.u32 %v529, %v784
          %v786 = vrot.slane %v539, 1
          %v787 = vor.u32 %v536, %v786
          %v788 = vrot.slane %v546, 1
          %v789 = vor.u32 %v543, %v788
          %v790 = vrot.slane %v553, 1
          %v791 = vor.u32 %v550, %v790
          %v792 = vrot.slane %v560, 1
          %v793 = vor.u32 %v557, %v792
          %794 = vrot.lane.b32.xlu0 %v763, 16
          %v795 = vpop.permute.xlu0 %794
          %796 = vrot.lane.b32.xlu0 %v765, 16
          %v797 = vpop.permute.xlu0 %796
          %798 = vrot.lane.b32.xlu0 %v767, 16
          %v799 = vpop.permute.xlu0 %798
          %800 = vrot.lane.b32.xlu0 %v769, 16
          %v801 = vpop.permute.xlu0 %800
          %802 = vrot.lane.b32.xlu0 %v771, 16
          %v803 = vpop.permute.xlu0 %802
          %804 = vrot.lane.b32.xlu0 %v773, 16
          %v805 = vpop.permute.xlu0 %804
          %806 = vrot.lane.b32.xlu0 %v775, 16
          %v807 = vpop.permute.xlu0 %806
          %808 = vrot.lane.b32.xlu0 %v777, 16
          %v809 = vpop.permute.xlu0 %808
          %810 = vrot.lane.b32.xlu0 %v779, 16
          %v811 = vpop.permute.xlu0 %810
          %812 = vrot.lane.b32.xlu0 %v781, 16
          %v813 = vpop.permute.xlu0 %812
          %814 = vrot.lane.b32.xlu0 %v783, 16
          %v815 = vpop.permute.xlu0 %814
          %816 = vrot.lane.b32.xlu0 %v785, 16
          %v817 = vpop.permute.xlu0 %816
          %818 = vrot.lane.b32.xlu0 %v787, 16
          %v819 = vpop.permute.xlu0 %818
          %820 = vrot.lane.b32.xlu0 %v789, 16
          %v821 = vpop.permute.xlu0 %820
          %822 = vrot.lane.b32.xlu0 %v791, 16
          %v823 = vpop.permute.xlu0 %822
          %824 = vrot.lane.b32.xlu0 %v793, 16
          %v825 = vpop.permute.xlu0 %824
          %vm842 = vcmask 195712
          %vm843 = vsmask.f32 7424
          %vm844 = vmand %vm842, %vm843
          %v845 = vld [vmem:[%s399] sm:$0xff]
          %v846 = vsel %vm844, %v795, %v845
          %847 = vst [vmem:[%s399] sm:$0xff] %v846
          %v848 = vld [vmem:[%s399 + $0x8] sm:$0xff]
          %v849 = vsel %vm844, %v797, %v848
          %850 = vst [vmem:[%s399 + $0x8] sm:$0xff] %v849
          %v851 = vld [vmem:[%s399 + $0x10] sm:$0xff]
          %v852 = vsel %vm844, %v799, %v851
          %853 = vst [vmem:[%s399 + $0x10] sm:$0xff] %v852
          %v854 = vld [vmem:[%s399 + $0x18] sm:$0xff]
          %v855 = vsel %vm844, %v801, %v854
          %856 = vst [vmem:[%s399 + $0x18] sm:$0xff] %v855
          %v857 = vld [vmem:[%s399 + $0x20] sm:$0xff]
          %v858 = vsel %vm844, %v803, %v857
          %859 = vst [vmem:[%s399 + $0x20] sm:$0xff] %v858
          %v860 = vld [vmem:[%s399 + $0x28] sm:$0xff]
          %v861 = vsel %vm844, %v805, %v860
          %862 = vst [vmem:[%s399 + $0x28] sm:$0xff] %v861
          %v863 = vld [vmem:[%s399 + $0x30] sm:$0xff]
          %v864 = vsel %vm844, %v807, %v863
          %865 = vst [vmem:[%s399 + $0x30] sm:$0xff] %v864
          %v866 = vld [vmem:[%s399 + $0x38] sm:$0xff]
          %v867 = vsel %vm844, %v809, %v866
          %868 = vst [vmem:[%s399 + $0x38] sm:$0xff] %v867
          %v869 = vld [vmem:[%s399 + $0x40] sm:$0xff]
          %v870 = vsel %vm844, %v811, %v869
          %871 = vst [vmem:[%s399 + $0x40] sm:$0xff] %v870
          %v872 = vld [vmem:[%s399 + $0x48] sm:$0xff]
          %v873 = vsel %vm844, %v813, %v872
          %874 = vst [vmem:[%s399 + $0x48] sm:$0xff] %v873
          %v875 = vld [vmem:[%s399 + $0x50] sm:$0xff]
          %v876 = vsel %vm844, %v815, %v875
          %877 = vst [vmem:[%s399 + $0x50] sm:$0xff] %v876
          %v878 = vld [vmem:[%s399 + $0x58] sm:$0xff]
          %v879 = vsel %vm844, %v817, %v878
          %880 = vst [vmem:[%s399 + $0x58] sm:$0xff] %v879
          %v881 = vld [vmem:[%s399 + $0x60] sm:$0xff]
          %v882 = vsel %vm844, %v819, %v881
          %883 = vst [vmem:[%s399 + $0x60] sm:$0xff] %v882
          %v884 = vld [vmem:[%s399 + $0x68] sm:$0xff]
          %v885 = vsel %vm844, %v821, %v884
          %886 = vst [vmem:[%s399 + $0x68] sm:$0xff] %v885
          %v887 = vld [vmem:[%s399 + $0x70] sm:$0xff]
          %v888 = vsel %vm844, %v823, %v887
          %889 = vst [vmem:[%s399 + $0x70] sm:$0xff] %v888
          %v890 = vld [vmem:[%s399 + $0x78] sm:$0xff]
          %v891 = vsel %vm844, %v825, %v890
          %892 = vst [vmem:[%s399 + $0x78] sm:$0xff] %v891
        $region32: #{tpu_custom_call.1} parent=27 // pred_fallthru
          _
        %s893 = smul.u32 %s25, 16
        %s894 = smul.addr %s893, 8
        %s895 = scalar_lea.vmem [#allocation2], %s894
        %v896 = vld [vmem:[%s895] sm:$0xff]
        %v897 = vld [vmem:[%s895 + $0x8] sm:$0xff]
        %v898 = vld [vmem:[%s895 + $0x10] sm:$0xff]
        %v899 = vld [vmem:[%s895 + $0x18] sm:$0xff]
        %v900 = vld [vmem:[%s895 + $0x20] sm:$0xff]
        %v901 = vld [vmem:[%s895 + $0x28] sm:$0xff]
        %v902 = vld [vmem:[%s895 + $0x30] sm:$0xff]
        %v903 = vld [vmem:[%s895 + $0x38] sm:$0xff]
        %v904 = vld [vmem:[%s895 + $0x40] sm:$0xff]
        %v905 = vld [vmem:[%s895 + $0x48] sm:$0xff]
        %v906 = vld [vmem:[%s895 + $0x50] sm:$0xff]
        %v907 = vld [vmem:[%s895 + $0x58] sm:$0xff]
        %v908 = vld [vmem:[%s895 + $0x60] sm:$0xff]
        %v909 = vld [vmem:[%s895 + $0x68] sm:$0xff]
        %v910 = vld [vmem:[%s895 + $0x70] sm:$0xff]
        %v911 = vld [vmem:[%s895 + $0x78] sm:$0xff]
        %v912 = vld [vmem:[%s2] sm:$0xf]
        %v913 = vld [vmem:[%s2 + $0x4] sm:$0xf]
        %v914 = vld [vmem:[%s2 + $0x8] sm:$0xf]
        %v918 = vunpack.c.l.b16 %v912
        %v919 = vunpack.c.l.b16 %v913
        %v920 = vunpack.c.l.b16 %v914
        %v921 = vpack.c.b16 %v919, %v918
        %v922 = vpack.c.b16 %v920, %v920
        %vm924 = vcmask 195584
        %v926 = vsel %vm924, %v896, 0
        %v929 = vsel %vm924, %v897, 0
        %v932 = vsel %vm924, %v898, 0
        %v935 = vsel %vm924, %v899, 0
        %v938 = vsel %vm924, %v900, 0
        %v941 = vsel %vm924, %v901, 0
        %v944 = vsel %vm924, %v902, 0
        %v947 = vsel %vm924, %v903, 0
        %v950 = vsel %vm924, %v904, 0
        %v953 = vsel %vm924, %v905, 0
        %v956 = vsel %vm924, %v906, 0
        %v959 = vsel %vm924, %v907, 0
        %v962 = vsel %vm924, %v908, 0
        %v965 = vsel %vm924, %v909, 0
        %v968 = vsel %vm924, %v910, 0
        %v971 = vsel %vm924, %v911, 0
        %vm973 = vcmask 1043456
        %v975 = vsel %vm973, %v922, 0
        %977 = vmatprep.subr.bf16.mxu0 0
        %978 = vmatpush1.bf16.msra.mxu0 %v921
        %979 = vmatprep.subr.bf16.mxu0 0
        %980 = vmatpush1.bf16.msra.mxu0 %v975
        %981 = vmatprep.subr.bf16.mxu0 0
        %982 = vmatpush1.bf16.msra.mxu0 0
        %983 = vmatprep.subr.bf16.mxu0 0
        %984 = vmatpush1.bf16.msra.mxu0 0
        %985 = vmatprep.subr.bf16.mxu0 0
        %986 = vmatpush1.bf16.msra.mxu0 0
        %987 = vmatprep.subr.bf16.mxu0 0
        %988 = vmatpush1.bf16.msra.mxu0 0
        %989 = vmatprep.subr.bf16.mxu0 0
        %990 = vmatpush1.bf16.msra.mxu0 0
        %991 = vmatprep.subr.bf16.mxu0 0
        %992 = vmatpush1.bf16.msra.mxu0 0
        %993 = vmatprep.subr.bf16.mxu0 0
        %994 = vmatpush1.bf16.msra.mxu0 0
        %995 = vmatprep.subr.bf16.mxu0 0
        %996 = vmatpush1.bf16.msra.mxu0 0
        %997 = vmatprep.subr.bf16.mxu0 0
        %998 = vmatpush1.bf16.msra.mxu0 0
        %999 = vmatprep.subr.bf16.mxu0 0
        %1000 = vmatpush1.bf16.msra.mxu0 0
        %1001 = vmatprep.subr.bf16.mxu0 0
        %1002 = vmatpush1.bf16.msra.mxu0 0
        %1003 = vmatprep.subr.bf16.mxu0 0
        %1004 = vmatpush1.bf16.msra.mxu0 0
        %1005 = vmatprep.subr.bf16.mxu0 0
        %1006 = vmatpush1.bf16.msra.mxu0 0
        %1007 = vmatprep.subr.bf16.mxu0 0
        %1008 = vmatpush1.bf16.msra.mxu0 0
        %1009 = vmatprep.mubr.bf16.mxu0 0
        %1010 = vmatmul.mubr.bf16.gmra.mrb[0].mxu0 %v926
        %v1011 = vpop.f32.mrb[0].mxu0
        %v1012 = vadd.f32 0.0, %v1011
        %v1013 = vpop.f32.mrb[0].mxu0
        %v1014 = vpop.f32.mrb[0].mxu0
        %v1015 = vadd.f32 0.0, %v1014
        %v1016 = vpop.f32.mrb[0].mxu0
        %1017 = vmatprep.mubr.bf16.mxu0 0
        %1018 = vmatmul.mubr.bf16.gmra.mrb[0].mxu0 %v929
        %v1019 = vpop.f32.mrb[0].mxu0
        %v1020 = vadd.f32 0.0, %v1019
        %v1021 = vpop.f32.mrb[0].mxu0
        %v1022 = vpop.f32.mrb[0].mxu0
        %v1023 = vadd.f32 0.0, %v1022
        %v1024 = vpop.f32.mrb[0].mxu0
        %1025 = vmatprep.mubr.bf16.mxu0 0
        %1026 = vmatmul.mubr.bf16.gmra.mrb[0].mxu0 %v932
        %v1027 = vpop.f32.mrb[0].mxu0
        %v1028 = vadd.f32 0.0, %v1027
        %v1029 = vpop.f32.mrb[0].mxu0
        %v1030 = vpop.f32.mrb[0].mxu0
        %v1031 = vadd.f32 0.0, %v1030
        %v1032 = vpop.f32.mrb[0].mxu0
        %1033 = vmatprep.mubr.bf16.mxu0 0
        %1034 = vmatmul.mubr.bf16.gmra.mrb[0].mxu0 %v935
        %v1035 = vpop.f32.mrb[0].mxu0
        %v1036 = vadd.f32 0.0, %v1035
        %v1037 = vpop.f32.mrb[0].mxu0
        %v1038 = vpop.f32.mrb[0].mxu0
        %v1039 = vadd.f32 0.0, %v1038
        %v1040 = vpop.f32.mrb[0].mxu0
        %1041 = vmatprep.mubr.bf16.mxu0 0
        %1042 = vmatmul.mubr.bf16.gmra.mrb[0].mxu0 %v938
        %v1043 = vpop.f32.mrb[0].mxu0
        %v1044 = vadd.f32 0.0, %v1043
        %v1045 = vpop.f32.mrb[0].mxu0
        %v1046 = vpop.f32.mrb[0].mxu0
        %v1047 = vadd.f32 0.0, %v1046
        %v1048 = vpop.f32.mrb[0].mxu0
        %1049 = vmatprep.mubr.bf16.mxu0 0
        %1050 = vmatmul.mubr.bf16.gmra.mrb[0].mxu0 %v941
        %v1051 = vpop.f32.mrb[0].mxu0
        %v1052 = vadd.f32 0.0, %v1051
        %v1053 = vpop.f32.mrb[0].mxu0
        %v1054 = vpop.f32.mrb[0].mxu0
        %v1055 = vadd.f32 0.0, %v1054
        %v1056 = vpop.f32.mrb[0].mxu0
        %1057 = vmatprep.mubr.bf16.mxu0 0
        %1058 = vmatmul.mubr.bf16.gmra.mrb[0].mxu0 %v944
        %v1059 = vpop.f32.mrb[0].mxu0
        %v1060 = vadd.f32 0.0, %v1059
        %v1061 = vpop.f32.mrb[0].mxu0
        %v1062 = vpop.f32.mrb[0].mxu0
        %v1063 = vadd.f32 0.0, %v1062
        %v1064 = vpop.f32.mrb[0].mxu0
        %1065 = vmatprep.mubr.bf16.mxu0 0
        %1066 = vmatmul.mubr.bf16.gmra.mrb[0].mxu0 %v947
        %v1067 = vpop.f32.mrb[0].mxu0
        %v1068 = vadd.f32 0.0, %v1067
        %v1069 = vpop.f32.mrb[0].mxu0
        %v1070 = vpop.f32.mrb[0].mxu0
        %v1071 = vadd.f32 0.0, %v1070
        %v1072 = vpop.f32.mrb[0].mxu0
        %1073 = vmatprep.mubr.bf16.mxu0 0
        %1074 = vmatmul.mubr.bf16.gmra.mrb[0].mxu0 %v950
        %v1075 = vpop.f32.mrb[0].mxu0
        %v1076 = vadd.f32 0.0, %v1075
        %v1077 = vpop.f32.mrb[0].mxu0
        %v1078 = vpop.f32.mrb[0].mxu0
        %v1079 = vadd.f32 0.0, %v1078
        %v1080 = vpop.f32.mrb[0].mxu0
        %1081 = vmatprep.mubr.bf16.mxu0 0
        %1082 = vmatmul.mubr.bf16.gmra.mrb[0].mxu0 %v953
        %v1083 = vpop.f32.mrb[0].mxu0
        %v1084 = vadd.f32 0.0, %v1083
        %v1085 = vpop.f32.mrb[0].mxu0
        %v1086 = vpop.f32.mrb[0].mxu0
        %v1087 = vadd.f32 0.0, %v1086
        %v1088 = vpop.f32.mrb[0].mxu0
        %1089 = vmatprep.mubr.bf16.mxu0 0
        %1090 = vmatmul.mubr.bf16.gmra.mrb[0].mxu0 %v956
        %v1091 = vpop.f32.mrb[0].mxu0
        %v1092 = vadd.f32 0.0, %v1091
        %v1093 = vpop.f32.mrb[0].mxu0
        %v1094 = vpop.f32.mrb[0].mxu0
        %v1095 = vadd.f32 0.0, %v1094
        %v1096 = vpop.f32.mrb[0].mxu0
        %1097 = vmatprep.mubr.bf16.mxu0 0
        %1098 = vmatmul.mubr.bf16.gmra.mrb[0].mxu0 %v959
        %v1099 = vpop.f32.mrb[0].mxu0
        %v1100 = vadd.f32 0.0, %v1099
        %v1101 = vpop.f32.mrb[0].mxu0
        %v1102 = vpop.f32.mrb[0].mxu0
        %v1103 = vadd.f32 0.0, %v1102
        %v1104 = vpop.f32.mrb[0].mxu0
        %1105 = vmatprep.mubr.bf16.mxu0 0
        %1106 = vmatmul.mubr.bf16.gmra.mrb[0].mxu0 %v962
        %v1107 = vpop.f32.mrb[0].mxu0
        %v1108 = vadd.f32 0.0, %v1107
        %v1109 = vpop.f32.mrb[0].mxu0
        %v1110 = vpop.f32.mrb[0].mxu0
        %v1111 = vadd.f32 0.0, %v1110
        %v1112 = vpop.f32.mrb[0].mxu0
        %1113 = vmatprep.mubr.bf16.mxu0 0
        %1114 = vmatmul.mubr.bf16.gmra.mrb[0].mxu0 %v965
        %v1115 = vpop.f32.mrb[0].mxu0
        %v1116 = vadd.f32 0.0, %v1115
        %v1117 = vpop.f32.mrb[0].mxu0
        %v1118 = vpop.f32.mrb[0].mxu0
        %v1119 = vadd.f32 0.0, %v1118
        %v1120 = vpop.f32.mrb[0].mxu0
        %1121 = vmatprep.mubr.bf16.mxu0 0
        %1122 = vmatmul.mubr.bf16.gmra.mrb[0].mxu0 %v968
        %v1123 = vpop.f32.mrb[0].mxu0
        %v1124 = vadd.f32 0.0, %v1123
        %v1125 = vpop.f32.mrb[0].mxu0
        %v1126 = vpop.f32.mrb[0].mxu0
        %v1127 = vadd.f32 0.0, %v1126
        %v1128 = vpop.f32.mrb[0].mxu0
        %1129 = vmatprep.mubr.bf16.mxu0 0
        %1130 = vmatmul.mubr.bf16.gmra.mrb[0].mxu0 %v971
        %v1131 = vpop.f32.mrb[0].mxu0
        %v1132 = vadd.f32 0.0, %v1131
        %v1133 = vpop.f32.mrb[0].mxu0
        %v1134 = vpop.f32.mrb[0].mxu0
        %v1135 = vadd.f32 0.0, %v1134
        %v1136 = vpop.f32.mrb[0].mxu0
        %1137 = vdwg.mxu0
        %vm1138 = vcmask 64512
        %1139 = vst.msk [vmem:[#allocation3] sm:$0xff] %vm1138, %v1012
        %1140 = vst.msk [vmem:[#allocation3 + $0x8] sm:$0xff] %vm1138, %v1015
        %1141 = vst.msk [vmem:[#allocation3 + $0x10] sm:$0xff] %vm1138, %v1020
        %1142 = vst.msk [vmem:[#allocation3 + $0x18] sm:$0xff] %vm1138, %v1023
        %1143 = vst.msk [vmem:[#allocation3 + $0x20] sm:$0xff] %vm1138, %v1028
        %1144 = vst.msk [vmem:[#allocation3 + $0x28] sm:$0xff] %vm1138, %v1031
        %1145 = vst.msk [vmem:[#allocation3 + $0x30] sm:$0xff] %vm1138, %v1036
        %1146 = vst.msk [vmem:[#allocation3 + $0x38] sm:$0xff] %vm1138, %v1039
        %1147 = vst.msk [vmem:[#allocation3 + $0x40] sm:$0xff] %vm1138, %v1044
        %1148 = vst.msk [vmem:[#allocation3 + $0x48] sm:$0xff] %vm1138, %v1047
        %1149 = vst.msk [vmem:[#allocation3 + $0x50] sm:$0xff] %vm1138, %v1052
        %1150 = vst.msk [vmem:[#allocation3 + $0x58] sm:$0xff] %vm1138, %v1055
        %1151 = vst.msk [vmem:[#allocation3 + $0x60] sm:$0xff] %vm1138, %v1060
        %1152 = vst.msk [vmem:[#allocation3 + $0x68] sm:$0xff] %vm1138, %v1063
        %1153 = vst.msk [vmem:[#allocation3 + $0x70] sm:$0xff] %vm1138, %v1068
        %1154 = vst.msk [vmem:[#allocation3 + $0x78] sm:$0xff] %vm1138, %v1071
        %1155 = vst.msk [vmem:[#allocation3 + $0x80] sm:$0xff] %vm1138, %v1076
        %1156 = vst.msk [vmem:[#allocation3 + $0x88] sm:$0xff] %vm1138, %v1079
        %1157 = vst.msk [vmem:[#allocation3 + $0x90] sm:$0xff] %vm1138, %v1084
        %1158 = vst.msk [vmem:[#allocation3 + $0x98] sm:$0xff] %vm1138, %v1087
        %1159 = vst.msk [vmem:[#allocation3 + $0xa0] sm:$0xff] %vm1138, %v1092
        %1160 = vst.msk [vmem:[#allocation3 + $0xa8] sm:$0xff] %vm1138, %v1095
        %1161 = vst.msk [vmem:[#allocation3 + $0xb0] sm:$0xff] %vm1138, %v1100
        %1162 = vst.msk [vmem:[#allocation3 + $0xb8] sm:$0xff] %vm1138, %v1103
        %1163 = vst.msk [vmem:[#allocation3 + $0xc0] sm:$0xff] %vm1138, %v1108
        %1164 = vst.msk [vmem:[#allocation3 + $0xc8] sm:$0xff] %vm1138, %v1111
        %1165 = vst.msk [vmem:[#allocation3 + $0xd0] sm:$0xff] %vm1138, %v1116
        %1166 = vst.msk [vmem:[#allocation3 + $0xd8] sm:$0xff] %vm1138, %v1119
        %1167 = vst.msk [vmem:[#allocation3 + $0xe0] sm:$0xff] %vm1138, %v1124
        %1168 = vst.msk [vmem:[#allocation3 + $0xe8] sm:$0xff] %vm1138, %v1127
        %1169 = vst.msk [vmem:[#allocation3 + $0xf0] sm:$0xff] %vm1138, %v1132
        %1170 = vst.msk [vmem:[#allocation3 + $0xf8] sm:$0xff] %vm1138, %v1135
        %s1171 = sadd.s32 %s893, 1
        %s1172 = smul.addr %s1171, 8
        %s1173 = scalar_lea.vmem [#allocation2], %s1172
        %v1174 = vld [vmem:[%s1173] sm:$0xff]
        %v1175 = vld [vmem:[%s1173 + $0x8] sm:$0xff]
        %v1176 = vld [vmem:[%s1173 + $0x10] sm:$0xff]
        %v1177 = vld [vmem:[%s1173 + $0x18] sm:$0xff]
        %v1178 = vld [vmem:[%s1173 + $0x20] sm:$0xff]
        %v1179 = vld [vmem:[%s1173 + $0x28] sm:$0xff]
        %v1180 = vld [vmem:[%s1173 + $0x30] sm:$0xff]
        %v1181 = vld [vmem:[%s1173 + $0x38] sm:$0xff]
        %v1182 = vld [vmem:[%s1173 + $0x40] sm:$0xff]
        %v1183 = vld [vmem:[%s1173 + $0x48] sm:$0xff]
        %v1184 = vld [vmem:[%s1173 + $0x50] sm:$0xff]
        %v1185 = vld [vmem:[%s1173 + $0x58] sm:$0xff]
        %v1186 = vld [vmem:[%s1173 + $0x60] sm:$0xff]
        %v1187 = vld [vmem:[%s1173 + $0x68] sm:$0xff]
        %v1188 = vld [vmem:[%s1173 + $0x70] sm:$0xff]
        %v1189 = vld [vmem:[%s1173 + $0x78] sm:$0xff]
        %s1190 = scalar_lea.vmem %s2, 12
        %v1191 = vld [vmem:[%s1190] sm:$0xf]
        %v1192 = vld [vmem:[%s1190 + $0x4] sm:$0xf]
        %v1193 = vld [vmem:[%s1190 + $0x8] sm:$0xf]
        %v1197 = vunpack.c.l.b16 %v1191
        %v1198 = vunpack.c.l.b16 %v1192
        %v1199 = vunpack.c.l.b16 %v1193
        %v1200 = vpack.c.b16 %v1198, %v1197
        %v1201 = vpack.c.b16 %v1199, %v1199
        %v1204 = vsel %vm924, %v1174, 0
        %v1207 = vsel %vm924, %v1175, 0
        %v1210 = vsel %vm924, %v1176, 0
        %v1213 = vsel %vm924, %v1177, 0
        %v1216 = vsel %vm924, %v1178, 0
        %v1219 = vsel %vm924, %v1179, 0
        %v1222 = vsel %vm924, %v1180, 0
        %v1225 = vsel %vm924, %v1181, 0
        %v1228 = vsel %vm924, %v1182, 0
        %v1231 = vsel %vm924, %v1183, 0
        %v1234 = vsel %vm924, %v1184, 0
        %v1237 = vsel %vm924, %v1185, 0
        %v1240 = vsel %vm924, %v1186, 0
        %v1243 = vsel %vm924, %v1187, 0
        %v1246 = vsel %vm924, %v1188, 0
        %v1249 = vsel %vm924, %v1189, 0
        %v1252 = vsel %vm973, %v1201, 0
        %1254 = vmatprep.subr.bf16.mxu0 0
        %1255 = vmatpush1.bf16.msra.mxu0 %v1200
        %1256 = vmatprep.subr.bf16.mxu0 0
        %1257 = vmatpush1.bf16.msra.mxu0 %v1252
        %1258 = vmatprep.subr.bf16.mxu0 0
        %1259 = vmatpush1.bf16.msra.mxu0 0
        %1260 = vmatprep.subr.bf16.mxu0 0
        %1261 = vmatpush1.bf16.msra.mxu0 0
        %1262 = vmatprep.subr.bf16.mxu0 0
        %1263 = vmatpush1.bf16.msra.mxu0 0
        %1264 = vmatprep.subr.bf16.mxu0 0
        %1265 = vmatpush1.bf16.msra.mxu0 0
        %1266 = vmatprep.subr.bf16.mxu0 0
        %1267 = vmatpush1.bf16.msra.mxu0 0
        %1268 = vmatprep.subr.bf16.mxu0 0
        %1269 = vmatpush1.bf16.msra.mxu0 0
        %1270 = vmatprep.subr.bf16.mxu0 0
        %1271 = vmatpush1.bf16.msra.mxu0 0
        %1272 = vmatprep.subr.bf16.mxu0 0
        %1273 = vmatpush1.bf16.msra.mxu0 0
        %1274 = vmatprep.subr.bf16.mxu0 0
        %1275 = vmatpush1.bf16.msra.mxu0 0
        %1276 = vmatprep.subr.bf16.mxu0 0
        %1277 = vmatpush1.bf16.msra.mxu0 0
        %1278 = vmatprep.subr.bf16.mxu0 0
        %1279 = vmatpush1.bf16.msra.mxu0 0
        %1280 = vmatprep.subr.bf16.mxu0 0
        %1281 = vmatpush1.bf16.msra.mxu0 0
        %1282 = vmatprep.subr.bf16.mxu0 0
        %1283 = vmatpush1.bf16.msra.mxu0 0
        %1284 = vmatprep.subr.bf16.mxu0 0
        %1285 = vmatpush1.bf16.msra.mxu0 0
        %1286 = vmatprep.mubr.bf16.mxu0 0
        %1287 = vmatmul.mubr.bf16.gmra.mrb[0].mxu0 %v1204
        %v1288 = vpop.f32.mrb[0].mxu0
        %v1289 = vadd.f32 0.0, %v1288
        %v1290 = vpop.f32.mrb[0].mxu0
        %v1291 = vpop.f32.mrb[0].mxu0
        %v1292 = vadd.f32 0.0, %v1291
        %v1293 = vpop.f32.mrb[0].mxu0
        %1294 = vmatprep.mubr.bf16.mxu0 0
        %1295 = vmatmul.mubr.bf16.gmra.mrb[0].mxu0 %v1207
        %v1296 = vpop.f32.mrb[0].mxu0
        %v1297 = vadd.f32 0.0, %v1296
        %v1298 = vpop.f32.mrb[0].mxu0
        %v1299 = vpop.f32.mrb[0].mxu0
        %v1300 = vadd.f32 0.0, %v1299
        %v1301 = vpop.f32.mrb[0].mxu0
        %1302 = vmatprep.mubr.bf16.mxu0 0
        %1303 = vmatmul.mubr.bf16.gmra.mrb[0].mxu0 %v1210
        %v1304 = vpop.f32.mrb[0].mxu0
        %v1305 = vadd.f32 0.0, %v1304
        %v1306 = vpop.f32.mrb[0].mxu0
        %v1307 = vpop.f32.mrb[0].mxu0
        %v1308 = vadd.f32 0.0, %v1307
        %v1309 = vpop.f32.mrb[0].mxu0
        %1310 = vmatprep.mubr.bf16.mxu0 0
        %1311 = vmatmul.mubr.bf16.gmra.mrb[0].mxu0 %v1213
        %v1312 = vpop.f32.mrb[0].mxu0
        %v1313 = vadd.f32 0.0, %v1312
        %v1314 = vpop.f32.mrb[0].mxu0
        %v1315 = vpop.f32.mrb[0].mxu0
        %v1316 = vadd.f32 0.0, %v1315
        %v1317 = vpop.f32.mrb[0].mxu0
        %1318 = vmatprep.mubr.bf16.mxu0 0
        %1319 = vmatmul.mubr.bf16.gmra.mrb[0].mxu0 %v1216
        %v1320 = vpop.f32.mrb[0].mxu0
        %v1321 = vadd.f32 0.0, %v1320
        %v1322 = vpop.f32.mrb[0].mxu0
        %v1323 = vpop.f32.mrb[0].mxu0
        %v1324 = vadd.f32 0.0, %v1323
        %v1325 = vpop.f32.mrb[0].mxu0
        %1326 = vmatprep.mubr.bf16.mxu0 0
        %1327 = vmatmul.mubr.bf16.gmra.mrb[0].mxu0 %v1219
        %v1328 = vpop.f32.mrb[0].mxu0
        %v1329 = vadd.f32 0.0, %v1328
        %v1330 = vpop.f32.mrb[0].mxu0
        %v1331 = vpop.f32.mrb[0].mxu0
        %v1332 = vadd.f32 0.0, %v1331
        %v1333 = vpop.f32.mrb[0].mxu0
        %1334 = vmatprep.mubr.bf16.mxu0 0
        %1335 = vmatmul.mubr.bf16.gmra.mrb[0].mxu0 %v1222
        %v1336 = vpop.f32.mrb[0].mxu0
        %v1337 = vadd.f32 0.0, %v1336
        %v1338 = vpop.f32.mrb[0].mxu0
        %v1339 = vpop.f32.mrb[0].mxu0
        %v1340 = vadd.f32 0.0, %v1339
        %v1341 = vpop.f32.mrb[0].mxu0
        %1342 = vmatprep.mubr.bf16.mxu0 0
        %1343 = vmatmul.mubr.bf16.gmra.mrb[0].mxu0 %v1225
        %v1344 = vpop.f32.mrb[0].mxu0
        %v1345 = vadd.f32 0.0, %v1344
        %v1346 = vpop.f32.mrb[0].mxu0
        %v1347 = vpop.f32.mrb[0].mxu0
        %v1348 = vadd.f32 0.0, %v1347
        %v1349 = vpop.f32.mrb[0].mxu0
        %1350 = vmatprep.mubr.bf16.mxu0 0
        %1351 = vmatmul.mubr.bf16.gmra.mrb[0].mxu0 %v1228
        %v1352 = vpop.f32.mrb[0].mxu0
        %v1353 = vadd.f32 0.0, %v1352
        %v1354 = vpop.f32.mrb[0].mxu0
        %v1355 = vpop.f32.mrb[0].mxu0
        %v1356 = vadd.f32 0.0, %v1355
        %v1357 = vpop.f32.mrb[0].mxu0
        %1358 = vmatprep.mubr.bf16.mxu0 0
        %1359 = vmatmul.mubr.bf16.gmra.mrb[0].mxu0 %v1231
        %v1360 = vpop.f32.mrb[0].mxu0
        %v1361 = vadd.f32 0.0, %v1360
        %v1362 = vpop.f32.mrb[0].mxu0
        %v1363 = vpop.f32.mrb[0].mxu0
        %v1364 = vadd.f32 0.0, %v1363
        %v1365 = vpop.f32.mrb[0].mxu0
        %1366 = vmatprep.mubr.bf16.mxu0 0
        %1367 = vmatmul.mubr.bf16.gmra.mrb[0].mxu0 %v1234
        %v1368 = vpop.f32.mrb[0].mxu0
        %v1369 = vadd.f32 0.0, %v1368
        %v1370 = vpop.f32.mrb[0].mxu0
        %v1371 = vpop.f32.mrb[0].mxu0
        %v1372 = vadd.f32 0.0, %v1371
        %v1373 = vpop.f32.mrb[0].mxu0
        %1374 = vmatprep.mubr.bf16.mxu0 0
        %1375 = vmatmul.mubr.bf16.gmra.mrb[0].mxu0 %v1237
        %v1376 = vpop.f32.mrb[0].mxu0
        %v1377 = vadd.f32 0.0, %v1376
        %v1378 = vpop.f32.mrb[0].mxu0
        %v1379 = vpop.f32.mrb[0].mxu0
        %v1380 = vadd.f32 0.0, %v1379
        %v1381 = vpop.f32.mrb[0].mxu0
        %1382 = vmatprep.mubr.bf16.mxu0 0
        %1383 = vmatmul.mubr.bf16.gmra.mrb[0].mxu0 %v1240
        %v1384 = vpop.f32.mrb[0].mxu0
        %v1385 = vadd.f32 0.0, %v1384
        %v1386 = vpop.f32.mrb[0].mxu0
        %v1387 = vpop.f32.mrb[0].mxu0
        %v1388 = vadd.f32 0.0, %v1387
        %v1389 = vpop.f32.mrb[0].mxu0
        %1390 = vmatprep.mubr.bf16.mxu0 0
        %1391 = vmatmul.mubr.bf16.gmra.mrb[0].mxu0 %v1243
        %v1392 = vpop.f32.mrb[0].mxu0
        %v1393 = vadd.f32 0.0, %v1392
        %v1394 = vpop.f32.mrb[0].mxu0
        %v1395 = vpop.f32.mrb[0].mxu0
        %v1396 = vadd.f32 0.0, %v1395
        %v1397 = vpop.f32.mrb[0].mxu0
        %1398 = vmatprep.mubr.bf16.mxu0 0
        %1399 = vmatmul.mubr.bf16.gmra.mrb[0].mxu0 %v1246
        %v1400 = vpop.f32.mrb[0].mxu0
        %v1401 = vadd.f32 0.0, %v1400
        %v1402 = vpop.f32.mrb[0].mxu0
        %v1403 = vpop.f32.mrb[0].mxu0
        %v1404 = vadd.f32 0.0, %v1403
        %v1405 = vpop.f32.mrb[0].mxu0
        %1406 = vmatprep.mubr.bf16.mxu0 0
        %1407 = vmatmul.mubr.bf16.gmra.mrb[0].mxu0 %v1249
        %v1408 = vpop.f32.mrb[0].mxu0
        %v1409 = vadd.f32 0.0, %v1408
        %v1410 = vpop.f32.mrb[0].mxu0
        %v1411 = vpop.f32.mrb[0].mxu0
        %v1412 = vadd.f32 0.0, %v1411
        %v1413 = vpop.f32.mrb[0].mxu0
        %1414 = vdwg.mxu0
        %v1415 = vld [vmem:[#allocation3] sm:$0xff]
        %v1416 = vld [vmem:[#allocation3 + $0x8] sm:$0xff]
        %v1417 = vld [vmem:[#allocation3 + $0x10] sm:$0xff]
        %v1418 = vld [vmem:[#allocation3 + $0x18] sm:$0xff]
        %v1419 = vld [vmem:[#allocation3 + $0x20] sm:$0xff]
        %v1420 = vld [vmem:[#allocation3 + $0x28] sm:$0xff]
        %v1421 = vld [vmem:[#allocation3 + $0x30] sm:$0xff]
        %v1422 = vld [vmem:[#allocation3 + $0x38] sm:$0xff]
        %v1423 = vld [vmem:[#allocation3 + $0x40] sm:$0xff]
        %v1424 = vld [vmem:[#allocation3 + $0x48] sm:$0xff]
        %v1425 = vld [vmem:[#allocation3 + $0x50] sm:$0xff]
        %v1426 = vld [vmem:[#allocation3 + $0x58] sm:$0xff]
        %v1427 = vld [vmem:[#allocation3 + $0x60] sm:$0xff]
        %v1428 = vld [vmem:[#allocation3 + $0x68] sm:$0xff]
        %v1429 = vld [vmem:[#allocation3 + $0x70] sm:$0xff]
        %v1430 = vld [vmem:[#allocation3 + $0x78] sm:$0xff]
        %v1431 = vld [vmem:[#allocation3 + $0x80] sm:$0xff]
        %v1432 = vld [vmem:[#allocation3 + $0x88] sm:$0xff]
        %v1433 = vld [vmem:[#allocation3 + $0x90] sm:$0xff]
        %v1434 = vld [vmem:[#allocation3 + $0x98] sm:$0xff]
        %v1435 = vld [vmem:[#allocation3 + $0xa0] sm:$0xff]
        %v1436 = vld [vmem:[#allocation3 + $0xa8] sm:$0xff]
        %v1437 = vld [vmem:[#allocation3 + $0xb0] sm:$0xff]
        %v1438 = vld [vmem:[#allocation3 + $0xb8] sm:$0xff]
        %v1439 = vld [vmem:[#allocation3 + $0xc0] sm:$0xff]
        %v1440 = vld [vmem:[#allocation3 + $0xc8] sm:$0xff]
        %v1441 = vld [vmem:[#allocation3 + $0xd0] sm:$0xff]
        %v1442 = vld [vmem:[#allocation3 + $0xd8] sm:$0xff]
        %v1443 = vld [vmem:[#allocation3 + $0xe0] sm:$0xff]
        %v1444 = vld [vmem:[#allocation3 + $0xe8] sm:$0xff]
        %v1445 = vld [vmem:[#allocation3 + $0xf0] sm:$0xff]
        %v1446 = vld [vmem:[#allocation3 + $0xf8] sm:$0xff]
        %v1447 = vadd.f32 %v1415, %v1289
        %v1448 = vadd.f32 %v1416, %v1292
        %v1449 = vadd.f32 %v1417, %v1297
        %v1450 = vadd.f32 %v1418, %v1300
        %v1451 = vadd.f32 %v1419, %v1305
        %v1452 = vadd.f32 %v1420, %v1308
        %v1453 = vadd.f32 %v1421, %v1313
        %v1454 = vadd.f32 %v1422, %v1316
        %v1455 = vadd.f32 %v1423, %v1321
        %v1456 = vadd.f32 %v1424, %v1324
        %v1457 = vadd.f32 %v1425, %v1329
        %v1458 = vadd.f32 %v1426, %v1332
        %v1459 = vadd.f32 %v1427, %v1337
        %v1460 = vadd.f32 %v1428, %v1340
        %v1461 = vadd.f32 %v1429, %v1345
        %v1462 = vadd.f32 %v1430, %v1348
        %v1463 = vadd.f32 %v1431, %v1353
        %v1464 = vadd.f32 %v1432, %v1356
        %v1465 = vadd.f32 %v1433, %v1361
        %v1466 = vadd.f32 %v1434, %v1364
        %v1467 = vadd.f32 %v1435, %v1369
        %v1468 = vadd.f32 %v1436, %v1372
        %v1469 = vadd.f32 %v1437, %v1377
        %v1470 = vadd.f32 %v1438, %v1380
        %v1471 = vadd.f32 %v1439, %v1385
        %v1472 = vadd.f32 %v1440, %v1388
        %v1473 = vadd.f32 %v1441, %v1393
        %v1474 = vadd.f32 %v1442, %v1396
        %v1475 = vadd.f32 %v1443, %v1401
        %v1476 = vadd.f32 %v1444, %v1404
        %v1477 = vadd.f32 %v1445, %v1409
        %v1478 = vadd.f32 %v1446, %v1412
        %1479 = vst.msk [vmem:[#allocation3] sm:$0xff] %vm1138, %v1447
        %1480 = vst.msk [vmem:[#allocation3 + $0x8] sm:$0xff] %vm1138, %v1448
        %1481 = vst.msk [vmem:[#allocation3 + $0x10] sm:$0xff] %vm1138, %v1449
        %1482 = vst.msk [vmem:[#allocation3 + $0x18] sm:$0xff] %vm1138, %v1450
        %1483 = vst.msk [vmem:[#allocation3 + $0x20] sm:$0xff] %vm1138, %v1451
        %1484 = vst.msk [vmem:[#allocation3 + $0x28] sm:$0xff] %vm1138, %v1452
        %1485 = vst.msk [vmem:[#allocation3 + $0x30] sm:$0xff] %vm1138, %v1453
        %1486 = vst.msk [vmem:[#allocation3 + $0x38] sm:$0xff] %vm1138, %v1454
        %1487 = vst.msk [vmem:[#allocation3 + $0x40] sm:$0xff] %vm1138, %v1455
        %1488 = vst.msk [vmem:[#allocation3 + $0x48] sm:$0xff] %vm1138, %v1456
        %1489 = vst.msk [vmem:[#allocation3 + $0x50] sm:$0xff] %vm1138, %v1457
        %1490 = vst.msk [vmem:[#allocation3 + $0x58] sm:$0xff] %vm1138, %v1458
        %1491 = vst.msk [vmem:[#allocation3 + $0x60] sm:$0xff] %vm1138, %v1459
        %1492 = vst.msk [vmem:[#allocation3 + $0x68] sm:$0xff] %vm1138, %v1460
        %1493 = vst.msk [vmem:[#allocation3 + $0x70] sm:$0xff] %vm1138, %v1461
        %1494 = vst.msk [vmem:[#allocation3 + $0x78] sm:$0xff] %vm1138, %v1462
        %1495 = vst.msk [vmem:[#allocation3 + $0x80] sm:$0xff] %vm1138, %v1463
        %1496 = vst.msk [vmem:[#allocation3 + $0x88] sm:$0xff] %vm1138, %v1464
        %1497 = vst.msk [vmem:[#allocation3 + $0x90] sm:$0xff] %vm1138, %v1465
        %1498 = vst.msk [vmem:[#allocation3 + $0x98] sm:$0xff] %vm1138, %v1466
        %1499 = vst.msk [vmem:[#allocation3 + $0xa0] sm:$0xff] %vm1138, %v1467
        %1500 = vst.msk [vmem:[#allocation3 + $0xa8] sm:$0xff] %vm1138, %v1468
        %1501 = vst.msk [vmem:[#allocation3 + $0xb0] sm:$0xff] %vm1138, %v1469
        %1502 = vst.msk [vmem:[#allocation3 + $0xb8] sm:$0xff] %vm1138, %v1470
        %1503 = vst.msk [vmem:[#allocation3 + $0xc0] sm:$0xff] %vm1138, %v1471
        %1504 = vst.msk [vmem:[#allocation3 + $0xc8] sm:$0xff] %vm1138, %v1472
        %1505 = vst.msk [vmem:[#allocation3 + $0xd0] sm:$0xff] %vm1138, %v1473
        %1506 = vst.msk [vmem:[#allocation3 + $0xd8] sm:$0xff] %vm1138, %v1474
        %1507 = vst.msk [vmem:[#allocation3 + $0xe0] sm:$0xff] %vm1138, %v1475
        %1508 = vst.msk [vmem:[#allocation3 + $0xe8] sm:$0xff] %vm1138, %v1476
        %1509 = vst.msk [vmem:[#allocation3 + $0xf0] sm:$0xff] %vm1138, %v1477
        %1510 = vst.msk [vmem:[#allocation3 + $0xf8] sm:$0xff] %vm1138, %v1478
        %s1511 = sadd.s32 %s893, 2
        %s1512 = smul.addr %s1511, 8
        %s1513 = scalar_lea.vmem [#allocation2], %s1512
        %v1514 = vld [vmem:[%s1513] sm:$0xff]
        %v1515 = vld [vmem:[%s1513 + $0x8] sm:$0xff]
        %v1516 = vld [vmem:[%s1513 + $0x10] sm:$0xff]
        %v1517 = vld [vmem:[%s1513 + $0x18] sm:$0xff]
        %v1518 = vld [vmem:[%s1513 + $0x20] sm:$0xff]
        %v1519 = vld [vmem:[%s1513 + $0x28] sm:$0xff]
        %v1520 = vld [vmem:[%s1513 + $0x30] sm:$0xff]
        %v1521 = vld [vmem:[%s1513 + $0x38] sm:$0xff]
        %v1522 = vld [vmem:[%s1513 + $0x40] sm:$0xff]
        %v1523 = vld [vmem:[%s1513 + $0x48] sm:$0xff]
        %v1524 = vld [vmem:[%s1513 + $0x50] sm:$0xff]
        %v1525 = vld [vmem:[%s1513 + $0x58] sm:$0xff]
        %v1526 = vld [vmem:[%s1513 + $0x60] sm:$0xff]
        %v1527 = vld [vmem:[%s1513 + $0x68] sm:$0xff]
        %v1528 = vld [vmem:[%s1513 + $0x70] sm:$0xff]
        %v1529 = vld [vmem:[%s1513 + $0x78] sm:$0xff]
        %s1530 = scalar_lea.vmem %s2, 24
        %v1531 = vld [vmem:[%s1530] sm:$0xf]
        %v1532 = vld [vmem:[%s1530 + $0x4] sm:$0xf]
        %v1533 = vld [vmem:[%s1530 + $0x8] sm:$0xf]
        %v1537 = vunpack.c.l.b16 %v1531
        %v1538 = vunpack.c.l.b16 %v1532
        %v1539 = vunpack.c.l.b16 %v1533
        %v1540 = vpack.c.b16 %v1538, %v1537
        %v1541 = vpack.c.b16 %v1539, %v1539
        %v1544 = vsel %vm924, %v1514, 0
        %v1547 = vsel %vm924, %v1515, 0
        %v1550 = vsel %vm924, %v1516, 0
        %v1553 = vsel %vm924, %v1517, 0
        %v1556 = vsel %vm924, %v1518, 0
        %v1559 = vsel %vm924, %v1519, 0
        %v1562 = vsel %vm924, %v1520, 0
        %v1565 = vsel %vm924, %v1521, 0
        %v1568 = vsel %vm924, %v1522, 0
        %v1571 = vsel %vm924, %v1523, 0
        %v1574 = vsel %vm924, %v1524, 0
        %v1577 = vsel %vm924, %v1525, 0
        %v1580 = vsel %vm924, %v1526, 0
        %v1583 = vsel %vm924, %v1527, 0
        %v1586 = vsel %vm924, %v1528, 0
        %v1589 = vsel %vm924, %v1529, 0
        %v1592 = vsel %vm973, %v1541, 0
        %1594 = vmatprep.subr.bf16.mxu0 0
        %1595 = vmatpush1.bf16.msra.mxu0 %v1540
        %1596 = vmatprep.subr.bf16.mxu0 0
        %1597 = vmatpush1.bf16.msra.mxu0 %v1592
        %1598 = vmatprep.subr.bf16.mxu0 0
        %1599 = vmatpush1.bf16.msra.mxu0 0
        %1600 = vmatprep.subr.bf16.mxu0 0
        %1601 = vmatpush1.bf16.msra.mxu0 0
        %1602 = vmatprep.subr.bf16.mxu0 0
        %1603 = vmatpush1.bf16.msra.mxu0 0
        %1604 = vmatprep.subr.bf16.mxu0 0
        %1605 = vmatpush1.bf16.msra.mxu0 0
        %1606 = vmatprep.subr.bf16.mxu0 0
        %1607 = vmatpush1.bf16.msra.mxu0 0
        %1608 = vmatprep.subr.bf16.mxu0 0
        %1609 = vmatpush1.bf16.msra.mxu0 0
        %1610 = vmatprep.subr.bf16.mxu0 0
        %1611 = vmatpush1.bf16.msra.mxu0 0
        %1612 = vmatprep.subr.bf16.mxu0 0
        %1613 = vmatpush1.bf16.msra.mxu0 0
        %1614 = vmatprep.subr.bf16.mxu0 0
        %1615 = vmatpush1.bf16.msra.mxu0 0
        %1616 = vmatprep.subr.bf16.mxu0 0
        %1617 = vmatpush1.bf16.msra.mxu0 0
        %1618 = vmatprep.subr.bf16.mxu0 0
        %1619 = vmatpush1.bf16.msra.mxu0 0
        %1620 = vmatprep.subr.bf16.mxu0 0
        %1621 = vmatpush1.bf16.msra.mxu0 0
        %1622 = vmatprep.subr.bf16.mxu0 0
        %1623 = vmatpush1.bf16.msra.mxu0 0
        %1624 = vmatprep.subr.bf16.mxu0 0
        %1625 = vmatpush1.bf16.msra.mxu0 0
        %1626 = vmatprep.mubr.bf16.mxu0 0
        %1627 = vmatmul.mubr.bf16.gmra.mrb[0].mxu0 %v1544
        %v1628 = vpop.f32.mrb[0].mxu0
        %v1629 = vadd.f32 0.0, %v1628
        %v1630 = vpop.f32.mrb[0].mxu0
        %v1631 = vpop.f32.mrb[0].mxu0
        %v1632 = vadd.f32 0.0, %v1631
        %v1633 = vpop.f32.mrb[0].mxu0
        %1634 = vmatprep.mubr.bf16.mxu0 0
        %1635 = vmatmul.mubr.bf16.gmra.mrb[0].mxu0 %v1547
        %v1636 = vpop.f32.mrb[0].mxu0
        %v1637 = vadd.f32 0.0, %v1636
        %v1638 = vpop.f32.mrb[0].mxu0
        %v1639 = vpop.f32.mrb[0].mxu0
        %v1640 = vadd.f32 0.0, %v1639
        %v1641 = vpop.f32.mrb[0].mxu0
        %1642 = vmatprep.mubr.bf16.mxu0 0
        %1643 = vmatmul.mubr.bf16.gmra.mrb[0].mxu0 %v1550
        %v1644 = vpop.f32.mrb[0].mxu0
        %v1645 = vadd.f32 0.0, %v1644
        %v1646 = vpop.f32.mrb[0].mxu0
        %v1647 = vpop.f32.mrb[0].mxu0
        %v1648 = vadd.f32 0.0, %v1647
        %v1649 = vpop.f32.mrb[0].mxu0
        %1650 = vmatprep.mubr.bf16.mxu0 0
        %1651 = vmatmul.mubr.bf16.gmra.mrb[0].mxu0 %v1553
        %v1652 = vpop.f32.mrb[0].mxu0
        %v1653 = vadd.f32 0.0, %v1652
        %v1654 = vpop.f32.mrb[0].mxu0
        %v1655 = vpop.f32.mrb[0].mxu0
        %v1656 = vadd.f32 0.0, %v1655
        %v1657 = vpop.f32.mrb[0].mxu0
        %1658 = vmatprep.mubr.bf16.mxu0 0
        %1659 = vmatmul.mubr.bf16.gmra.mrb[0].mxu0 %v1556
        %v1660 = vpop.f32.mrb[0].mxu0
        %v1661 = vadd.f32 0.0, %v1660
        %v1662 = vpop.f32.mrb[0].mxu0
        %v1663 = vpop.f32.mrb[0].mxu0
        %v1664 = vadd.f32 0.0, %v1663
        %v1665 = vpop.f32.mrb[0].mxu0
        %1666 = vmatprep.mubr.bf16.mxu0 0
        %1667 = vmatmul.mubr.bf16.gmra.mrb[0].mxu0 %v1559
        %v1668 = vpop.f32.mrb[0].mxu0
        %v1669 = vadd.f32 0.0, %v1668
        %v1670 = vpop.f32.mrb[0].mxu0
        %v1671 = vpop.f32.mrb[0].mxu0
        %v1672 = vadd.f32 0.0, %v1671
        %v1673 = vpop.f32.mrb[0].mxu0
        %1674 = vmatprep.mubr.bf16.mxu0 0
        %1675 = vmatmul.mubr.bf16.gmra.mrb[0].mxu0 %v1562
        %v1676 = vpop.f32.mrb[0].mxu0
        %v1677 = vadd.f32 0.0, %v1676
        %v1678 = vpop.f32.mrb[0].mxu0
        %v1679 = vpop.f32.mrb[0].mxu0
        %v1680 = vadd.f32 0.0, %v1679
        %v1681 = vpop.f32.mrb[0].mxu0
        %1682 = vmatprep.mubr.bf16.mxu0 0
        %1683 = vmatmul.mubr.bf16.gmra.mrb[0].mxu0 %v1565
        %v1684 = vpop.f32.mrb[0].mxu0
        %v1685 = vadd.f32 0.0, %v1684
        %v1686 = vpop.f32.mrb[0].mxu0
        %v1687 = vpop.f32.mrb[0].mxu0
        %v1688 = vadd.f32 0.0, %v1687
        %v1689 = vpop.f32.mrb[0].mxu0
        %1690 = vmatprep.mubr.bf16.mxu0 0
        %1691 = vmatmul.mubr.bf16.gmra.mrb[0].mxu0 %v1568
        %v1692 = vpop.f32.mrb[0].mxu0
        %v1693 = vadd.f32 0.0, %v1692
        %v1694 = vpop.f32.mrb[0].mxu0
        %v1695 = vpop.f32.mrb[0].mxu0
        %v1696 = vadd.f32 0.0, %v1695
        %v1697 = vpop.f32.mrb[0].mxu0
        %1698 = vmatprep.mubr.bf16.mxu0 0
        %1699 = vmatmul.mubr.bf16.gmra.mrb[0].mxu0 %v1571
        %v1700 = vpop.f32.mrb[0].mxu0
        %v1701 = vadd.f32 0.0, %v1700
        %v1702 = vpop.f32.mrb[0].mxu0
        %v1703 = vpop.f32.mrb[0].mxu0
        %v1704 = vadd.f32 0.0, %v1703
        %v1705 = vpop.f32.mrb[0].mxu0
        %1706 = vmatprep.mubr.bf16.mxu0 0
        %1707 = vmatmul.mubr.bf16.gmra.mrb[0].mxu0 %v1574
        %v1708 = vpop.f32.mrb[0].mxu0
        %v1709 = vadd.f32 0.0, %v1708
        %v1710 = vpop.f32.mrb[0].mxu0
        %v1711 = vpop.f32.mrb[0].mxu0
        %v1712 = vadd.f32 0.0, %v1711
        %v1713 = vpop.f32.mrb[0].mxu0
        %1714 = vmatprep.mubr.bf16.mxu0 0
        %1715 = vmatmul.mubr.bf16.gmra.mrb[0].mxu0 %v1577
        %v1716 = vpop.f32.mrb[0].mxu0
        %v1717 = vadd.f32 0.0, %v1716
        %v1718 = vpop.f32.mrb[0].mxu0
        %v1719 = vpop.f32.mrb[0].mxu0
        %v1720 = vadd.f32 0.0, %v1719
        %v1721 = vpop.f32.mrb[0].mxu0
        %1722 = vmatprep.mubr.bf16.mxu0 0
        %1723 = vmatmul.mubr.bf16.gmra.mrb[0].mxu0 %v1580
        %v1724 = vpop.f32.mrb[0].mxu0
        %v1725 = vadd.f32 0.0, %v1724
        %v1726 = vpop.f32.mrb[0].mxu0
        %v1727 = vpop.f32.mrb[0].mxu0
        %v1728 = vadd.f32 0.0, %v1727
        %v1729 = vpop.f32.mrb[0].mxu0
        %1730 = vmatprep.mubr.bf16.mxu0 0
        %1731 = vmatmul.mubr.bf16.gmra.mrb[0].mxu0 %v1583
        %v1732 = vpop.f32.mrb[0].mxu0
        %v1733 = vadd.f32 0.0, %v1732
        %v1734 = vpop.f32.mrb[0].mxu0
        %v1735 = vpop.f32.mrb[0].mxu0
        %v1736 = vadd.f32 0.0, %v1735
        %v1737 = vpop.f32.mrb[0].mxu0
        %1738 = vmatprep.mubr.bf16.mxu0 0
        %1739 = vmatmul.mubr.bf16.gmra.mrb[0].mxu0 %v1586
        %v1740 = vpop.f32.mrb[0].mxu0
        %v1741 = vadd.f32 0.0, %v1740
        %v1742 = vpop.f32.mrb[0].mxu0
        %v1743 = vpop.f32.mrb[0].mxu0
        %v1744 = vadd.f32 0.0, %v1743
        %v1745 = vpop.f32.mrb[0].mxu0
        %1746 = vmatprep.mubr.bf16.mxu0 0
        %1747 = vmatmul.mubr.bf16.gmra.mrb[0].mxu0 %v1589
        %v1748 = vpop.f32.mrb[0].mxu0
        %v1749 = vadd.f32 0.0, %v1748
        %v1750 = vpop.f32.mrb[0].mxu0
        %v1751 = vpop.f32.mrb[0].mxu0
        %v1752 = vadd.f32 0.0, %v1751
        %v1753 = vpop.f32.mrb[0].mxu0
        %1754 = vdwg.mxu0
        %v1755 = vld [vmem:[#allocation3] sm:$0xff]
        %v1756 = vld [vmem:[#allocation3 + $0x8] sm:$0xff]
        %v1757 = vld [vmem:[#allocation3 + $0x10] sm:$0xff]
        %v1758 = vld [vmem:[#allocation3 + $0x18] sm:$0xff]
        %v1759 = vld [vmem:[#allocation3 + $0x20] sm:$0xff]
        %v1760 = vld [vmem:[#allocation3 + $0x28] sm:$0xff]
        %v1761 = vld [vmem:[#allocation3 + $0x30] sm:$0xff]
        %v1762 = vld [vmem:[#allocation3 + $0x38] sm:$0xff]
        %v1763 = vld [vmem:[#allocation3 + $0x40] sm:$0xff]
        %v1764 = vld [vmem:[#allocation3 + $0x48] sm:$0xff]
        %v1765 = vld [vmem:[#allocation3 + $0x50] sm:$0xff]
        %v1766 = vld [vmem:[#allocation3 + $0x58] sm:$0xff]
        %v1767 = vld [vmem:[#allocation3 + $0x60] sm:$0xff]
        %v1768 = vld [vmem:[#allocation3 + $0x68] sm:$0xff]
        %v1769 = vld [vmem:[#allocation3 + $0x70] sm:$0xff]
        %v1770 = vld [vmem:[#allocation3 + $0x78] sm:$0xff]
        %v1771 = vld [vmem:[#allocation3 + $0x80] sm:$0xff]
        %v1772 = vld [vmem:[#allocation3 + $0x88] sm:$0xff]
        %v1773 = vld [vmem:[#allocation3 + $0x90] sm:$0xff]
        %v1774 = vld [vmem:[#allocation3 + $0x98] sm:$0xff]
        %v1775 = vld [vmem:[#allocation3 + $0xa0] sm:$0xff]
        %v1776 = vld [vmem:[#allocation3 + $0xa8] sm:$0xff]
        %v1777 = vld [vmem:[#allocation3 + $0xb0] sm:$0xff]
        %v1778 = vld [vmem:[#allocation3 + $0xb8] sm:$0xff]
        %v1779 = vld [vmem:[#allocation3 + $0xc0] sm:$0xff]
        %v1780 = vld [vmem:[#allocation3 + $0xc8] sm:$0xff]
        %v1781 = vld [vmem:[#allocation3 + $0xd0] sm:$0xff]
        %v1782 = vld [vmem:[#allocation3 + $0xd8] sm:$0xff]
        %v1783 = vld [vmem:[#allocation3 + $0xe0] sm:$0xff]
        %v1784 = vld [vmem:[#allocation3 + $0xe8] sm:$0xff]
        %v1785 = vld [vmem:[#allocation3 + $0xf0] sm:$0xff]
        %v1786 = vld [vmem:[#allocation3 + $0xf8] sm:$0xff]
        %v1787 = vadd.f32 %v1755, %v1629
        %v1788 = vadd.f32 %v1756, %v1632
        %v1789 = vadd.f32 %v1757, %v1637
        %v1790 = vadd.f32 %v1758, %v1640
        %v1791 = vadd.f32 %v1759, %v1645
        %v1792 = vadd.f32 %v1760, %v1648
        %v1793 = vadd.f32 %v1761, %v1653
        %v1794 = vadd.f32 %v1762, %v1656
        %v1795 = vadd.f32 %v1763, %v1661
        %v1796 = vadd.f32 %v1764, %v1664
        %v1797 = vadd.f32 %v1765, %v1669
        %v1798 = vadd.f32 %v1766, %v1672
        %v1799 = vadd.f32 %v1767, %v1677
        %v1800 = vadd.f32 %v1768, %v1680
        %v1801 = vadd.f32 %v1769, %v1685
        %v1802 = vadd.f32 %v1770, %v1688
        %v1803 = vadd.f32 %v1771, %v1693
        %v1804 = vadd.f32 %v1772, %v1696
        %v1805 = vadd.f32 %v1773, %v1701
        %v1806 = vadd.f32 %v1774, %v1704
        %v1807 = vadd.f32 %v1775, %v1709
        %v1808 = vadd.f32 %v1776, %v1712
        %v1809 = vadd.f32 %v1777, %v1717
        %v1810 = vadd.f32 %v1778, %v1720
        %v1811 = vadd.f32 %v1779, %v1725
        %v1812 = vadd.f32 %v1780, %v1728
        %v1813 = vadd.f32 %v1781, %v1733
        %v1814 = vadd.f32 %v1782, %v1736
        %v1815 = vadd.f32 %v1783, %v1741
        %v1816 = vadd.f32 %v1784, %v1744
        %v1817 = vadd.f32 %v1785, %v1749
        %v1818 = vadd.f32 %v1786, %v1752
        %1819 = vst.msk [vmem:[#allocation3] sm:$0xff] %vm1138, %v1787
        %1820 = vst.msk [vmem:[#allocation3 + $0x8] sm:$0xff] %vm1138, %v1788
        %1821 = vst.msk [vmem:[#allocation3 + $0x10] sm:$0xff] %vm1138, %v1789
        %1822 = vst.msk [vmem:[#allocation3 + $0x18] sm:$0xff] %vm1138, %v1790
        %1823 = vst.msk [vmem:[#allocation3 + $0x20] sm:$0xff] %vm1138, %v1791
        %1824 = vst.msk [vmem:[#allocation3 + $0x28] sm:$0xff] %vm1138, %v1792
        %1825 = vst.msk [vmem:[#allocation3 + $0x30] sm:$0xff] %vm1138, %v1793
        %1826 = vst.msk [vmem:[#allocation3 + $0x38] sm:$0xff] %vm1138, %v1794
        %1827 = vst.msk [vmem:[#allocation3 + $0x40] sm:$0xff] %vm1138, %v1795
        %1828 = vst.msk [vmem:[#allocation3 + $0x48] sm:$0xff] %vm1138, %v1796
        %1829 = vst.msk [vmem:[#allocation3 + $0x50] sm:$0xff] %vm1138, %v1797
        %1830 = vst.msk [vmem:[#allocation3 + $0x58] sm:$0xff] %vm1138, %v1798
        %1831 = vst.msk [vmem:[#allocation3 + $0x60] sm:$0xff] %vm1138, %v1799
        %1832 = vst.msk [vmem:[#allocation3 + $0x68] sm:$0xff] %vm1138, %v1800
        %1833 = vst.msk [vmem:[#allocation3 + $0x70] sm:$0xff] %vm1138, %v1801
        %1834 = vst.msk [vmem:[#allocation3 + $0x78] sm:$0xff] %vm1138, %v1802
        %1835 = vst.msk [vmem:[#allocation3 + $0x80] sm:$0xff] %vm1138, %v1803
        %1836 = vst.msk [vmem:[#allocation3 + $0x88] sm:$0xff] %vm1138, %v1804
        %1837 = vst.msk [vmem:[#allocation3 + $0x90] sm:$0xff] %vm1138, %v1805
        %1838 = vst.msk [vmem:[#allocation3 + $0x98] sm:$0xff] %vm1138, %v1806
        %1839 = vst.msk [vmem:[#allocation3 + $0xa0] sm:$0xff] %vm1138, %v1807
        %1840 = vst.msk [vmem:[#allocation3 + $0xa8] sm:$0xff] %vm1138, %v1808
        %1841 = vst.msk [vmem:[#allocation3 + $0xb0] sm:$0xff] %vm1138, %v1809
        %1842 = vst.msk [vmem:[#allocation3 + $0xb8] sm:$0xff] %vm1138, %v1810
        %1843 = vst.msk [vmem:[#allocation3 + $0xc0] sm:$0xff] %vm1138, %v1811
        %1844 = vst.msk [vmem:[#allocation3 + $0xc8] sm:$0xff] %vm1138, %v1812
        %1845 = vst.msk [vmem:[#allocation3 + $0xd0] sm:$0xff] %vm1138, %v1813
        %1846 = vst.msk [vmem:[#allocation3 + $0xd8] sm:$0xff] %vm1138, %v1814
        %1847 = vst.msk [vmem:[#allocation3 + $0xe0] sm:$0xff] %vm1138, %v1815
        %1848 = vst.msk [vmem:[#allocation3 + $0xe8] sm:$0xff] %vm1138, %v1816
        %1849 = vst.msk [vmem:[#allocation3 + $0xf0] sm:$0xff] %vm1138, %v1817
        %1850 = vst.msk [vmem:[#allocation3 + $0xf8] sm:$0xff] %vm1138, %v1818
        %v1851 = vld [vmem:[#allocation3] sm:$0xff]
        %v1852 = vld [vmem:[#allocation3 + $0x8] sm:$0xff]
        %v1853 = vld [vmem:[#allocation3 + $0x10] sm:$0xff]
        %v1854 = vld [vmem:[#allocation3 + $0x18] sm:$0xff]
        %v1855 = vld [vmem:[#allocation3 + $0x20] sm:$0xff]
        %v1856 = vld [vmem:[#allocation3 + $0x28] sm:$0xff]
        %v1857 = vld [vmem:[#allocation3 + $0x30] sm:$0xff]
        %v1858 = vld [vmem:[#allocation3 + $0x38] sm:$0xff]
        %v1859 = vld [vmem:[#allocation3 + $0x40] sm:$0xff]
        %v1860 = vld [vmem:[#allocation3 + $0x48] sm:$0xff]
        %v1861 = vld [vmem:[#allocation3 + $0x50] sm:$0xff]
        %v1862 = vld [vmem:[#allocation3 + $0x58] sm:$0xff]
        %v1863 = vld [vmem:[#allocation3 + $0x60] sm:$0xff]
        %v1864 = vld [vmem:[#allocation3 + $0x68] sm:$0xff]
        %v1865 = vld [vmem:[#allocation3 + $0x70] sm:$0xff]
        %v1866 = vld [vmem:[#allocation3 + $0x78] sm:$0xff]
        %v1867 = vld [vmem:[#allocation3 + $0x80] sm:$0xff]
        %v1868 = vld [vmem:[#allocation3 + $0x88] sm:$0xff]
        %v1869 = vld [vmem:[#allocation3 + $0x90] sm:$0xff]
        %v1870 = vld [vmem:[#allocation3 + $0x98] sm:$0xff]
        %v1871 = vld [vmem:[#allocation3 + $0xa0] sm:$0xff]
        %v1872 = vld [vmem:[#allocation3 + $0xa8] sm:$0xff]
        %v1873 = vld [vmem:[#allocation3 + $0xb0] sm:$0xff]
        %v1874 = vld [vmem:[#allocation3 + $0xb8] sm:$0xff]
        %v1875 = vld [vmem:[#allocation3 + $0xc0] sm:$0xff]
        %v1876 = vld [vmem:[#allocation3 + $0xc8] sm:$0xff]
        %v1877 = vld [vmem:[#allocation3 + $0xd0] sm:$0xff]
        %v1878 = vld [vmem:[#allocation3 + $0xd8] sm:$0xff]
        %v1879 = vld [vmem:[#allocation3 + $0xe0] sm:$0xff]
        %v1880 = vld [vmem:[#allocation3 + $0xe8] sm:$0xff]
        %v1881 = vld [vmem:[#allocation3 + $0xf0] sm:$0xff]
        %v1882 = vld [vmem:[#allocation3 + $0xf8] sm:$0xff]
        %v1883 = vpack.c.bf16 %v1852, %v1851
        %v1884 = vpack.c.bf16 %v1854, %v1853
        %v1885 = vpack.c.bf16 %v1856, %v1855
        %v1886 = vpack.c.bf16 %v1858, %v1857
        %v1887 = vpack.c.bf16 %v1860, %v1859
        %v1888 = vpack.c.bf16 %v1862, %v1861
        %v1889 = vpack.c.bf16 %v1864, %v1863
        %v1890 = vpack.c.bf16 %v1866, %v1865
        %v1891 = vpack.c.bf16 %v1868, %v1867
        %v1892 = vpack.c.bf16 %v1870, %v1869
        %v1893 = vpack.c.bf16 %v1872, %v1871
        %v1894 = vpack.c.bf16 %v1874, %v1873
        %v1895 = vpack.c.bf16 %v1876, %v1875
        %v1896 = vpack.c.bf16 %v1878, %v1877
        %v1897 = vpack.c.bf16 %v1880, %v1879
        %v1898 = vpack.c.bf16 %v1882, %v1881
        %v1915 = vunpack.c.l.b16 %v1883
        %v1916 = vunpack.c.h.b16 %v1883
        %v1917 = vunpack.c.l.b16 %v1884
        %v1918 = vunpack.c.h.b16 %v1884
        %v1919 = vunpack.c.l.b16 %v1885
        %v1920 = vunpack.c.h.b16 %v1885
        %v1921 = vunpack.c.l.b16 %v1886
        %v1922 = vunpack.c.h.b16 %v1886
        %v1923 = vunpack.c.l.b16 %v1887
        %v1924 = vunpack.c.h.b16 %v1887
        %v1925 = vunpack.c.l.b16 %v1888
        %v1926 = vunpack.c.h.b16 %v1888
        %v1927 = vunpack.c.l.b16 %v1889
        %v1928 = vunpack.c.h.b16 %v1889
        %v1929 = vunpack.c.l.b16 %v1890
        %v1930 = vunpack.c.h.b16 %v1890
        %v1931 = vunpack.c.l.b16 %v1891
        %v1932 = vunpack.c.h.b16 %v1891
        %v1933 = vunpack.c.l.b16 %v1892
        %v1934 = vunpack.c.h.b16 %v1892
        %v1935 = vunpack.c.l.b16 %v1893
        %v1936 = vunpack.c.h.b16 %v1893
        %v1937 = vunpack.c.l.b16 %v1894
        %v1938 = vunpack.c.h.b16 %v1894
        %v1939 = vunpack.c.l.b16 %v1895
        %v1940 = vunpack.c.h.b16 %v1895
        %v1941 = vunpack.c.l.b16 %v1896
        %v1942 = vunpack.c.h.b16 %v1896
        %v1943 = vunpack.c.l.b16 %v1897
        %v1944 = vunpack.c.h.b16 %v1897
        %v1945 = vunpack.c.l.b16 %v1898
        %v1946 = vunpack.c.h.b16 %v1898
        %v1947 = vpack.c.b16 %v1915, %v1915
        %v1948 = vpack.c.b16 %v1916, %v1916
        %v1949 = vpack.c.b16 %v1917, %v1917
        %v1950 = vpack.c.b16 %v1918, %v1918
        %v1951 = vpack.c.b16 %v1919, %v1919
        %v1952 = vpack.c.b16 %v1920, %v1920
        %v1953 = vpack.c.b16 %v1921, %v1921
        %v1954 = vpack.c.b16 %v1922, %v1922
        %v1955 = vpack.c.b16 %v1923, %v1923
        %v1956 = vpack.c.b16 %v1924, %v1924
        %v1957 = vpack.c.b16 %v1925, %v1925
        %v1958 = vpack.c.b16 %v1926, %v1926
        %v1959 = vpack.c.b16 %v1927, %v1927
        %v1960 = vpack.c.b16 %v1928, %v1928
        %v1961 = vpack.c.b16 %v1929, %v1929
        %v1962 = vpack.c.b16 %v1930, %v1930
        %v1963 = vpack.c.b16 %v1931, %v1931
        %v1964 = vpack.c.b16 %v1932, %v1932
        %v1965 = vpack.c.b16 %v1933, %v1933
        %v1966 = vpack.c.b16 %v1934, %v1934
        %v1967 = vpack.c.b16 %v1935, %v1935
        %v1968 = vpack.c.b16 %v1936, %v1936
        %v1969 = vpack.c.b16 %v1937, %v1937
        %v1970 = vpack.c.b16 %v1938, %v1938
        %v1971 = vpack.c.b16 %v1939, %v1939
        %v1972 = vpack.c.b16 %v1940, %v1940
        %v1973 = vpack.c.b16 %v1941, %v1941
        %v1974 = vpack.c.b16 %v1942, %v1942
        %v1975 = vpack.c.b16 %v1943, %v1943
        %v1976 = vpack.c.b16 %v1944, %v1944
        %v1977 = vpack.c.b16 %v1945, %v1945
        %v1978 = vpack.c.b16 %v1946, %v1946
        %vm2011 = vcmask 60416
        %2012 = vst.msk [vmem:[%s209] sm:$0xf] %vm2011, %v1947
        %2013 = vst.msk [vmem:[%s209 + $0x4] sm:$0xf] %vm2011, %v1948
        %2014 = vst.msk [vmem:[%s209 + $0x8] sm:$0xf] %vm2011, %v1949
        %2015 = vst.msk [vmem:[%s209 + $0xc] sm:$0xf] %vm2011, %v1950
        %2016 = vst.msk [vmem:[%s209 + $0x10] sm:$0xf] %vm2011, %v1951
        %2017 = vst.msk [vmem:[%s209 + $0x14] sm:$0xf] %vm2011, %v1952
        %2018 = vst.msk [vmem:[%s209 + $0x18] sm:$0xf] %vm2011, %v1953
        %2019 = vst.msk [vmem:[%s209 + $0x1c] sm:$0xf] %vm2011, %v1954
        %2020 = vst.msk [vmem:[%s209 + $0x20] sm:$0xf] %vm2011, %v1955
        %2021 = vst.msk [vmem:[%s209 + $0x24] sm:$0xf] %vm2011, %v1956
        %2022 = vst.msk [vmem:[%s209 + $0x28] sm:$0xf] %vm2011, %v1957
        %2023 = vst.msk [vmem:[%s209 + $0x2c] sm:$0xf] %vm2011, %v1958
        %2024 = vst.msk [vmem:[%s209 + $0x30] sm:$0xf] %vm2011, %v1959
        %2025 = vst.msk [vmem:[%s209 + $0x34] sm:$0xf] %vm2011, %v1960
        %2026 = vst.msk [vmem:[%s209 + $0x38] sm:$0xf] %vm2011, %v1961
        %2027 = vst.msk [vmem:[%s209 + $0x3c] sm:$0xf] %vm2011, %v1962
        %2028 = vst.msk [vmem:[%s209 + $0x40] sm:$0xf] %vm2011, %v1963
        %2029 = vst.msk [vmem:[%s209 + $0x44] sm:$0xf] %vm2011, %v1964
        %2030 = vst.msk [vmem:[%s209 + $0x48] sm:$0xf] %vm2011, %v1965
        %2031 = vst.msk [vmem:[%s209 + $0x4c] sm:$0xf] %vm2011, %v1966
        %2032 = vst.msk [vmem:[%s209 + $0x50] sm:$0xf] %vm2011, %v1967
        %2033 = vst.msk [vmem:[%s209 + $0x54] sm:$0xf] %vm2011, %v1968
        %2034 = vst.msk [vmem:[%s209 + $0x58] sm:$0xf] %vm2011, %v1969
        %2035 = vst.msk [vmem:[%s209 + $0x5c] sm:$0xf] %vm2011, %v1970
        %2036 = vst.msk [vmem:[%s209 + $0x60] sm:$0xf] %vm2011, %v1971
        %2037 = vst.msk [vmem:[%s209 + $0x64] sm:$0xf] %vm2011, %v1972
        %2038 = vst.msk [vmem:[%s209 + $0x68] sm:$0xf] %vm2011, %v1973
        %2039 = vst.msk [vmem:[%s209 + $0x6c] sm:$0xf] %vm2011, %v1974
        %2040 = vst.msk [vmem:[%s209 + $0x70] sm:$0xf] %vm2011, %v1975
        %2041 = vst.msk [vmem:[%s209 + $0x74] sm:$0xf] %vm2011, %v1976
        %2042 = vst.msk [vmem:[%s209 + $0x78] sm:$0xf] %vm2011, %v1977
        %2043 = vst.msk [vmem:[%s209 + $0x7c] sm:$0xf] %vm2011, %v1978
        %v2044 = vsel %vm1138, %v1851, 0.0
        %v2045 = vsel %vm1138, %v1852, 0.0
        %v2046 = vadd.f32 %v2044, %v2045
        %v2047 = vsel %vm1138, %v1853, 0.0
        %v2048 = vadd.f32 %v2046, %v2047
        %v2049 = vsel %vm1138, %v1854, 0.0
        %v2050 = vadd.f32 %v2048, %v2049
        %v2051 = vsel %vm1138, %v1855, 0.0
        %v2052 = vadd.f32 %v2050, %v2051
        %v2053 = vsel %vm1138, %v1856, 0.0
        %v2054 = vadd.f32 %v2052, %v2053
        %v2055 = vsel %vm1138, %v1857, 0.0
        %v2056 = vadd.f32 %v2054, %v2055
        %v2057 = vsel %vm1138, %v1858, 0.0
        %v2058 = vadd.f32 %v2056, %v2057
        %v2059 = vsel %vm1138, %v1859, 0.0
        %v2060 = vadd.f32 %v2058, %v2059
        %v2061 = vsel %vm1138, %v1860, 0.0
        %v2062 = vadd.f32 %v2060, %v2061
        %v2063 = vsel %vm1138, %v1861, 0.0
        %v2064 = vadd.f32 %v2062, %v2063
        %v2065 = vsel %vm1138, %v1862, 0.0
        %v2066 = vadd.f32 %v2064, %v2065
        %v2067 = vsel %vm1138, %v1863, 0.0
        %v2068 = vadd.f32 %v2066, %v2067
        %v2069 = vsel %vm1138, %v1864, 0.0
        %v2070 = vadd.f32 %v2068, %v2069
        %v2071 = vsel %vm1138, %v1865, 0.0
        %v2072 = vadd.f32 %v2070, %v2071
        %v2073 = vsel %vm1138, %v1866, 0.0
        %v2074 = vadd.f32 %v2072, %v2073
        %v2075 = vsel %vm1138, %v1867, 0.0
        %v2076 = vadd.f32 %v2074, %v2075
        %v2077 = vsel %vm1138, %v1868, 0.0
        %v2078 = vadd.f32 %v2076, %v2077
        %v2079 = vsel %vm1138, %v1869, 0.0
        %v2080 = vadd.f32 %v2078, %v2079
        %v2081 = vsel %vm1138, %v1870, 0.0
        %v2082 = vadd.f32 %v2080, %v2081
        %v2083 = vsel %vm1138, %v1871, 0.0
        %v2084 = vadd.f32 %v2082, %v2083
        %v2085 = vsel %vm1138, %v1872, 0.0
        %v2086 = vadd.f32 %v2084, %v2085
        %v2087 = vsel %vm1138, %v1873, 0.0
        %v2088 = vadd.f32 %v2086, %v2087
        %v2089 = vsel %vm1138, %v1874, 0.0
        %v2090 = vadd.f32 %v2088, %v2089
        %v2091 = vsel %vm1138, %v1875, 0.0
        %v2092 = vadd.f32 %v2090, %v2091
        %v2093 = vsel %vm1138, %v1876, 0.0
        %v2094 = vadd.f32 %v2092, %v2093
        %v2095 = vsel %vm1138, %v1877, 0.0
        %v2096 = vadd.f32 %v2094, %v2095
        %v2097 = vsel %vm1138, %v1878, 0.0
        %v2098 = vadd.f32 %v2096, %v2097
        %v2099 = vsel %vm1138, %v1879, 0.0
        %v2100 = vadd.f32 %v2098, %v2099
        %v2101 = vsel %vm1138, %v1880, 0.0
        %v2102 = vadd.f32 %v2100, %v2101
        %v2103 = vsel %vm1138, %v1881, 0.0
        %v2104 = vadd.f32 %v2102, %v2103
        %v2105 = vsel %vm1138, %v1882, 0.0
        %v2106 = vadd.f32 %v2104, %v2105
        %v2107 = vrot.slane %v2106, 4
        %v2108 = vadd.f32 %v2106, %v2107
        %v2109 = vrot.slane %v2108, 2
        %v2110 = vadd.f32 %v2108, %v2109
        %v2111 = vrot.slane %v2110, 1
        %v2112 = vadd.f32 %v2110, %v2111
        %vm2113 = vcmask 57344
        %2114 = vst.msk [vmem:[%s194] sm:$0x1] %vm2113, %v2112
        %v2115 = vmul.f32 %v1851, %v1851
        %v2116 = vmul.f32 %v1852, %v1852
        %v2117 = vmul.f32 %v1853, %v1853
        %v2118 = vmul.f32 %v1854, %v1854
        %v2119 = vmul.f32 %v1855, %v1855
        %v2120 = vmul.f32 %v1856, %v1856
        %v2121 = vmul.f32 %v1857, %v1857
        %v2122 = vmul.f32 %v1858, %v1858
        %v2123 = vmul.f32 %v1859, %v1859
        %v2124 = vmul.f32 %v1860, %v1860
        %v2125 = vmul.f32 %v1861, %v1861
        %v2126 = vmul.f32 %v1862, %v1862
        %v2127 = vmul.f32 %v1863, %v1863
        %v2128 = vmul.f32 %v1864, %v1864
        %v2129 = vmul.f32 %v1865, %v1865
        %v2130 = vmul.f32 %v1866, %v1866
        %v2131 = vmul.f32 %v1867, %v1867
        %v2132 = vmul.f32 %v1868, %v1868
        %v2133 = vmul.f32 %v1869, %v1869
        %v2134 = vmul.f32 %v1870, %v1870
        %v2135 = vmul.f32 %v1871, %v1871
        %v2136 = vmul.f32 %v1872, %v1872
        %v2137 = vmul.f32 %v1873, %v1873
        %v2138 = vmul.f32 %v1874, %v1874
        %v2139 = vmul.f32 %v1875, %v1875
        %v2140 = vmul.f32 %v1876, %v1876
        %v2141 = vmul.f32 %v1877, %v1877
        %v2142 = vmul.f32 %v1878, %v1878
        %v2143 = vmul.f32 %v1879, %v1879
        %v2144 = vmul.f32 %v1880, %v1880
        %v2145 = vmul.f32 %v1881, %v1881
        %v2146 = vmul.f32 %v1882, %v1882
        %v2147 = vsel %vm1138, %v2115, 0.0
        %v2148 = vsel %vm1138, %v2116, 0.0
        %v2149 = vadd.f32 %v2147, %v2148
        %v2150 = vsel %vm1138, %v2117, 0.0
        %v2151 = vadd.f32 %v2149, %v2150
        %v2152 = vsel %vm1138, %v2118, 0.0
        %v2153 = vadd.f32 %v2151, %v2152
        %v2154 = vsel %vm1138, %v2119, 0.0
        %v2155 = vadd.f32 %v2153, %v2154
        %v2156 = vsel %vm1138, %v2120, 0.0
        %v2157 = vadd.f32 %v2155, %v2156
        %v2158 = vsel %vm1138, %v2121, 0.0
        %v2159 = vadd.f32 %v2157, %v2158
        %v2160 = vsel %vm1138, %v2122, 0.0
        %v2161 = vadd.f32 %v2159, %v2160
        %v2162 = vsel %vm1138, %v2123, 0.0
        %v2163 = vadd.f32 %v2161, %v2162
        %v2164 = vsel %vm1138, %v2124, 0.0
        %v2165 = vadd.f32 %v2163, %v2164
        %v2166 = vsel %vm1138, %v2125, 0.0
        %v2167 = vadd.f32 %v2165, %v2166
        %v2168 = vsel %vm1138, %v2126, 0.0
        %v2169 = vadd.f32 %v2167, %v2168
        %v2170 = vsel %vm1138, %v2127, 0.0
        %v2171 = vadd.f32 %v2169, %v2170
        %v2172 = vsel %vm1138, %v2128, 0.0
        %v2173 = vadd.f32 %v2171, %v2172
        %v2174 = vsel %vm1138, %v2129, 0.0
        %v2175 = vadd.f32 %v2173, %v2174
        %v2176 = vsel %vm1138, %v2130, 0.0
        %v2177 = vadd.f32 %v2175, %v2176
        %v2178 = vsel %vm1138, %v2131, 0.0
        %v2179 = vadd.f32 %v2177, %v2178
        %v2180 = vsel %vm1138, %v2132, 0.0
        %v2181 = vadd.f32 %v2179, %v2180
        %v2182 = vsel %vm1138, %v2133, 0.0
        %v2183 = vadd.f32 %v2181, %v2182
        %v2184 = vsel %vm1138, %v2134, 0.0
        %v2185 = vadd.f32 %v2183, %v2184
        %v2186 = vsel %vm1138, %v2135, 0.0
        %v2187 = vadd.f32 %v2185, %v2186
        %v2188 = vsel %vm1138, %v2136, 0.0
        %v2189 = vadd.f32 %v2187, %v2188
        %v2190 = vsel %vm1138, %v2137, 0.0
        %v2191 = vadd.f32 %v2189, %v2190
        %v2192 = vsel %vm1138, %v2138, 0.0
        %v2193 = vadd.f32 %v2191, %v2192
        %v2194 = vsel %vm1138, %v2139, 0.0
        %v2195 = vadd.f32 %v2193, %v2194
        %v2196 = vsel %vm1138, %v2140, 0.0
        %v2197 = vadd.f32 %v2195, %v2196
        %v2198 = vsel %vm1138, %v2141, 0.0
        %v2199 = vadd.f32 %v2197, %v2198
        %v2200 = vsel %vm1138, %v2142, 0.0
        %v2201 = vadd.f32 %v2199, %v2200
        %v2202 = vsel %vm1138, %v2143, 0.0
        %v2203 = vadd.f32 %v2201, %v2202
        %v2204 = vsel %vm1138, %v2144, 0.0
        %v2205 = vadd.f32 %v2203, %v2204
        %v2206 = vsel %vm1138, %v2145, 0.0
        %v2207 = vadd.f32 %v2205, %v2206
        %v2208 = vsel %vm1138, %v2146, 0.0
        %v2209 = vadd.f32 %v2207, %v2208
        %v2210 = vrot.slane %v2209, 4
        %v2211 = vadd.f32 %v2209, %v2210
        %v2212 = vrot.slane %v2211, 2
        %v2213 = vadd.f32 %v2211, %v2212
        %v2214 = vrot.slane %v2213, 1
        %v2215 = vadd.f32 %v2213, %v2214
        %2216 = vst.msk [vmem:[%s194 + $0x1] sm:$0x1] %vm2113, %v2215
        %s2217 = smul.u32 16, %s25
        %p2218 = scmp.lt.s32.totalorder %s24, 1
        %s2219 = scalar_select %p2218, %s24, 1
        %p2220 = scmp.lt.s32.totalorder %s2217, 15
        %s2221 = scalar_select %p2220, %s2217, 15
        %s2222 = smul.addr %s2221, 2
        %s2223 = smul.addr %s2219, 32
        %s2224 = sadd.s32 %s2222, %s2223
        %s2225 = smul.addr %s2224, 4
        %s2226 = scalar_lea.vmem %s3, %s2225
        %s2227 = sand.u32 %s117, 1
        %s2228 = scalar_lea.sflag [#allocation7], %s2227
        %s2229 = sand.u32 %s117, 1
        %s2230 = smul.addr %s2229, 2
        %s2231 = scalar_lea.vmem [#allocation6], %s2230
        // Predicated region
        $region33: #{tpu_custom_call.1} parent=27 // pred_check
          %p2232 = pneg %p99
        $region34: #{tpu_custom_call.1} parent=27 // pred_check_branch
          %2234 = sbr.rel (%p2232) target = $region36
        $region35: #{tpu_custom_call.1} parent=27 // pred_region
          %s2235 = smul.u32 16, %s25
        $region36: #{tpu_custom_call.1} parent=27 // pred_fallthru
          _
        // Predicated region
        $region37: #{tpu_custom_call.1} parent=27 // pred_check
          %p2236 = pneg %p127
        $region38: #{tpu_custom_call.1} parent=27 // pred_check_branch
          %2238 = sbr.rel (%p2236) target = $region40
        $region39: #{tpu_custom_call.1} parent=27 // pred_region
          %s2240 = ssub.s32 32, 32
          %2241 = vsyncadd %s2228, %s2240
          %s2242 = sadd.s32 %s25, %s24
          %s2243 = smul.addr %s2242, 32
          %s2244 = scalar_lea.hbm %s4, %s2243
          %s2246 = sshll.u32 %s2231, 4
          %s2247 = int_to_ptr.vmem [resolvable:$true] %s2246
          %2249 = dma.vmem_to_hbm [thread:$0]  %s2247, 32, %s2244, %s2228
        $region40: #{tpu_custom_call.1} parent=27 // pred_fallthru
          _
      $region28: #{tpu_custom_call.1} parent=5 // pred_fallthru
        _
      %p2250 = scmp.le.s32.totalorder 2, %s15
      // Predicated region
      $region41: #{tpu_custom_call.1} parent=5 // pred_check
        %p2251 = pneg %p2250
      $region42: #{tpu_custom_call.1} parent=5 // pred_check_branch
        %2253 = sbr.rel (%p2251) target = $region44
      $region43: #{tpu_custom_call.1} parent=5 // pred_region
        %s2254 = ssub.s32 %s15, 2
        // Predicated region
        $region45: #{tpu_custom_call.1} parent=43 // pred_check
          %p2255 = pneg %p105
        $region46: #{tpu_custom_call.1} parent=43 // pred_check_branch
          %2257 = sbr.rel (%p2255) target = $region48
        $region47: #{tpu_custom_call.1} parent=43 // pred_region
          %s2258 = smul.u32 16, %s27
          %p2259 = scmp.lt.s32.totalorder %s26, 1
          %s2260 = scalar_select %p2259, %s26, 1
          %p2261 = scmp.lt.s32.totalorder %s2258, 15
          %s2262 = scalar_select %p2261, %s2258, 15
          %s2263 = smul.addr %s2262, 2
          %s2264 = smul.addr %s2260, 32
          %s2265 = sadd.s32 %s2263, %s2264
          %s2266 = smul.addr %s2265, 4
          %s2267 = scalar_lea.vmem %s3, %s2266
        $region48: #{tpu_custom_call.1} parent=43 // pred_fallthru
          _
        // Predicated region
        $region49: #{tpu_custom_call.1} parent=43 // pred_check
          %p2268 = pneg %p133
        $region50: #{tpu_custom_call.1} parent=43 // pred_check_branch
          %2270 = sbr.rel (%p2268) target = $region52
        $region51: #{tpu_custom_call.1} parent=43 // pred_region
          %s2271 = sand.u32 %s118, 1
          %s2272 = scalar_lea.sflag [#allocation7], %s2271
          %s2273 = sand.u32 %s118, 1
          %s2274 = smul.addr %s2273, 2
          %s2275 = scalar_lea.vmem [#allocation6], %s2274
          %2276 = dma.done %s2272, 32
        $region52: #{tpu_custom_call.1} parent=43 // pred_fallthru
          _
      $region44: #{tpu_custom_call.1} parent=5 // pred_fallthru
        _
    $region6: #{tpu_custom_call.1} parent=1 // loop_footer
      %s19 = sadd.s32 1, %s15
    $region7: #{tpu_custom_call.1} parent=1 // loop_footer_branch
      %14 = sbr.rel target = $region3
    $region8: #{tpu_custom_call.1} parent=1 // loop_exit
      _
    %2277 = vsyncpa [#allocation7], 1
    %s2278 = scalar_lea.sflag [#allocation7], 1
    %2279 = vsyncpa %s2278, 1

</llo_original>
